<compile_context>
chip_gen: v5e
topology: v5e:2x2
jax: 0.10.0
libtpu: 0.0.40
codegen_flags: <defaults>
</compile_context>

<pallas_src>
import numpy as np
import jax
import jax.numpy as jnp
from jax.experimental import pallas as pl
from jax.experimental.pallas import tpu as pltpu

NEG_SLOPE = 0.01   # nn.LeakyReLU() default
BN_EPS = 1e-5      # nn.BatchNorm default eps


def _leaky_relu(x):
    return jnp.where(x >= 0, x, x * NEG_SLOPE)


# ----------------------------------------------------------------------------
# Fused kernel: per (n, d-tile) block
#   sem   = Conv1x1(Conv1x1(feat))            (block-diag matmuls, BN folded, LeakyReLU)
#   y1    = LeakyReLU(Conv_{1x5x5}(cv + sem)) (5 shifted-row matmuls, BN folded)
#   att   = Conv_{1x1x1}(y1)                  (block-diag matmul)
#   gated = sigmoid(att) * sem + cv
#   out   = LeakyReLU(Conv_{1x5x5}(gated))    (5 shifted-row matmuls, BN folded)
# ----------------------------------------------------------------------------
def _cgf_fused_kernel(feat_ref, cv_ref, sw1_ref, sb1_ref, sw2_ref, sb2_ref,
                      awb_ref, ab1_ref, aw2_ref, gwb_ref, gb_ref,
                      out_ref, xpad_ref):
    _, Dt, H, WC = cv_ref.shape
    cdt = sw1_ref.dtype        # matmul operand dtype (f32 or bf16); accumulation stays f32

    # Zero the 2-row top/bottom halo of the persistent padded scratch once per step.
    # Rows [2:2+H] are overwritten before every conv, so no other init is needed.
    xpad_ref[:, 0:2, :] = jnp.zeros((Dt, 2, WC), xpad_ref.dtype)
    xpad_ref[:, 2 + H:4 + H, :] = jnp.zeros((Dt, 2, WC), xpad_ref.dtype)

    # ---- semantic branch: two 1x1 convs as block-diagonal matmuls ----
    f = feat_ref[0]                                                    # (H, W*Cim)
    s = jnp.dot(f.astype(cdt), sw1_ref[...],
                preferred_element_type=jnp.float32) + sb1_ref[...]
    s = _leaky_relu(s)
    sem = jnp.dot(s.astype(cdt), sw2_ref[...],
                  preferred_element_type=jnp.float32) + sb2_ref[...]   # (H, W*C)
    sem_b = sem[None, :, :]                  # hoisted broadcast, reused by both consumers

    cv = cv_ref[0]                                                     # (Dt, H, W*C)
    x = cv + sem_b

    # 1x5x5 conv: accumulate over the 5 H-offsets. Each step is a (Dt*H, WC) @ (WC, WC)
    # matmul against the ky-band of the packed weight; the shifted operand is a slice of
    # the padded scratch, so the activation is stored exactly once per conv.
    def conv5x5(x3, wb_ref, b_ref):
        xpad_ref[:, 2:2 + H, :] = x3.astype(xpad_ref.dtype)
        acc = jnp.zeros((Dt * H, WC), jnp.float32)
        for ky in range(5):
            xk = xpad_ref[:, ky:ky + H, :].reshape(Dt * H, WC)
            acc = acc + jnp.dot(xk, wb_ref[ky], preferred_element_type=jnp.float32)
        return _leaky_relu(acc + b_ref[...]).reshape(Dt, H, WC)

    y1 = conv5x5(x, awb_ref, ab1_ref)                                  # att: BasicConv (1,5,5)
    att = jnp.dot(y1.reshape(Dt * H, WC).astype(cdt), aw2_ref[...],
                  preferred_element_type=jnp.float32).reshape(Dt, H, WC)

    gated = jax.nn.sigmoid(att) * sem_b + cv                           # sigmoid(att)*feat + cv
    out_ref[0] = conv5x5(gated, gwb_ref, gb_ref).astype(out_ref.dtype) # agg: BasicConv (1,5,5)


def _choose_d_tile(N, D, H, WC, budget_bytes=16 * 1024 * 1024):
    # Rough live bytes per d after removing the rows5 slabs:
    #   double-buffered cv + out blocks (4x f32) + padded scratch (~1.5x) + ~5 f32 temps.
    per_d = H * WC * 4 * 10
    dt = max(1, min(D, budget_bytes // max(per_d, 1)))
    if N == 1:
        # v7x has 2 TensorCores per chip: keep >= 2 parallel grid units when N alone
        # cannot provide them.
        dt = min(dt, max(1, D // 2))
    return dt


def context_geometry_fusion(cv, feat, kp):
    """cv: (N, D, H, W, C_cv) f32; feat: (N, H, W, C_im) f32; kp: prepared kernel params."""
    N, D, H, W, C = cv.shape
    Cim = feat.shape[-1]
    WC = W * C
    cdt = kp["sem_w1"].dtype

    Dt = _choose_d_tile(N, D, H, WC)
    Dp = -(-D // Dt) * Dt            # pad D up so Dt never collapses to 1 for awkward D
    Hp = -(-(H + 4) // 8) * 8        # sublane-aligned padded-H scratch extent

    cv_d = cv.reshape(N, D, H, WC)   # lane-dense views (no data movement)
    if Dp != D:
        cv_d = jnp.pad(cv_d, ((0, 0), (0, Dp - D), (0, 0), (0, 0)))
    feat_d = feat.reshape(N, H, W * Cim)

    # Explicit VMEM budget: weights + double-buffered cv/out blocks + scratch + temps.
    weight_bytes = sum(int(np.prod(v.shape)) * v.dtype.itemsize for v in kp.values())
    blk = Dt * H * WC * 4
    est = weight_bytes + 4 * blk + Dt * Hp * WC * np.dtype(cdt).itemsize + 8 * blk
    vmem_limit = int(min(48 * 2**20, max(32 * 2**20, 2 * est)))

    w2 = lambda n, d: (0, 0)
    w3 = lambda n, d: (0, 0, 0)

    out = pl.pallas_call(
        _cgf_fused_kernel,
        out_shape=jax.ShapeDtypeStruct((N, Dp, H, WC), jnp.float32),
        grid=(N, Dp // Dt),
        in_specs=[
            pl.BlockSpec((1, H, W * Cim), lambda n, d: (n, 0, 0)),
            pl.BlockSpec((1, Dt, H, WC), lambda n, d: (n, d, 0, 0)),
            pl.BlockSpec(kp["sem_w1"].shape, w2),
            pl.BlockSpec(kp["sem_b1"].shape, w2),
            pl.BlockSpec(kp["sem_w2"].shape, w2),
            pl.BlockSpec(kp["sem_b2"].shape, w2),
            pl.BlockSpec(kp["att_wb"].shape, w3),
            pl.BlockSpec(kp["att_b1"].shape, w2),
            pl.BlockSpec(kp["att_w2"].shape, w2),
            pl.BlockSpec(kp["agg_wb"].shape, w3),
            pl.BlockSpec(kp["agg_b"].shape, w2),
        ],
        out_specs=pl.BlockSpec((1, Dt, H, WC), lambda n, d: (n, d, 0, 0)),
        scratch_shapes=[pltpu.VMEM((Dt, Hp, WC), cdt)],
        compiler_params=pltpu.CompilerParams(
            dimension_semantics=("parallel", "parallel"),
            vmem_limit_bytes=vmem_limit),
    )(feat_d, cv_d, kp["sem_w1"], kp["sem_b1"], kp["sem_w2"], kp["sem_b2"],
      kp["att_wb"], kp["att_b1"], kp["att_w2"], kp["agg_wb"], kp["agg_b"])
    return out.reshape(N, Dp, H, W, C)[:, :D]


# ----------------------------------------------------------------------------
# Weight preparation (host-side, once):
#   * 1x1 convs -> block-diagonal matrices over the merged (W, C) lane dim
#   * 1x5x5 convs -> per-ky banded matrices (5, W*Cin, W*Cout); width padding in the band
#   * BN (inference stats) folded in as a 1/sqrt(1+eps) weight scale
#   * matmul weights stored in `compute_dtype` (bf16 for the fast path), biases f32
# ----------------------------------------------------------------------------
def _block_diag_1x1(w_oi, W):
    Cout, Cin = w_oi.shape
    out = np.zeros((W * Cin, W * Cout), np.float32)
    blk = np.asarray(w_oi, np.float32).T                  # (Cin, Cout)
    for i in range(W):
        out[i * Cin:(i + 1) * Cin, i * Cout:(i + 1) * Cout] = blk
    return out


def _banded_conv_w(w_oihw, W):
    # row index = ky*W*Cin + w_in*Cin + c_in ; col index = w_out*Cout + c_out
    Cout, Cin, KH, KW = w_oihw.shape
    w = np.asarray(w_oihw, np.float32)
    out = np.zeros((KH * W * Cin, W * Cout), np.float32)
    for ky in range(KH):
        for kx in range(KW):
            blk = w[:, :, ky, kx].T                        # (Cin, Cout)
            for wo in range(W):
                wi = wo + kx - 2                           # width padding folded into band
                if 0 <= wi < W:
                    r = (ky * W + wi) * Cin
                    c = wo * Cout
                    out[r:r + Cin, c:c + Cout] = blk
    return out.reshape(KH, W * Cin, W * Cout)


def prepare_kernel_params(raw, W, compute_dtype=jnp.float32):
    bn = 1.0 / np.sqrt(1.0 + BN_EPS)
    Cmid, Cim = raw["sem_w1"].shape
    C = raw["att_w2"].shape[0]
    WC = W * C
    kp = dict(
        sem_w1=_block_diag_1x1(np.asarray(raw["sem_w1"]) * bn, W),        # (W*Cim, W*Cmid)
        sem_b1=np.zeros((1, W * Cmid), np.float32),
        sem_w2=_block_diag_1x1(np.asarray(raw["sem_w2"]), W),             # (W*Cmid, W*C)
        sem_b2=np.tile(np.asarray(raw["sem_b2"], np.float32), W)[None, :],
        att_wb=_banded_conv_w(np.asarray(raw["att_w1"]) * bn, W),         # (5, W*C, W*C)
        att_b1=np.zeros((1, WC), np.float32),
        att_w2=_block_diag_1x1(np.asarray(raw["att_w2"]), W),             # (W*C, W*C)
        agg_wb=_banded_conv_w(np.asarray(raw["agg_w"]) * bn, W),          # (5, W*C, W*C)
        agg_b=np.zeros((1, WC), np.float32),
    )
    matmul_weights = {"sem_w1", "sem_w2", "att_wb", "att_w2", "agg_wb"}
    return {k: jnp.asarray(v, dtype=(compute_dtype if k in matmul_weights else jnp.float32))
            for k, v in kp.items()}


# ----------------------------------------------------------------------------
# Deterministic parameter init, mimicking SubModule.weight_init
# ----------------------------------------------------------------------------
def init_raw_params(key, cv_chan, im_chan):
    Cmid = im_chan // 2
    ks = jax.random.split(key, 6)
    sem_w1 = jax.random.normal(ks[0], (Cmid, im_chan), jnp.float32) * np.sqrt(2.0 / Cmid)
    sem_w2 = jax.random.normal(ks[1], (cv_chan, Cmid), jnp.float32) * np.sqrt(2.0 / cv_chan)
    sem_b2 = 0.1 * jax.random.normal(ks[2], (cv_chan,), jnp.float32)
    att_w1 = jax.random.normal(ks[3], (cv_chan, cv_chan, 5, 5), jnp.float32) * np.sqrt(2.0 / (25 * cv_chan))
    att_w2 = jax.random.normal(ks[4], (cv_chan, cv_chan), jnp.float32) * np.sqrt(2.0 / cv_chan)
    agg_w = jax.random.normal(ks[5], (cv_chan, cv_chan, 5, 5), jnp.float32) * np.sqrt(2.0 / (25 * cv_chan))
    return dict(sem_w1=sem_w1, sem_w2=sem_w2, sem_b2=sem_b2,
                att_w1=att_w1, att_w2=att_w2, agg_w=agg_w)


# ----------------------------------------------------------------------------
# Pure-JAX f32 reference (uses the raw conv weights, independent code path)
# ----------------------------------------------------------------------------
def ref_forward(cv, feat, raw):
    N, D, H, W, C = cv.shape
    bn = 1.0 / jnp.sqrt(1.0 + BN_EPS)

    sem = _leaky_relu(jnp.matmul(feat, (raw["sem_w1"] * bn).T))
    sem = jnp.matmul(sem, raw["sem_w2"].T) + raw["sem_b2"]            # (N, H, W, C)

    def conv5(x4, w_oihw):
        w = jnp.transpose(w_oihw, (2, 3, 1, 0))                       # HWIO
        return jax.lax.conv_general_dilated(
            x4, w, window_strides=(1, 1), padding=((2, 2), (2, 2)),
            dimension_numbers=("NHWC", "HWIO", "NHWC"))

    x = cv + sem[:, None]
    y = _leaky_relu(conv5(x.reshape(N * D, H, W, C), raw["att_w1"] * bn))
    att = jnp.matmul(y, raw["att_w2"].T).reshape(N, D, H, W, C)
    cvg = jax.nn.sigmoid(att) * sem[:, None] + cv
    y = _leaky_relu(conv5(cvg.reshape(N * D, H, W, C), raw["agg_w"] * bn))
    return y.reshape(N, D, H, W, C)


if __name__ == "__main__":
    key = jax.random.PRNGKey(0)
    N, D, H, W = 2, 8, 16, 16
    cv_chan, im_chan = 8, 16

    k1, k2, k3 = jax.random.split(key, 3)
    cv = jax.random.normal(k1, (N, D, H, W, cv_chan), dtype=jnp.float32)
    feat = jax.random.normal(k2, (N, H, W, im_chan), dtype=jnp.float32)

    raw = init_raw_params(k3, cv_chan, im_chan)
    ref = ref_forward(cv, feat, raw)

    # f32 matmul-operand path: tight check against the independent f32 reference.
    kp32 = prepare_kernel_params(raw, W, compute_dtype=jnp.float32)
    out32 = jax.block_until_ready(context_geometry_fusion(cv, feat, kp32))
    assert out32.shape == (N, D, H, W, cv_chan)
    assert bool(jnp.isfinite(out32).all())
    err32 = float(jnp.max(jnp.abs(out32 - ref)))
    assert err32 < 1e-3, f"f32 max abs err {err32}"

    # bf16 matmul-operand path (perf configuration): f32 accumulation, looser tolerance
    # because bf16 operand rounding gives O(1e-2) absolute error on these activations.
    kp16 = prepare_kernel_params(raw, W, compute_dtype=jnp.bfloat16)
    out16 = jax.block_until_ready(context_geometry_fusion(cv, feat, kp16))
    assert out16.shape == (N, D, H, W, cv_chan)
    assert bool(jnp.isfinite(out16).all())
    rel16 = float(jnp.sqrt(jnp.mean((out16 - ref) ** 2) / jnp.mean(ref ** 2)))
    assert rel16 < 2e-2, f"bf16 relative rms err {rel16}"

    print("KERNEL_OK")
</pallas_src>

<mosaic_0001>
module attributes {stable_mosaic.version = 11 : i64} {
  func.func @_cgf_fused_kernel(%arg0: i32, %arg1: i32, %arg2: memref<1x16x256xf32, #tpu.memory_space<vmem>>, %arg3: memref<1x8x16x128xf32, #tpu.memory_space<vmem>>, %arg4: memref<256x128xf32, #tpu.memory_space<vmem>>, %arg5: memref<1x128xf32, #tpu.memory_space<vmem>>, %arg6: memref<128x128xf32, #tpu.memory_space<vmem>>, %arg7: memref<1x128xf32, #tpu.memory_space<vmem>>, %arg8: memref<5x128x128xf32, #tpu.memory_space<vmem>>, %arg9: memref<1x128xf32, #tpu.memory_space<vmem>>, %arg10: memref<128x128xf32, #tpu.memory_space<vmem>>, %arg11: memref<5x128x128xf32, #tpu.memory_space<vmem>>, %arg12: memref<1x128xf32, #tpu.memory_space<vmem>>, %arg13: memref<1x8x16x128xf32, #tpu.memory_space<vmem>>, %arg14: memref<8x24x128xf32, #tpu.memory_space<vmem>>) attributes {dimension_semantics = [#tpu.dimension_semantics<parallel>, #tpu.dimension_semantics<parallel>], iteration_bounds = array<i64: 2, 1>, scalar_prefetch = 0 : i64, scratch_operands = 1 : i64, tpu.core_type = #tpu.core_type<tc>, window_params = [{transform_indices = @transform_0, window_bounds = array<i64: 1, 16, 256>}, {transform_indices = @transform_1, window_bounds = array<i64: 1, 8, 16, 128>}, {pipeline_mode = #tpu.pipeline_mode<synchronous>, transform_indices = @transform_2, window_bounds = array<i64: 256, 128>}, {pipeline_mode = #tpu.pipeline_mode<synchronous>, transform_indices = @transform_3, window_bounds = array<i64: 1, 128>}, {pipeline_mode = #tpu.pipeline_mode<synchronous>, transform_indices = @transform_4, window_bounds = array<i64: 128, 128>}, {pipeline_mode = #tpu.pipeline_mode<synchronous>, transform_indices = @transform_5, window_bounds = array<i64: 1, 128>}, {pipeline_mode = #tpu.pipeline_mode<synchronous>, transform_indices = @transform_6, window_bounds = array<i64: 5, 128, 128>}, {pipeline_mode = #tpu.pipeline_mode<synchronous>, transform_indices = @transform_7, window_bounds = array<i64: 1, 128>}, {pipeline_mode = #tpu.pipeline_mode<synchronous>, transform_indices = @transform_8, window_bounds = array<i64: 128, 128>}, {pipeline_mode = #tpu.pipeline_mode<synchronous>, transform_indices = @transform_9, window_bounds = array<i64: 5, 128, 128>}, {pipeline_mode = #tpu.pipeline_mode<synchronous>, transform_indices = @transform_10, window_bounds = array<i64: 1, 128>}, {transform_indices = @transform_11, window_bounds = array<i64: 1, 8, 16, 128>}]} {
    %cst = arith.constant 0.000000e+00 : f32
    %0 = vector.broadcast %cst : f32 to vector<8x2x128xf32>
    %c0 = arith.constant 0 : index
    %c0_0 = arith.constant 0 : index
    %c0_1 = arith.constant 0 : index
    %1 = vector.load %arg14[%c0, %c0_0, %c0_1] : memref<8x24x128xf32, #tpu.memory_space<vmem>>, vector<8x2x128xf32>
    tpu.vector_store %arg14[%c0, %c0_0, %c0_1], %0 {strides = array<i32>} : memref<8x24x128xf32, #tpu.memory_space<vmem>>, vector<8x2x128xf32>,
    %cst_2 = arith.constant 0.000000e+00 : f32
    %2 = vector.broadcast %cst_2 : f32 to vector<8x2x128xf32>
    %c0_3 = arith.constant 0 : index
    %c18 = arith.constant 18 : index
    %c0_4 = arith.constant 0 : index
    %3 = vector.load %arg14[%c0_3, %c18, %c0_4] : memref<8x24x128xf32, #tpu.memory_space<vmem>>, vector<8x2x128xf32>
    tpu.vector_store %arg14[%c0_3, %c18, %c0_4], %2 {strides = array<i32>} : memref<8x24x128xf32, #tpu.memory_space<vmem>>, vector<8x2x128xf32>,
    %c0_5 = arith.constant 0 : index
    %c0_6 = arith.constant 0 : index
    %c0_7 = arith.constant 0 : index
    %4 = vector.load %arg2[%c0_5, %c0_6, %c0_7] : memref<1x16x256xf32, #tpu.memory_space<vmem>>, vector<1x16x256xf32>
    %5 = vector.shape_cast %4 : vector<1x16x256xf32> to vector<16x256xf32>
    %c0_8 = arith.constant 0 : index
    %c0_9 = arith.constant 0 : index
    %6 = vector.load %arg4[%c0_8, %c0_9] : memref<256x128xf32, #tpu.memory_space<vmem>>, vector<256x128xf32>
    %cst_10 = arith.constant dense<0.000000e+00> : vector<16x128xf32>
    %7 = tpu.matmul %5, %6, %cst_10 {dimension_numbers = #tpu.dot_dimension_numbers<[1], [0], [0], [1], [0, 0, 1, 1], [], []>} : vector<16x256xf32>, vector<256x128xf32>, vector<16x128xf32> -> vector<16x128xf32>
    %c0_11 = arith.constant 0 : index
    %c0_12 = arith.constant 0 : index
    %8 = vector.load %arg5[%c0_11, %c0_12] : memref<1x128xf32, #tpu.memory_space<vmem>>, vector<1x128xf32>
    %9 = vector.broadcast %8 : vector<1x128xf32> to vector<16x128xf32>
    %10 = arith.addf %7, %9 : vector<16x128xf32>
    %cst_13 = arith.constant 0.000000e+00 : f32
    %11 = vector.broadcast %cst_13 : f32 to vector<16x128xf32>
    %12 = arith.cmpf oge, %10, %11 : vector<16x128xf32>
    %cst_14 = arith.constant 0.00999999977 : f32
    %13 = vector.broadcast %cst_14 : f32 to vector<16x128xf32>
    %14 = arith.mulf %10, %13 : vector<16x128xf32>
    %15 = arith.select %12, %10, %14 : vector<16x128xi1>, vector<16x128xf32>
    %c0_15 = arith.constant 0 : index
    %c0_16 = arith.constant 0 : index
    %16 = vector.load %arg6[%c0_15, %c0_16] : memref<128x128xf32, #tpu.memory_space<vmem>>, vector<128x128xf32>
    %cst_17 = arith.constant dense<0.000000e+00> : vector<16x128xf32>
    %17 = tpu.matmul %15, %16, %cst_17 {dimension_numbers = #tpu.dot_dimension_numbers<[1], [0], [0], [1], [0, 0, 1, 1], [], []>} : vector<16x128xf32>, vector<128x128xf32>, vector<16x128xf32> -> vector<16x128xf32>
    %c0_18 = arith.constant 0 : index
    %c0_19 = arith.constant 0 : index
    %18 = vector.load %arg7[%c0_18, %c0_19] : memref<1x128xf32, #tpu.memory_space<vmem>>, vector<1x128xf32>
    %19 = vector.broadcast %18 : vector<1x128xf32> to vector<16x128xf32>
    %20 = arith.addf %17, %19 : vector<16x128xf32>
    %21 = vector.shape_cast %20 : vector<16x128xf32> to vector<1x16x128xf32>
    %c0_20 = arith.constant 0 : index
    %c0_21 = arith.constant 0 : index
    %c0_22 = arith.constant 0 : index
    %c0_23 = arith.constant 0 : index
    %22 = vector.load %arg3[%c0_20, %c0_21, %c0_22, %c0_23] : memref<1x8x16x128xf32, #tpu.memory_space<vmem>>, vector<1x8x16x128xf32>
    %23 = vector.shape_cast %22 : vector<1x8x16x128xf32> to vector<8x16x128xf32>
    %24 = vector.broadcast %21 : vector<1x16x128xf32> to vector<8x16x128xf32>
    %25 = arith.addf %23, %24 : vector<8x16x128xf32>
    %c0_24 = arith.constant 0 : index
    %c2 = arith.constant 2 : index
    %c0_25 = arith.constant 0 : index
    %26 = vector.load %arg14[%c0_24, %c2, %c0_25] : memref<8x24x128xf32, #tpu.memory_space<vmem>>, vector<8x16x128xf32>
    tpu.vector_store %arg14[%c0_24, %c2, %c0_25], %25 {strides = array<i32>} : memref<8x24x128xf32, #tpu.memory_space<vmem>>, vector<8x16x128xf32>,
    %cst_26 = arith.constant 0.000000e+00 : f32
    %27 = vector.broadcast %cst_26 : f32 to vector<128x128xf32>
    %c0_27 = arith.constant 0 : index
    %c0_28 = arith.constant 0 : index
    %c0_29 = arith.constant 0 : index
    %28 = vector.load %arg14[%c0_27, %c0_28, %c0_29] : memref<8x24x128xf32, #tpu.memory_space<vmem>>, vector<8x16x128xf32>
    %29 = vector.shape_cast %28 : vector<8x16x128xf32> to vector<128x128xf32>
    %c0_30 = arith.constant 0 : index
    %c0_31 = arith.constant 0 : index
    %c0_32 = arith.constant 0 : index
    %30 = vector.load %arg8[%c0_30, %c0_31, %c0_32] : memref<5x128x128xf32, #tpu.memory_space<vmem>>, vector<1x128x128xf32>
    %31 = vector.shape_cast %30 : vector<1x128x128xf32> to vector<128x128xf32>
    %cst_33 = arith.constant dense<0.000000e+00> : vector<128x128xf32>
    %32 = tpu.matmul %29, %31, %cst_33 {dimension_numbers = #tpu.dot_dimension_numbers<[1], [0], [0], [1], [0, 0, 1, 1], [], []>} : vector<128x128xf32>, vector<128x128xf32>, vector<128x128xf32> -> vector<128x128xf32>
    %33 = arith.addf %27, %32 : vector<128x128xf32>
    %c0_34 = arith.constant 0 : index
    %c1 = arith.constant 1 : index
    %c0_35 = arith.constant 0 : index
    %34 = vector.load %arg14[%c0_34, %c1, %c0_35] : memref<8x24x128xf32, #tpu.memory_space<vmem>>, vector<8x16x128xf32>
    %35 = vector.shape_cast %34 : vector<8x16x128xf32> to vector<128x128xf32>
    %c1_36 = arith.constant 1 : index
    %c0_37 = arith.constant 0 : index
    %c0_38 = arith.constant 0 : index
    %36 = vector.load %arg8[%c1_36, %c0_37, %c0_38] : memref<5x128x128xf32, #tpu.memory_space<vmem>>, vector<1x128x128xf32>
    %37 = vector.shape_cast %36 : vector<1x128x128xf32> to vector<128x128xf32>
    %cst_39 = arith.constant dense<0.000000e+00> : vector<128x128xf32>
    %38 = tpu.matmul %35, %37, %cst_39 {dimension_numbers = #tpu.dot_dimension_numbers<[1], [0], [0], [1], [0, 0, 1, 1], [], []>} : vector<128x128xf32>, vector<128x128xf32>, vector<128x128xf32> -> vector<128x128xf32>
    %39 = arith.addf %33, %38 : vector<128x128xf32>
    %c0_40 = arith.constant 0 : index
    %c2_41 = arith.constant 2 : index
    %c0_42 = arith.constant 0 : index
    %40 = vector.load %arg14[%c0_40, %c2_41, %c0_42] : memref<8x24x128xf32, #tpu.memory_space<vmem>>, vector<8x16x128xf32>
    %41 = vector.shape_cast %40 : vector<8x16x128xf32> to vector<128x128xf32>
    %c2_43 = arith.constant 2 : index
    %c0_44 = arith.constant 0 : index
    %c0_45 = arith.constant 0 : index
    %42 = vector.load %arg8[%c2_43, %c0_44, %c0_45] : memref<5x128x128xf32, #tpu.memory_space<vmem>>, vector<1x128x128xf32>
    %43 = vector.shape_cast %42 : vector<1x128x128xf32> to vector<128x128xf32>
    %cst_46 = arith.constant dense<0.000000e+00> : vector<128x128xf32>
    %44 = tpu.matmul %41, %43, %cst_46 {dimension_numbers = #tpu.dot_dimension_numbers<[1], [0], [0], [1], [0, 0, 1, 1], [], []>} : vector<128x128xf32>, vector<128x128xf32>, vector<128x128xf32> -> vector<128x128xf32>
    %45 = arith.addf %39, %44 : vector<128x128xf32>
    %c0_47 = arith.constant 0 : index
    %c3 = arith.constant 3 : index
    %c0_48 = arith.constant 0 : index
    %46 = vector.load %arg14[%c0_47, %c3, %c0_48] : memref<8x24x128xf32, #tpu.memory_space<vmem>>, vector<8x16x128xf32>
    %47 = vector.shape_cast %46 : vector<8x16x128xf32> to vector<128x128xf32>
    %c3_49 = arith.constant 3 : index
    %c0_50 = arith.constant 0 : index
    %c0_51 = arith.constant 0 : index
    %48 = vector.load %arg8[%c3_49, %c0_50, %c0_51] : memref<5x128x128xf32, #tpu.memory_space<vmem>>, vector<1x128x128xf32>
    %49 = vector.shape_cast %48 : vector<1x128x128xf32> to vector<128x128xf32>
    %cst_52 = arith.constant dense<0.000000e+00> : vector<128x128xf32>
    %50 = tpu.matmul %47, %49, %cst_52 {dimension_numbers = #tpu.dot_dimension_numbers<[1], [0], [0], [1], [0, 0, 1, 1], [], []>} : vector<128x128xf32>, vector<128x128xf32>, vector<128x128xf32> -> vector<128x128xf32>
    %51 = arith.addf %45, %50 : vector<128x128xf32>
    %c0_53 = arith.constant 0 : index
    %c4 = arith.constant 4 : index
    %c0_54 = arith.constant 0 : index
    %52 = vector.load %arg14[%c0_53, %c4, %c0_54] : memref<8x24x128xf32, #tpu.memory_space<vmem>>, vector<8x16x128xf32>
    %53 = vector.shape_cast %52 : vector<8x16x128xf32> to vector<128x128xf32>
    %c4_55 = arith.constant 4 : index
    %c0_56 = arith.constant 0 : index
    %c0_57 = arith.constant 0 : index
    %54 = vector.load %arg8[%c4_55, %c0_56, %c0_57] : memref<5x128x128xf32, #tpu.memory_space<vmem>>, vector<1x128x128xf32>
    %55 = vector.shape_cast %54 : vector<1x128x128xf32> to vector<128x128xf32>
    %cst_58 = arith.constant dense<0.000000e+00> : vector<128x128xf32>
    %56 = tpu.matmul %53, %55, %cst_58 {dimension_numbers = #tpu.dot_dimension_numbers<[1], [0], [0], [1], [0, 0, 1, 1], [], []>} : vector<128x128xf32>, vector<128x128xf32>, vector<128x128xf32> -> vector<128x128xf32>
    %57 = arith.addf %51, %56 : vector<128x128xf32>
    %c0_59 = arith.constant 0 : index
    %c0_60 = arith.constant 0 : index
    %58 = vector.load %arg9[%c0_59, %c0_60] : memref<1x128xf32, #tpu.memory_space<vmem>>, vector<1x128xf32>
    %59 = vector.broadcast %58 : vector<1x128xf32> to vector<128x128xf32>
    %60 = arith.addf %57, %59 : vector<128x128xf32>
    %cst_61 = arith.constant 0.000000e+00 : f32
    %61 = vector.broadcast %cst_61 : f32 to vector<128x128xf32>
    %62 = arith.cmpf oge, %60, %61 : vector<128x128xf32>
    %cst_62 = arith.constant 0.00999999977 : f32
    %63 = vector.broadcast %cst_62 : f32 to vector<128x128xf32>
    %64 = arith.mulf %60, %63 : vector<128x128xf32>
    %65 = arith.select %62, %60, %64 : vector<128x128xi1>, vector<128x128xf32>
    %66 = vector.shape_cast %65 : vector<128x128xf32> to vector<8x16x128xf32>
    %67 = vector.shape_cast %66 : vector<8x16x128xf32> to vector<128x128xf32>
    %c0_63 = arith.constant 0 : index
    %c0_64 = arith.constant 0 : index
    %68 = vector.load %arg10[%c0_63, %c0_64] : memref<128x128xf32, #tpu.memory_space<vmem>>, vector<128x128xf32>
    %cst_65 = arith.constant dense<0.000000e+00> : vector<128x128xf32>
    %69 = tpu.matmul %67, %68, %cst_65 {dimension_numbers = #tpu.dot_dimension_numbers<[1], [0], [0], [1], [0, 0, 1, 1], [], []>} : vector<128x128xf32>, vector<128x128xf32>, vector<128x128xf32> -> vector<128x128xf32>
    %70 = vector.shape_cast %69 : vector<128x128xf32> to vector<8x16x128xf32>
    %71 = arith.negf %70 : vector<8x16x128xf32>
    %72 = math.exp %71 : vector<8x16x128xf32>
    %cst_66 = arith.constant 1.000000e+00 : f32
    %73 = vector.broadcast %cst_66 : f32 to vector<8x16x128xf32>
    %74 = arith.addf %73, %72 : vector<8x16x128xf32>
    %75 = arith.divf %73, %74 : vector<8x16x128xf32>
    %76 = vector.broadcast %21 : vector<1x16x128xf32> to vector<8x16x128xf32>
    %77 = arith.mulf %75, %76 : vector<8x16x128xf32>
    %78 = arith.addf %77, %23 : vector<8x16x128xf32>
    %c0_67 = arith.constant 0 : index
    %c2_68 = arith.constant 2 : index
    %c0_69 = arith.constant 0 : index
    %79 = vector.load %arg14[%c0_67, %c2_68, %c0_69] : memref<8x24x128xf32, #tpu.memory_space<vmem>>, vector<8x16x128xf32>
    tpu.vector_store %arg14[%c0_67, %c2_68, %c0_69], %78 {strides = array<i32>} : memref<8x24x128xf32, #tpu.memory_space<vmem>>, vector<8x16x128xf32>,
    %cst_70 = arith.constant 0.000000e+00 : f32
    %80 = vector.broadcast %cst_70 : f32 to vector<128x128xf32>
    %c0_71 = arith.constant 0 : index
    %c0_72 = arith.constant 0 : index
    %c0_73 = arith.constant 0 : index
    %81 = vector.load %arg14[%c0_71, %c0_72, %c0_73] : memref<8x24x128xf32, #tpu.memory_space<vmem>>, vector<8x16x128xf32>
    %82 = vector.shape_cast %81 : vector<8x16x128xf32> to vector<128x128xf32>
    %c0_74 = arith.constant 0 : index
    %c0_75 = arith.constant 0 : index
    %c0_76 = arith.constant 0 : index
    %83 = vector.load %arg11[%c0_74, %c0_75, %c0_76] : memref<5x128x128xf32, #tpu.memory_space<vmem>>, vector<1x128x128xf32>
    %84 = vector.shape_cast %83 : vector<1x128x128xf32> to vector<128x128xf32>
    %cst_77 = arith.constant dense<0.000000e+00> : vector<128x128xf32>
    %85 = tpu.matmul %82, %84, %cst_77 {dimension_numbers = #tpu.dot_dimension_numbers<[1], [0], [0], [1], [0, 0, 1, 1], [], []>} : vector<128x128xf32>, vector<128x128xf32>, vector<128x128xf32> -> vector<128x128xf32>
    %86 = arith.addf %80, %85 : vector<128x128xf32>
    %c0_78 = arith.constant 0 : index
    %c1_79 = arith.constant 1 : index
    %c0_80 = arith.constant 0 : index
    %87 = vector.load %arg14[%c0_78, %c1_79, %c0_80] : memref<8x24x128xf32, #tpu.memory_space<vmem>>, vector<8x16x128xf32>
    %88 = vector.shape_cast %87 : vector<8x16x128xf32> to vector<128x128xf32>
    %c1_81 = arith.constant 1 : index
    %c0_82 = arith.constant 0 : index
    %c0_83 = arith.constant 0 : index
    %89 = vector.load %arg11[%c1_81, %c0_82, %c0_83] : memref<5x128x128xf32, #tpu.memory_space<vmem>>, vector<1x128x128xf32>
    %90 = vector.shape_cast %89 : vector<1x128x128xf32> to vector<128x128xf32>
    %cst_84 = arith.constant dense<0.000000e+00> : vector<128x128xf32>
    %91 = tpu.matmul %88, %90, %cst_84 {dimension_numbers = #tpu.dot_dimension_numbers<[1], [0], [0], [1], [0, 0, 1, 1], [], []>} : vector<128x128xf32>, vector<128x128xf32>, vector<128x128xf32> -> vector<128x128xf32>
    %92 = arith.addf %86, %91 : vector<128x128xf32>
    %c0_85 = arith.constant 0 : index
    %c2_86 = arith.constant 2 : index
    %c0_87 = arith.constant 0 : index
    %93 = vector.load %arg14[%c0_85, %c2_86, %c0_87] : memref<8x24x128xf32, #tpu.memory_space<vmem>>, vector<8x16x128xf32>
    %94 = vector.shape_cast %93 : vector<8x16x128xf32> to vector<128x128xf32>
    %c2_88 = arith.constant 2 : index
    %c0_89 = arith.constant 0 : index
    %c0_90 = arith.constant 0 : index
    %95 = vector.load %arg11[%c2_88, %c0_89, %c0_90] : memref<5x128x128xf32, #tpu.memory_space<vmem>>, vector<1x128x128xf32>
    %96 = vector.shape_cast %95 : vector<1x128x128xf32> to vector<128x128xf32>
    %cst_91 = arith.constant dense<0.000000e+00> : vector<128x128xf32>
    %97 = tpu.matmul %94, %96, %cst_91 {dimension_numbers = #tpu.dot_dimension_numbers<[1], [0], [0], [1], [0, 0, 1, 1], [], []>} : vector<128x128xf32>, vector<128x128xf32>, vector<128x128xf32> -> vector<128x128xf32>
    %98 = arith.addf %92, %97 : vector<128x128xf32>
    %c0_92 = arith.constant 0 : index
    %c3_93 = arith.constant 3 : index
    %c0_94 = arith.constant 0 : index
    %99 = vector.load %arg14[%c0_92, %c3_93, %c0_94] : memref<8x24x128xf32, #tpu.memory_space<vmem>>, vector<8x16x128xf32>
    %100 = vector.shape_cast %99 : vector<8x16x128xf32> to vector<128x128xf32>
    %c3_95 = arith.constant 3 : index
    %c0_96 = arith.constant 0 : index
    %c0_97 = arith.constant 0 : index
    %101 = vector.load %arg11[%c3_95, %c0_96, %c0_97] : memref<5x128x128xf32, #tpu.memory_space<vmem>>, vector<1x128x128xf32>
    %102 = vector.shape_cast %101 : vector<1x128x128xf32> to vector<128x128xf32>
    %cst_98 = arith.constant dense<0.000000e+00> : vector<128x128xf32>
    %103 = tpu.matmul %100, %102, %cst_98 {dimension_numbers = #tpu.dot_dimension_numbers<[1], [0], [0], [1], [0, 0, 1, 1], [], []>} : vector<128x128xf32>, vector<128x128xf32>, vector<128x128xf32> -> vector<128x128xf32>
    %104 = arith.addf %98, %103 : vector<128x128xf32>
    %c0_99 = arith.constant 0 : index
    %c4_100 = arith.constant 4 : index
    %c0_101 = arith.constant 0 : index
    %105 = vector.load %arg14[%c0_99, %c4_100, %c0_101] : memref<8x24x128xf32, #tpu.memory_space<vmem>>, vector<8x16x128xf32>
    %106 = vector.shape_cast %105 : vector<8x16x128xf32> to vector<128x128xf32>
    %c4_102 = arith.constant 4 : index
    %c0_103 = arith.constant 0 : index
    %c0_104 = arith.constant 0 : index
    %107 = vector.load %arg11[%c4_102, %c0_103, %c0_104] : memref<5x128x128xf32, #tpu.memory_space<vmem>>, vector<1x128x128xf32>
    %108 = vector.shape_cast %107 : vector<1x128x128xf32> to vector<128x128xf32>
    %cst_105 = arith.constant dense<0.000000e+00> : vector<128x128xf32>
    %109 = tpu.matmul %106, %108, %cst_105 {dimension_numbers = #tpu.dot_dimension_numbers<[1], [0], [0], [1], [0, 0, 1, 1], [], []>} : vector<128x128xf32>, vector<128x128xf32>, vector<128x128xf32> -> vector<128x128xf32>
    %110 = arith.addf %104, %109 : vector<128x128xf32>
    %c0_106 = arith.constant 0 : index
    %c0_107 = arith.constant 0 : index
    %111 = vector.load %arg12[%c0_106, %c0_107] : memref<1x128xf32, #tpu.memory_space<vmem>>, vector<1x128xf32>
    %112 = vector.broadcast %111 : vector<1x128xf32> to vector<128x128xf32>
    %113 = arith.addf %110, %112 : vector<128x128xf32>
    %cst_108 = arith.constant 0.000000e+00 : f32
    %114 = vector.broadcast %cst_108 : f32 to vector<128x128xf32>
    %115 = arith.cmpf oge, %113, %114 : vector<128x128xf32>
    %cst_109 = arith.constant 0.00999999977 : f32
    %116 = vector.broadcast %cst_109 : f32 to vector<128x128xf32>
    %117 = arith.mulf %113, %116 : vector<128x128xf32>
    %118 = arith.select %115, %113, %117 : vector<128x128xi1>, vector<128x128xf32>
    %119 = vector.shape_cast %118 : vector<128x128xf32> to vector<8x16x128xf32>
    %c0_110 = arith.constant 0 : index
    %c0_111 = arith.constant 0 : index
    %c0_112 = arith.constant 0 : index
    %c0_113 = arith.constant 0 : index
    %120 = vector.load %arg13[%c0_110, %c0_111, %c0_112, %c0_113] : memref<1x8x16x128xf32, #tpu.memory_space<vmem>>, vector<1x8x16x128xf32>
    %121 = vector.shape_cast %120 : vector<1x8x16x128xf32> to vector<8x16x128xf32>
    %122 = vector.shape_cast %119 : vector<8x16x128xf32> to vector<1x8x16x128xf32>
    tpu.vector_store %arg13[%c0_110, %c0_111, %c0_112, %c0_113], %122 {strides = array<i32>} : memref<1x8x16x128xf32, #tpu.memory_space<vmem>>, vector<1x8x16x128xf32>,
    return
  }
  func.func @transform_0(%arg0: i32, %arg1: i32) -> (i32, i32, i32) {
    %c0_i32 = arith.constant 0 : i32
    %c0_i32_0 = arith.constant 0 : i32
    %c0_i32_1 = arith.constant 0 : i32
    return %arg0, %c0_i32, %c0_i32_0 : i32, i32, i32
  }
  func.func @transform_1(%arg0: i32, %arg1: i32) -> (i32, i32, i32, i32) {
    %c0_i32 = arith.constant 0 : i32
    %c0_i32_0 = arith.constant 0 : i32
    %c0_i32_1 = arith.constant 0 : i32
    return %arg0, %arg1, %c0_i32, %c0_i32_0 : i32, i32, i32, i32
  }
  func.func @transform_2(%arg0: i32, %arg1: i32) -> (i32, i32) {
    %c0_i32 = arith.constant 0 : i32
    %c0_i32_0 = arith.constant 0 : i32
    %c0_i32_1 = arith.constant 0 : i32
    return %c0_i32, %c0_i32_0 : i32, i32
  }
  func.func @transform_3(%arg0: i32, %arg1: i32) -> (i32, i32) {
    %c0_i32 = arith.constant 0 : i32
    %c0_i32_0 = arith.constant 0 : i32
    %c0_i32_1 = arith.constant 0 : i32
    return %c0_i32, %c0_i32_0 : i32, i32
  }
  func.func @transform_4(%arg0: i32, %arg1: i32) -> (i32, i32) {
    %c0_i32 = arith.constant 0 : i32
    %c0_i32_0 = arith.constant 0 : i32
    %c0_i32_1 = arith.constant 0 : i32
    return %c0_i32, %c0_i32_0 : i32, i32
  }
  func.func @transform_5(%arg0: i32, %arg1: i32) -> (i32, i32) {
    %c0_i32 = arith.constant 0 : i32
    %c0_i32_0 = arith.constant 0 : i32
    %c0_i32_1 = arith.constant 0 : i32
    return %c0_i32, %c0_i32_0 : i32, i32
  }
  func.func @transform_6(%arg0: i32, %arg1: i32) -> (i32, i32, i32) {
    %c0_i32 = arith.constant 0 : i32
    %c0_i32_0 = arith.constant 0 : i32
    %c0_i32_1 = arith.constant 0 : i32
    %c0_i32_2 = arith.constant 0 : i32
    return %c0_i32, %c0_i32_0, %c0_i32_1 : i32, i32, i32
  }
  func.func @transform_7(%arg0: i32, %arg1: i32) -> (i32, i32) {
    %c0_i32 = arith.constant 0 : i32
    %c0_i32_0 = arith.constant 0 : i32
    %c0_i32_1 = arith.constant 0 : i32
    return %c0_i32, %c0_i32_0 : i32, i32
  }
  func.func @transform_8(%arg0: i32, %arg1: i32) -> (i32, i32) {
    %c0_i32 = arith.constant 0 : i32
    %c0_i32_0 = arith.constant 0 : i32
    %c0_i32_1 = arith.constant 0 : i32
    return %c0_i32, %c0_i32_0 : i32, i32
  }
  func.func @transform_9(%arg0: i32, %arg1: i32) -> (i32, i32, i32) {
    %c0_i32 = arith.constant 0 : i32
    %c0_i32_0 = arith.constant 0 : i32
    %c0_i32_1 = arith.constant 0 : i32
    %c0_i32_2 = arith.constant 0 : i32
    return %c0_i32, %c0_i32_0, %c0_i32_1 : i32, i32, i32
  }
  func.func @transform_10(%arg0: i32, %arg1: i32) -> (i32, i32) {
    %c0_i32 = arith.constant 0 : i32
    %c0_i32_0 = arith.constant 0 : i32
    %c0_i32_1 = arith.constant 0 : i32
    return %c0_i32, %c0_i32_0 : i32, i32
  }
  func.func @transform_11(%arg0: i32, %arg1: i32) -> (i32, i32, i32, i32) {
    %c0_i32 = arith.constant 0 : i32
    %c0_i32_0 = arith.constant 0 : i32
    %c0_i32_1 = arith.constant 0 : i32
    return %arg0, %arg1, %c0_i32, %c0_i32_0 : i32, i32, i32, i32
  }
}

</mosaic_0001>

<llo_original>
// kernel: tpu_custom_call.1
$region0: #{tpu_custom_call.1}
  #allocation0 [shape = 'u32[]', space=smem, size = 0x4, offset = 0x4, fixed_abs, tag = 'smem constant byte address 0x4 - core index']
  #allocation1 [shape = 'u32[72,128]{1,0:T(1,128)}', space=vmem, size = 0x9000, scoped, tag = 'internal scratch']
  #allocation2 [shape = 'f32[8,24,128]{2,1,0:T(8,128)}', space=vmem, size = 0x18000, scoped, tag = 'scratch operand']
  %s0 = inlined_call_operand.hbm [shape: f32[2,16,256], index: 0, kind: input, shape index: {}]
  %s1 = inlined_call_operand.hbm [shape: f32[2,8,16,128], index: 1, kind: input, shape index: {}]
  %s2 = inlined_call_operand.hbm [shape: f32[256,128], index: 2, kind: input, shape index: {}]
  %s3 = inlined_call_operand.vmem [shape: f32[1,128], index: 3, kind: input, shape index: {}]
  %s4 = inlined_call_operand.hbm [shape: f32[128,128], index: 4, kind: input, shape index: {}]
  %s5 = inlined_call_operand.vmem [shape: f32[1,128], index: 5, kind: input, shape index: {}]
  %s6 = inlined_call_operand.hbm [shape: f32[5,128,128], index: 6, kind: input, shape index: {}]
  %s7 = inlined_call_operand.vmem [shape: f32[1,128], index: 7, kind: input, shape index: {}]
  %s8 = inlined_call_operand.hbm [shape: f32[128,128], index: 8, kind: input, shape index: {}]
  %s9 = inlined_call_operand.hbm [shape: f32[5,128,128], index: 9, kind: input, shape index: {}]
  %s10 = inlined_call_operand.vmem [shape: f32[1,128], index: 10, kind: input, shape index: {}]
  %s11 = inlined_call_operand.hbm [shape: f32[2,8,16,128], index: 11, kind: output, shape index: {}]
  %s12 = sld [smem:[#allocation0]]
  $region105: #{tpu_custom_call.1} parent=0
    _
  %s14 = ssub.s32 1, %s12
  %s15 = scalar_select 0, %s14, %s12
  $region1: #{tpu_custom_call.1} parent=0
    #allocation3 [shape = 'u8[32768]{0}', space=vmem, size = 0x8000, scoped, tag = 'input window, operand 0']
    #allocation4 [shape = 's32[2]{0}', space=sflag, size = 0x8, scoped, tag = 'scoped memory for tpu_custom_call.1']
    #allocation5 [shape = 's32[2]{0}', space=sflag, size = 0x8, scoped, tag = 'scoped memory for tpu_custom_call.1']
    #allocation6 [shape = 'u8[131072]{0}', space=vmem, size = 0x20000, scoped, tag = 'input window, operand 1']
    #allocation7 [shape = 's32[2]{0}', space=sflag, size = 0x8, scoped, tag = 'scoped memory for tpu_custom_call.1']
    #allocation8 [shape = 'u8[131072]{0}', space=vmem, size = 0x20000, scoped, tag = 'input window, operand 2, single buffered']
    #allocation9 [shape = 'u8[65536]{0}', space=vmem, size = 0x10000, scoped, tag = 'input window, operand 4, single buffered']
    #allocation10 [shape = 's32[1]{0}', space=sflag, size = 0x4, scoped, tag = 'scoped memory for tpu_custom_call.1']
    #allocation11 [shape = 'u8[327680]{0}', space=vmem, size = 0x50000, scoped, tag = 'input window, operand 6, single buffered']
    #allocation12 [shape = 'u8[65536]{0}', space=vmem, size = 0x10000, scoped, tag = 'input window, operand 8, single buffered']
    #allocation13 [shape = 's32[1]{0}', space=sflag, size = 0x4, scoped, tag = 'scoped memory for tpu_custom_call.1']
    #allocation14 [shape = 'u8[327680]{0}', space=vmem, size = 0x50000, scoped, tag = 'input window, operand 9, single buffered']
    #allocation15 [shape = 'u8[131072]{0}', space=vmem, size = 0x20000, scoped, tag = 'output window, operand 0']
    %16 = vsyncpa [#allocation4], 0
    %s17 = scalar_lea.sflag [#allocation4], 1
    %18 = vsyncpa %s17, 0
    %19 = vsyncpa [#allocation7], 0
    %s20 = scalar_lea.sflag [#allocation7], 1
    %21 = vsyncpa %s20, 0
    %22 = vsyncpa [#allocation10], 0
    %23 = vsyncpa [#allocation13], 0
    %24 = vsyncpa [#allocation5], 0
    %s25 = scalar_lea.sflag [#allocation5], 1
    %26 = vsyncpa %s25, 0
    loop: start=0, step=1, limit=4
    $region2: #{tpu_custom_call.1} parent=1 // loop_pre_header
      _
    $region3: #{tpu_custom_call.1} parent=1 // loop_header
      %s28 = sphi 0, %s32
      %p29 = scmp.ge.s32.totalorder %s28, 4
      %s35 = sphi 0, %s47
      %s36 = sphi 0, %s43
      %s37 = sphi 0, %s35
      %s38 = sphi 0, %s36
      %s39 = sphi 0, %s37
      %s40 = sphi 0, %s38
      %s50 = sphi 0, %s52
      %s53 = sphi 0, %s50
      %s54 = sphi 0, %s53
      %s70 = sphi 0, %s54
      %s78 = sphi 0, %s80
      %s81 = sphi 0, %s78
      %s82 = sphi 0, %s81
      %s98 = sphi 0, %s82
      %s102 = sphi 0, %s102
      %s104 = sphi 0, %s102
      %s105 = sphi 0, %s104
      %s119 = sphi 0, %s105
      %s123 = sphi 0, %s123
      %s125 = sphi 0, %s123
      %s126 = sphi 0, %s125
      %s140 = sphi 0, %s126
      %s144 = sphi 0, %s144
      %s146 = sphi 0, %s144
      %s147 = sphi 0, %s146
      %s161 = sphi 0, %s147
      %s165 = sphi 0, %s165
      %s167 = sphi 0, %s165
      %s168 = sphi 0, %s167
      %s182 = sphi 0, %s168
      %s186 = sphi 0, %s186
      %s188 = sphi 0, %s186
      %s189 = sphi 0, %s188
      %s203 = sphi 0, %s189
      %s207 = sphi 0, %s207
      %s209 = sphi 0, %s207
      %s210 = sphi 0, %s209
      %s224 = sphi 0, %s210
      %s228 = sphi 0, %s228
      %s230 = sphi 0, %s228
      %s231 = sphi 0, %s230
      %s245 = sphi 0, %s231
      %s249 = sphi 0, %s249
      %s251 = sphi 0, %s249
      %s252 = sphi 0, %s251
      %s266 = sphi 0, %s252
      %s270 = sphi 0, %s270
      %s272 = sphi 0, %s270
      %s273 = sphi 0, %s272
      %s287 = sphi 0, %s273
      %s295 = sphi 0, %s297
      %s298 = sphi 0, %s295
      %s299 = sphi 0, %s298
      %s315 = sphi 0, %s299
    $region4: #{tpu_custom_call.1} parent=1 // loop_header_branch
      %31 = sbr.rel (%p29) target = $region8
    $region5: #{tpu_custom_call.1} parent=1 // loop_body
      %s33 = ssub.s32 %s28, 1
      %s34 = ssub.s32 %s28, 2
      %s41 = sadd.s32 1, %s36
      %p42 = scmp.ge.s32.totalorder %s41, 1
      %s43 = scalar_select %p42, 0, %s41
      %s44 = sadd.s32 1, %s35
      %s45 = scalar_select %p42, %s44, %s35
      %p46 = scmp.ge.s32.totalorder %s45, 2
      %s47 = scalar_select %p46, 0, %s45
      %s48 = ssub.s32 %s35, %s47
      %p49 = scmp.eq.s32.totalorder %s48, 0
      %s51 = sadd.s32 %s50, 1
      %s52 = scalar_select %p49, %s50, %s51
      %p55 = pneg %p49
      %p56 = scmp.eq.s32.totalorder %s28, 1
      %p57 = por %p55, %p56
      %p58 = scmp.ne.s32.totalorder %s50, %s53
      %p59 = scmp.eq.s32.totalorder %s28, 0
      %p60 = por %p58, %p59
      %p61 = scmp.ne.s32.totalorder %s50, %s53
      %p62 = scmp.eq.s32.totalorder %s33, 1
      %p63 = por %p61, %p62
      %p64 = scmp.ne.s32.totalorder %s53, %s54
      %p65 = scmp.eq.s32.totalorder %s33, 0
      %p66 = por %p64, %p65
      %p67 = scmp.ne.s32.totalorder %s53, %s54
      %p68 = scmp.eq.s32.totalorder %s34, 1
      %p69 = por %p67, %p68
      %p71 = scmp.ne.s32.totalorder %s54, %s70
      %p72 = scmp.eq.s32.totalorder %s34, 0
      %p73 = por %p71, %p72
      %s74 = ssub.s32 %s35, %s47
      %s75 = ssub.s32 %s36, %s43
      %s76 = sor.u32 %s74, %s75
      %p77 = scmp.eq.s32.totalorder %s76, 0
      %s79 = sadd.s32 %s78, 1
      %s80 = scalar_select %p77, %s78, %s79
      %p83 = pneg %p77
      %p84 = scmp.eq.s32.totalorder %s28, 1
      %p85 = por %p83, %p84
      %p86 = scmp.ne.s32.totalorder %s78, %s81
      %p87 = scmp.eq.s32.totalorder %s28, 0
      %p88 = por %p86, %p87
      %p89 = scmp.ne.s32.totalorder %s78, %s81
      %p90 = scmp.eq.s32.totalorder %s33, 1
      %p91 = por %p89, %p90
      %p92 = scmp.ne.s32.totalorder %s81, %s82
      %p93 = scmp.eq.s32.totalorder %s33, 0
      %p94 = por %p92, %p93
      %p95 = scmp.ne.s32.totalorder %s81, %s82
      %p96 = scmp.eq.s32.totalorder %s34, 1
      %p97 = por %p95, %p96
      %p99 = scmp.ne.s32.totalorder %s82, %s98
      %p100 = scmp.eq.s32.totalorder %s34, 0
      %p101 = por %p99, %p100
      %s103 = sadd.s32 %s102, 1
      %p106 = scmp.eq.s32.totalorder %s28, 1
      %p107 = scmp.ne.s32.totalorder %s102, %s104
      %p108 = scmp.eq.s32.totalorder %s28, 0
      %p109 = por %p107, %p108
      %p110 = scmp.ne.s32.totalorder %s102, %s104
      %p111 = scmp.eq.s32.totalorder %s33, 1
      %p112 = por %p110, %p111
      %p113 = scmp.ne.s32.totalorder %s104, %s105
      %p114 = scmp.eq.s32.totalorder %s33, 0
      %p115 = por %p113, %p114
      %p116 = scmp.ne.s32.totalorder %s104, %s105
      %p117 = scmp.eq.s32.totalorder %s34, 1
      %p118 = por %p116, %p117
      %p120 = scmp.ne.s32.totalorder %s105, %s119
      %p121 = scmp.eq.s32.totalorder %s34, 0
      %p122 = por %p120, %p121
      %s124 = sadd.s32 %s123, 1
      %p127 = scmp.eq.s32.totalorder %s28, 1
      %p128 = scmp.ne.s32.totalorder %s123, %s125
      %p129 = scmp.eq.s32.totalorder %s28, 0
      %p130 = por %p128, %p129
      %p131 = scmp.ne.s32.totalorder %s123, %s125
      %p132 = scmp.eq.s32.totalorder %s33, 1
      %p133 = por %p131, %p132
      %p134 = scmp.ne.s32.totalorder %s125, %s126
      %p135 = scmp.eq.s32.totalorder %s33, 0
      %p136 = por %p134, %p135
      %p137 = scmp.ne.s32.totalorder %s125, %s126
      %p138 = scmp.eq.s32.totalorder %s34, 1
      %p139 = por %p137, %p138
      %p141 = scmp.ne.s32.totalorder %s126, %s140
      %p142 = scmp.eq.s32.totalorder %s34, 0
      %p143 = por %p141, %p142
      %s145 = sadd.s32 %s144, 1
      %p148 = scmp.eq.s32.totalorder %s28, 1
      %p149 = scmp.ne.s32.totalorder %s144, %s146
      %p150 = scmp.eq.s32.totalorder %s28, 0
      %p151 = por %p149, %p150
      %p152 = scmp.ne.s32.totalorder %s144, %s146
      %p153 = scmp.eq.s32.totalorder %s33, 1
      %p154 = por %p152, %p153
      %p155 = scmp.ne.s32.totalorder %s146, %s147
      %p156 = scmp.eq.s32.totalorder %s33, 0
      %p157 = por %p155, %p156
      %p158 = scmp.ne.s32.totalorder %s146, %s147
      %p159 = scmp.eq.s32.totalorder %s34, 1
      %p160 = por %p158, %p159
      %p162 = scmp.ne.s32.totalorder %s147, %s161
      %p163 = scmp.eq.s32.totalorder %s34, 0
      %p164 = por %p162, %p163
      %s166 = sadd.s32 %s165, 1
      %p169 = scmp.eq.s32.totalorder %s28, 1
      %p170 = scmp.ne.s32.totalorder %s165, %s167
      %p171 = scmp.eq.s32.totalorder %s28, 0
      %p172 = por %p170, %p171
      %p173 = scmp.ne.s32.totalorder %s165, %s167
      %p174 = scmp.eq.s32.totalorder %s33, 1
      %p175 = por %p173, %p174
      %p176 = scmp.ne.s32.totalorder %s167, %s168
      %p177 = scmp.eq.s32.totalorder %s33, 0
      %p178 = por %p176, %p177
      %p179 = scmp.ne.s32.totalorder %s167, %s168
      %p180 = scmp.eq.s32.totalorder %s34, 1
      %p181 = por %p179, %p180
      %p183 = scmp.ne.s32.totalorder %s168, %s182
      %p184 = scmp.eq.s32.totalorder %s34, 0
      %p185 = por %p183, %p184
      %s187 = sadd.s32 %s186, 1
      %p190 = scmp.eq.s32.totalorder %s28, 1
      %p191 = scmp.ne.s32.totalorder %s186, %s188
      %p192 = scmp.eq.s32.totalorder %s28, 0
      %p193 = por %p191, %p192
      %p194 = scmp.ne.s32.totalorder %s186, %s188
      %p195 = scmp.eq.s32.totalorder %s33, 1
      %p196 = por %p194, %p195
      %p197 = scmp.ne.s32.totalorder %s188, %s189
      %p198 = scmp.eq.s32.totalorder %s33, 0
      %p199 = por %p197, %p198
      %p200 = scmp.ne.s32.totalorder %s188, %s189
      %p201 = scmp.eq.s32.totalorder %s34, 1
      %p202 = por %p200, %p201
      %p204 = scmp.ne.s32.totalorder %s189, %s203
      %p205 = scmp.eq.s32.totalorder %s34, 0
      %p206 = por %p204, %p205
      %s208 = sadd.s32 %s207, 1
      %p211 = scmp.eq.s32.totalorder %s28, 1
      %p212 = scmp.ne.s32.totalorder %s207, %s209
      %p213 = scmp.eq.s32.totalorder %s28, 0
      %p214 = por %p212, %p213
      %p215 = scmp.ne.s32.totalorder %s207, %s209
      %p216 = scmp.eq.s32.totalorder %s33, 1
      %p217 = por %p215, %p216
      %p218 = scmp.ne.s32.totalorder %s209, %s210
      %p219 = scmp.eq.s32.totalorder %s33, 0
      %p220 = por %p218, %p219
      %p221 = scmp.ne.s32.totalorder %s209, %s210
      %p222 = scmp.eq.s32.totalorder %s34, 1
      %p223 = por %p221, %p222
      %p225 = scmp.ne.s32.totalorder %s210, %s224
      %p226 = scmp.eq.s32.totalorder %s34, 0
      %p227 = por %p225, %p226
      %s229 = sadd.s32 %s228, 1
      %p232 = scmp.eq.s32.totalorder %s28, 1
      %p233 = scmp.ne.s32.totalorder %s228, %s230
      %p234 = scmp.eq.s32.totalorder %s28, 0
      %p235 = por %p233, %p234
      %p236 = scmp.ne.s32.totalorder %s228, %s230
      %p237 = scmp.eq.s32.totalorder %s33, 1
      %p238 = por %p236, %p237
      %p239 = scmp.ne.s32.totalorder %s230, %s231
      %p240 = scmp.eq.s32.totalorder %s33, 0
      %p241 = por %p239, %p240
      %p242 = scmp.ne.s32.totalorder %s230, %s231
      %p243 = scmp.eq.s32.totalorder %s34, 1
      %p244 = por %p242, %p243
      %p246 = scmp.ne.s32.totalorder %s231, %s245
      %p247 = scmp.eq.s32.totalorder %s34, 0
      %p248 = por %p246, %p247
      %s250 = sadd.s32 %s249, 1
      %p253 = scmp.eq.s32.totalorder %s28, 1
      %p254 = scmp.ne.s32.totalorder %s249, %s251
      %p255 = scmp.eq.s32.totalorder %s28, 0
      %p256 = por %p254, %p255
      %p257 = scmp.ne.s32.totalorder %s249, %s251
      %p258 = scmp.eq.s32.totalorder %s33, 1
      %p259 = por %p257, %p258
      %p260 = scmp.ne.s32.totalorder %s251, %s252
      %p261 = scmp.eq.s32.totalorder %s33, 0
      %p262 = por %p260, %p261
      %p263 = scmp.ne.s32.totalorder %s251, %s252
      %p264 = scmp.eq.s32.totalorder %s34, 1
      %p265 = por %p263, %p264
      %p267 = scmp.ne.s32.totalorder %s252, %s266
      %p268 = scmp.eq.s32.totalorder %s34, 0
      %p269 = por %p267, %p268
      %s271 = sadd.s32 %s270, 1
      %p274 = scmp.eq.s32.totalorder %s28, 1
      %p275 = scmp.ne.s32.totalorder %s270, %s272
      %p276 = scmp.eq.s32.totalorder %s28, 0
      %p277 = por %p275, %p276
      %p278 = scmp.ne.s32.totalorder %s270, %s272
      %p279 = scmp.eq.s32.totalorder %s33, 1
      %p280 = por %p278, %p279
      %p281 = scmp.ne.s32.totalorder %s272, %s273
      %p282 = scmp.eq.s32.totalorder %s33, 0
      %p283 = por %p281, %p282
      %p284 = scmp.ne.s32.totalorder %s272, %s273
      %p285 = scmp.eq.s32.totalorder %s34, 1
      %p286 = por %p284, %p285
      %p288 = scmp.ne.s32.totalorder %s273, %s287
      %p289 = scmp.eq.s32.totalorder %s34, 0
      %p290 = por %p288, %p289
      %s291 = ssub.s32 %s35, %s47
      %s292 = ssub.s32 %s36, %s43
      %s293 = sor.u32 %s291, %s292
      %p294 = scmp.eq.s32.totalorder %s293, 0
      %s296 = sadd.s32 %s295, 1
      %s297 = scalar_select %p294, %s295, %s296
      %p300 = pneg %p294
      %p301 = scmp.eq.s32.totalorder %s28, 1
      %p302 = por %p300, %p301
      %p303 = scmp.ne.s32.totalorder %s295, %s298
      %p304 = scmp.eq.s32.totalorder %s28, 0
      %p305 = por %p303, %p304
      %p306 = scmp.ne.s32.totalorder %s295, %s298
      %p307 = scmp.eq.s32.totalorder %s33, 1
      %p308 = por %p306, %p307
      %p309 = scmp.ne.s32.totalorder %s298, %s299
      %p310 = scmp.eq.s32.totalorder %s33, 0
      %p311 = por %p309, %p310
      %p312 = scmp.ne.s32.totalorder %s298, %s299
      %p313 = scmp.eq.s32.totalorder %s34, 1
      %p314 = por %p312, %p313
      %p316 = scmp.ne.s32.totalorder %s299, %s315
      %p317 = scmp.eq.s32.totalorder %s34, 0
      %p318 = por %p316, %p317
      %p319 = scmp.le.s32.totalorder 1, %s28
      %p320 = scmp.lt.s32.totalorder %s28, 3
      %p321 = pnand %p319, %p320
      %p322 = pneg %p321
      // Predicated region
      $region9: #{tpu_custom_call.1} parent=5 // pred_check
        _
      $region10: #{tpu_custom_call.1} parent=5 // pred_check_branch
        %324 = sbr.rel (%p321) target = $region12
      $region11: #{tpu_custom_call.1} parent=5 // pred_region
        %s325 = ssub.s32 %s28, 1
        // Predicated region
        $region13: #{tpu_custom_call.1} parent=11 // pred_check
          %p326 = pneg %p115
        $region14: #{tpu_custom_call.1} parent=11 // pred_check_branch
          %328 = sbr.rel (%p326) target = $region16
        $region15: #{tpu_custom_call.1} parent=11 // pred_region
          %330 = vsyncadd [#allocation7], 0
          %s331 = sshll.u32 %s2, 4
          %s332 = int_to_ptr.hbm [resolvable:$true] %s331
          %s333 = sshll.u32 [#allocation8], 4
          %s334 = int_to_ptr.vmem [resolvable:$true] %s333
          %339 = dma.hbm_to_vmem [thread:$0]  %s332, 4096, %s334, [#allocation7], 128, 128, 8
        $region16: #{tpu_custom_call.1} parent=11 // pred_fallthru
          _
        // Predicated region
        $region17: #{tpu_custom_call.1} parent=11 // pred_check
          %p340 = pneg %p136
        $region18: #{tpu_custom_call.1} parent=11 // pred_check_branch
          %342 = sbr.rel (%p340) target = $region20
        $region19: #{tpu_custom_call.1} parent=11 // pred_region
          _
        $region20: #{tpu_custom_call.1} parent=11 // pred_fallthru
          _
        // Predicated region
        $region21: #{tpu_custom_call.1} parent=11 // pred_check
          %p343 = pneg %p157
        $region22: #{tpu_custom_call.1} parent=11 // pred_check_branch
          %345 = sbr.rel (%p343) target = $region24
        $region23: #{tpu_custom_call.1} parent=11 // pred_region
          %347 = vsyncadd [#allocation10], 0
          %s348 = sshll.u32 %s4, 4
          %s349 = int_to_ptr.hbm [resolvable:$true] %s348
          %s350 = sshll.u32 [#allocation9], 4
          %s351 = int_to_ptr.vmem [resolvable:$true] %s350
          %356 = dma.hbm_to_vmem [thread:$0]  %s349, 2048, %s351, [#allocation10], 128, 128, 8
        $region24: #{tpu_custom_call.1} parent=11 // pred_fallthru
          _
        // Predicated region
        $region25: #{tpu_custom_call.1} parent=11 // pred_check
          %p357 = pneg %p178
        $region26: #{tpu_custom_call.1} parent=11 // pred_check_branch
          %359 = sbr.rel (%p357) target = $region28
        $region27: #{tpu_custom_call.1} parent=11 // pred_region
          _
        $region28: #{tpu_custom_call.1} parent=11 // pred_fallthru
          _
        // Predicated region
        $region29: #{tpu_custom_call.1} parent=11 // pred_check
          %p360 = pneg %p199
        $region30: #{tpu_custom_call.1} parent=11 // pred_check_branch
          %362 = sbr.rel (%p360) target = $region32
        $region31: #{tpu_custom_call.1} parent=11 // pred_region
          %364 = vsyncadd [#allocation10], 0
          %s365 = sshll.u32 %s6, 4
          %s366 = int_to_ptr.hbm [resolvable:$true] %s365
          %s367 = sshll.u32 [#allocation11], 4
          %s368 = int_to_ptr.vmem [resolvable:$true] %s367
          %373 = dma.hbm_to_vmem [thread:$0]  %s366, 10240, %s368, [#allocation10], 128, 128, 8
        $region32: #{tpu_custom_call.1} parent=11 // pred_fallthru
          _
        // Predicated region
        $region33: #{tpu_custom_call.1} parent=11 // pred_check
          %p374 = pneg %p220
        $region34: #{tpu_custom_call.1} parent=11 // pred_check_branch
          %376 = sbr.rel (%p374) target = $region36
        $region35: #{tpu_custom_call.1} parent=11 // pred_region
          _
        $region36: #{tpu_custom_call.1} parent=11 // pred_fallthru
          _
        // Predicated region
        $region37: #{tpu_custom_call.1} parent=11 // pred_check
          %p377 = pneg %p241
        $region38: #{tpu_custom_call.1} parent=11 // pred_check_branch
          %379 = sbr.rel (%p377) target = $region40
        $region39: #{tpu_custom_call.1} parent=11 // pred_region
          %381 = vsyncadd [#allocation13], 0
          %s382 = sshll.u32 %s8, 4
          %s383 = int_to_ptr.hbm [resolvable:$true] %s382
          %s384 = sshll.u32 [#allocation12], 4
          %s385 = int_to_ptr.vmem [resolvable:$true] %s384
          %390 = dma.hbm_to_vmem [thread:$0]  %s383, 2048, %s385, [#allocation13], 128, 128, 8
        $region40: #{tpu_custom_call.1} parent=11 // pred_fallthru
          _
        // Predicated region
        $region41: #{tpu_custom_call.1} parent=11 // pred_check
          %p391 = pneg %p262
        $region42: #{tpu_custom_call.1} parent=11 // pred_check_branch
          %393 = sbr.rel (%p391) target = $region44
        $region43: #{tpu_custom_call.1} parent=11 // pred_region
          %395 = vsyncadd [#allocation13], 0
          %s396 = sshll.u32 %s9, 4
          %s397 = int_to_ptr.hbm [resolvable:$true] %s396
          %s398 = sshll.u32 [#allocation14], 4
          %s399 = int_to_ptr.vmem [resolvable:$true] %s398
          %404 = dma.hbm_to_vmem [thread:$0]  %s397, 10240, %s399, [#allocation13], 128, 128, 8
        $region44: #{tpu_custom_call.1} parent=11 // pred_fallthru
          _
        // Predicated region
        $region45: #{tpu_custom_call.1} parent=11 // pred_check
          %p405 = pneg %p283
        $region46: #{tpu_custom_call.1} parent=11 // pred_check_branch
          %407 = sbr.rel (%p405) target = $region48
        $region47: #{tpu_custom_call.1} parent=11 // pred_region
          _
        $region48: #{tpu_custom_call.1} parent=11 // pred_fallthru
          _
      $region12: #{tpu_custom_call.1} parent=5 // pred_fallthru
        _
      %p408 = scmp.lt.s32.totalorder %s28, 2
      // Predicated region
      $region49: #{tpu_custom_call.1} parent=5 // pred_check
        %p409 = pneg %p408
      $region50: #{tpu_custom_call.1} parent=5 // pred_check_branch
        %411 = sbr.rel (%p409) target = $region52
      $region51: #{tpu_custom_call.1} parent=5 // pred_region
        // Predicated region
        $region53: #{tpu_custom_call.1} parent=51 // pred_check
          %p412 = pneg %p60
        $region54: #{tpu_custom_call.1} parent=51 // pred_check_branch
          %414 = sbr.rel (%p412) target = $region56
        $region55: #{tpu_custom_call.1} parent=51 // pred_region
          %s415 = sand.u32 %s50, 1
          %s416 = scalar_lea.sflag [#allocation4], %s415
          %s417 = sand.u32 %s50, 1
          %s418 = smul.addr %s417, 32
          %s419 = scalar_lea.vmem [#allocation3], %s418
          %421 = vsyncadd %s416, 0
          %s422 = smul.addr %s35, 4
          %s423 = smul.addr %s422, 8
          %s424 = scalar_lea.hbm %s0, %s423
          %s425 = sshll.u32 %s424, 4
          %s426 = int_to_ptr.hbm [resolvable:$true] %s425
          %s427 = sshll.u32 %s419, 4
          %s428 = int_to_ptr.vmem [resolvable:$true] %s427
          %433 = dma.hbm_to_vmem [thread:$0]  %s426, 512, %s428, %s416, 256, 256, 16
        $region56: #{tpu_custom_call.1} parent=51 // pred_fallthru
          _
        // Predicated region
        $region57: #{tpu_custom_call.1} parent=51 // pred_check
          %p434 = pneg %p88
        $region58: #{tpu_custom_call.1} parent=51 // pred_check_branch
          %436 = sbr.rel (%p434) target = $region60
        $region59: #{tpu_custom_call.1} parent=51 // pred_region
          %s437 = sand.u32 %s28, 1
          %s438 = scalar_lea.sflag [#allocation7], %s437
          %s439 = sand.u32 %s78, 1
          %s440 = smul.addr %s439, 128
          %s441 = scalar_lea.vmem [#allocation6], %s440
          %s442 = smul.u32 8, %s36
          %444 = vsyncadd %s438, 0
          %s445 = smul.addr %s442, 2
          %s446 = smul.addr %s35, 16
          %s447 = sadd.s32 %s445, %s446
          %s448 = smul.addr %s447, 8
          %s449 = scalar_lea.hbm %s1, %s448
          %s450 = sshll.u32 %s449, 4
          %s451 = int_to_ptr.hbm [resolvable:$true] %s450
          %s452 = sshll.u32 %s441, 4
          %s453 = int_to_ptr.vmem [resolvable:$true] %s452
          %458 = dma.hbm_to_vmem [thread:$0]  %s451, 2048, %s453, %s438, 128, 128, 8
        $region60: #{tpu_custom_call.1} parent=51 // pred_fallthru
          _
      $region52: #{tpu_custom_call.1} parent=5 // pred_fallthru
        _
      %p459 = scmp.le.s32.totalorder 1, %s28
      %p460 = scmp.lt.s32.totalorder %s28, 3
      %p461 = pnand %p459, %p460
      %p462 = pneg %p461
      // Predicated region
      $region61: #{tpu_custom_call.1} parent=5 // pred_check
        _
      $region62: #{tpu_custom_call.1} parent=5 // pred_check_branch
        %464 = sbr.rel (%p461) target = $region64
      $region63: #{tpu_custom_call.1} parent=5 // pred_region
        %s465 = ssub.s32 %s28, 1
        %s466 = sand.u32 %s53, 1
        %s467 = scalar_lea.sflag [#allocation4], %s466
        %s468 = sand.u32 %s53, 1
        %s469 = smul.addr %s468, 32
        %s470 = scalar_lea.vmem [#allocation3], %s469
        // Predicated region
        $region65: #{tpu_custom_call.1} parent=63 // pred_check
          %p471 = pneg %p66
        $region66: #{tpu_custom_call.1} parent=63 // pred_check_branch
          %473 = sbr.rel (%p471) target = $region68
        $region67: #{tpu_custom_call.1} parent=63 // pred_region
          %475 = dma.done %s467, 512
        $region68: #{tpu_custom_call.1} parent=63 // pred_fallthru
          _
        %s476 = sand.u32 %s33, 1
        %s477 = scalar_lea.sflag [#allocation7], %s476
        %s478 = sand.u32 %s81, 1
        %s479 = smul.addr %s478, 128
        %s480 = scalar_lea.vmem [#allocation6], %s479
        // Predicated region
        $region69: #{tpu_custom_call.1} parent=63 // pred_check
          %p481 = pneg %p94
        $region70: #{tpu_custom_call.1} parent=63 // pred_check_branch
          %483 = sbr.rel (%p481) target = $region72
        $region71: #{tpu_custom_call.1} parent=63 // pred_region
          %485 = dma.done %s477, 2048
        $region72: #{tpu_custom_call.1} parent=63 // pred_fallthru
          _
        // Predicated region
        $region73: #{tpu_custom_call.1} parent=63 // pred_check
          %p486 = pneg %p115
        $region74: #{tpu_custom_call.1} parent=63 // pred_check_branch
          %488 = sbr.rel (%p486) target = $region76
        $region75: #{tpu_custom_call.1} parent=63 // pred_region
          %490 = dma.done [#allocation7], 4096
        $region76: #{tpu_custom_call.1} parent=63 // pred_fallthru
          _
        // Predicated region
        $region77: #{tpu_custom_call.1} parent=63 // pred_check
          %p491 = pneg %p157
        $region78: #{tpu_custom_call.1} parent=63 // pred_check_branch
          %493 = sbr.rel (%p491) target = $region80
        $region79: #{tpu_custom_call.1} parent=63 // pred_region
          %495 = dma.done [#allocation10], 2048
        $region80: #{tpu_custom_call.1} parent=63 // pred_fallthru
          _
        // Predicated region
        $region81: #{tpu_custom_call.1} parent=63 // pred_check
          %p496 = pneg %p199
        $region82: #{tpu_custom_call.1} parent=63 // pred_check_branch
          %498 = sbr.rel (%p496) target = $region84
        $region83: #{tpu_custom_call.1} parent=63 // pred_region
          %500 = dma.done [#allocation10], 10240
        $region84: #{tpu_custom_call.1} parent=63 // pred_fallthru
          _
        // Predicated region
        $region85: #{tpu_custom_call.1} parent=63 // pred_check
          %p501 = pneg %p241
        $region86: #{tpu_custom_call.1} parent=63 // pred_check_branch
          %503 = sbr.rel (%p501) target = $region88
        $region87: #{tpu_custom_call.1} parent=63 // pred_region
          %505 = dma.done [#allocation13], 2048
        $region88: #{tpu_custom_call.1} parent=63 // pred_fallthru
          _
        // Predicated region
        $region89: #{tpu_custom_call.1} parent=63 // pred_check
          %p506 = pneg %p262
        $region90: #{tpu_custom_call.1} parent=63 // pred_check_branch
          %508 = sbr.rel (%p506) target = $region92
        $region91: #{tpu_custom_call.1} parent=63 // pred_region
          %510 = dma.done [#allocation13], 10240
        $region92: #{tpu_custom_call.1} parent=63 // pred_fallthru
          _
        %s511 = sand.u32 %s53, 1
        %s512 = scalar_lea.sflag [#allocation4], %s511
        %s513 = sand.u32 %s53, 1
        %s514 = smul.addr %s513, 32
        %s515 = scalar_lea.vmem [#allocation3], %s514
        %p516 = pneg %p66
        %p517 = pneg %p63
        %s518 = sand.u32 %s33, 1
        %s519 = scalar_lea.sflag [#allocation7], %s518
        %s520 = sand.u32 %s81, 1
        %s521 = smul.addr %s520, 128
        %s522 = scalar_lea.vmem [#allocation6], %s521
        %p523 = pneg %p94
        %p524 = pneg %p91
        %p525 = pneg %p115
        %p526 = pneg %p112
        %p527 = pneg %p136
        %p528 = pneg %p133
        %p529 = pneg %p157
        %p530 = pneg %p154
        %p531 = pneg %p178
        %p532 = pneg %p175
        %p533 = pneg %p199
        %p534 = pneg %p196
        %p535 = pneg %p220
        %p536 = pneg %p217
        %p537 = pneg %p241
        %p538 = pneg %p238
        %p539 = pneg %p262
        %p540 = pneg %p259
        %p541 = pneg %p283
        %p542 = pneg %p280
        %p543 = pneg %p311
        %p544 = pneg %p308
        %s545 = sand.u32 %s298, 1
        %s546 = scalar_lea.sflag [#allocation5], %s545
        %s547 = sand.u32 %s298, 1
        %s548 = smul.addr %s547, 128
        %s549 = scalar_lea.vmem [#allocation15], %s548
        %s550 = smul.u32 8, %s38
        %s551 = smul.u32 8, %s38
        %552 = vst [vmem:[#allocation2] sm:$0x3] 0.0
        %553 = vst [vmem:[#allocation2 + $0x18] sm:$0x3] 0.0
        %554 = vst [vmem:[#allocation2 + $0x30] sm:$0x3] 0.0
        %555 = vst [vmem:[#allocation2 + $0x48] sm:$0x3] 0.0
        %556 = vst [vmem:[#allocation2 + $0x60] sm:$0x3] 0.0
        %557 = vst [vmem:[#allocation2 + $0x78] sm:$0x3] 0.0
        %558 = vst [vmem:[#allocation2 + $0x90] sm:$0x3] 0.0
        %559 = vst [vmem:[#allocation2 + $0xa8] sm:$0x3] 0.0
        %560 = vst [vmem:[#allocation2 + $0x12] sm:$0x3] 0.0
        %561 = vst [vmem:[#allocation2 + $0x2a] sm:$0x3] 0.0
        %562 = vst [vmem:[#allocation2 + $0x42] sm:$0x3] 0.0
        %563 = vst [vmem:[#allocation2 + $0x5a] sm:$0x3] 0.0
        %564 = vst [vmem:[#allocation2 + $0x72] sm:$0x3] 0.0
        %565 = vst [vmem:[#allocation2 + $0x8a] sm:$0x3] 0.0
        %566 = vst [vmem:[#allocation2 + $0xa2] sm:$0x3] 0.0
        %567 = vst [vmem:[#allocation2 + $0xba] sm:$0x3] 0.0
        %v568 = vld [vmem:[%s470] sm:$0xff]
        %v569 = vld [vmem:[%s470 + $0x8] sm:$0xff]
        %v570 = vld [vmem:[%s470 + $0x10] sm:$0xff]
        %v571 = vld [vmem:[%s470 + $0x18] sm:$0xff]
        %v572 = vld [vmem:[#allocation8] sm:$0xff]
        %v573 = vld [vmem:[#allocation8 + $0x8] sm:$0xff]
        %v574 = vld [vmem:[#allocation8 + $0x10] sm:$0xff]
        %v575 = vld [vmem:[#allocation8 + $0x18] sm:$0xff]
        %v576 = vld [vmem:[#allocation8 + $0x20] sm:$0xff]
        %v577 = vld [vmem:[#allocation8 + $0x28] sm:$0xff]
        %v578 = vld [vmem:[#allocation8 + $0x30] sm:$0xff]
        %v579 = vld [vmem:[#allocation8 + $0x38] sm:$0xff]
        %v580 = vld [vmem:[#allocation8 + $0x40] sm:$0xff]
        %v581 = vld [vmem:[#allocation8 + $0x48] sm:$0xff]
        %v582 = vld [vmem:[#allocation8 + $0x50] sm:$0xff]
        %v583 = vld [vmem:[#allocation8 + $0x58] sm:$0xff]
        %v584 = vld [vmem:[#allocation8 + $0x60] sm:$0xff]
        %v585 = vld [vmem:[#allocation8 + $0x68] sm:$0xff]
        %v586 = vld [vmem:[#allocation8 + $0x70] sm:$0xff]
        %v587 = vld [vmem:[#allocation8 + $0x78] sm:$0xff]
        %v588 = vld [vmem:[#allocation8 + $0x80] sm:$0xff]
        %v589 = vld [vmem:[#allocation8 + $0x88] sm:$0xff]
        %v590 = vld [vmem:[#allocation8 + $0x90] sm:$0xff]
        %v591 = vld [vmem:[#allocation8 + $0x98] sm:$0xff]
        %v592 = vld [vmem:[#allocation8 + $0xa0] sm:$0xff]
        %v593 = vld [vmem:[#allocation8 + $0xa8] sm:$0xff]
        %v594 = vld [vmem:[#allocation8 + $0xb0] sm:$0xff]
        %v595 = vld [vmem:[#allocation8 + $0xb8] sm:$0xff]
        %v596 = vld [vmem:[#allocation8 + $0xc0] sm:$0xff]
        %v597 = vld [vmem:[#allocation8 + $0xc8] sm:$0xff]
        %v598 = vld [vmem:[#allocation8 + $0xd0] sm:$0xff]
        %v599 = vld [vmem:[#allocation8 + $0xd8] sm:$0xff]
        %v600 = vld [vmem:[#allocation8 + $0xe0] sm:$0xff]
        %v601 = vld [vmem:[#allocation8 + $0xe8] sm:$0xff]
        %v602 = vld [vmem:[#allocation8 + $0xf0] sm:$0xff]
        %v603 = vld [vmem:[#allocation8 + $0xf8] sm:$0xff]
        %v604 = vld [vmem:[%s3] sm:$0x1]
        %v606 = vperm.slane %v604, 0
        %608 = vmatpush.msra.mxu0 %v587
        %609 = vmatpush.msra.mxu0 %v586
        %610 = vmatpush.msra.mxu0 %v585
        %611 = vmatpush.msra.mxu0 %v584
        %612 = vmatpush.msra.mxu0 %v583
        %613 = vmatpush.msra.mxu0 %v582
        %614 = vmatpush.msra.mxu0 %v581
        %615 = vmatpush.msra.mxu0 %v580
        %616 = vmatpush.msra.mxu0 %v579
        %617 = vmatpush.msra.mxu0 %v578
        %618 = vmatpush.msra.mxu0 %v577
        %619 = vmatpush.msra.mxu0 %v576
        %620 = vmatpush.msra.mxu0 %v575
        %621 = vmatpush.msra.mxu0 %v574
        %622 = vmatpush.msra.mxu0 %v573
        %623 = vmatpush.msra.mxu0 %v572
        %624 = vmatmul.f32.gmra.mxu0 %v568
        %v625 = vpop.f32.mrf.mxu0
        %v626 = vadd.f32 %v606, %v625
        %627 = vmatmul.f32.gmra.mxu0 %v570
        %v628 = vpop.f32.mrf.mxu0
        %v629 = vadd.f32 %v606, %v628
        %630 = vdwg.mxu0
        %631 = vmatpush.msra.mxu0 %v603
        %632 = vmatpush.msra.mxu0 %v602
        %633 = vmatpush.msra.mxu0 %v601
        %634 = vmatpush.msra.mxu0 %v600
        %635 = vmatpush.msra.mxu0 %v599
        %636 = vmatpush.msra.mxu0 %v598
        %637 = vmatpush.msra.mxu0 %v597
        %638 = vmatpush.msra.mxu0 %v596
        %639 = vmatpush.msra.mxu0 %v595
        %640 = vmatpush.msra.mxu0 %v594
        %641 = vmatpush.msra.mxu0 %v593
        %642 = vmatpush.msra.mxu0 %v592
        %643 = vmatpush.msra.mxu0 %v591
        %644 = vmatpush.msra.mxu0 %v590
        %645 = vmatpush.msra.mxu0 %v589
        %646 = vmatpush.msra.mxu0 %v588
        %647 = vmatmul.f32.gmra.mxu0 %v569
        %v648 = vpop.f32.mrf.mxu0
        %v649 = vadd.f32 %v626, %v648
        %650 = vmatmul.f32.gmra.mxu0 %v571
        %v651 = vpop.f32.mrf.mxu0
        %v652 = vadd.f32 %v629, %v651
        %653 = vdwg.mxu0
        %vm654 = vcmp.ge.f32.partialorder %v649, 0.0
        %vm655 = vcmp.ge.f32.partialorder %v652, 0.0
        %v656 = vmul.f32 %v649, 0.01
        %v657 = vmul.f32 %v652, 0.01
        %v658 = vsel %vm654, %v649, %v656
        %v659 = vsel %vm655, %v652, %v657
        %v660 = vld [vmem:[#allocation9] sm:$0xff]
        %v661 = vld [vmem:[#allocation9 + $0x8] sm:$0xff]
        %v662 = vld [vmem:[#allocation9 + $0x10] sm:$0xff]
        %v663 = vld [vmem:[#allocation9 + $0x18] sm:$0xff]
        %v664 = vld [vmem:[#allocation9 + $0x20] sm:$0xff]
        %v665 = vld [vmem:[#allocation9 + $0x28] sm:$0xff]
        %v666 = vld [vmem:[#allocation9 + $0x30] sm:$0xff]
        %v667 = vld [vmem:[#allocation9 + $0x38] sm:$0xff]
        %v668 = vld [vmem:[#allocation9 + $0x40] sm:$0xff]
        %v669 = vld [vmem:[#allocation9 + $0x48] sm:$0xff]
        %v670 = vld [vmem:[#allocation9 + $0x50] sm:$0xff]
        %v671 = vld [vmem:[#allocation9 + $0x58] sm:$0xff]
        %v672 = vld [vmem:[#allocation9 + $0x60] sm:$0xff]
        %v673 = vld [vmem:[#allocation9 + $0x68] sm:$0xff]
        %v674 = vld [vmem:[#allocation9 + $0x70] sm:$0xff]
        %v675 = vld [vmem:[#allocation9 + $0x78] sm:$0xff]
        %v676 = vld [vmem:[%s5] sm:$0x1]
        %v678 = vperm.slane %v676, 0
        %680 = vmatpush.msra.mxu0 %v675
        %681 = vmatpush.msra.mxu0 %v674
        %682 = vmatpush.msra.mxu0 %v673
        %683 = vmatpush.msra.mxu0 %v672
        %684 = vmatpush.msra.mxu0 %v671
        %685 = vmatpush.msra.mxu0 %v670
        %686 = vmatpush.msra.mxu0 %v669
        %687 = vmatpush.msra.mxu0 %v668
        %688 = vmatpush.msra.mxu0 %v667
        %689 = vmatpush.msra.mxu0 %v666
        %690 = vmatpush.msra.mxu0 %v665
        %691 = vmatpush.msra.mxu0 %v664
        %692 = vmatpush.msra.mxu0 %v663
        %693 = vmatpush.msra.mxu0 %v662
        %694 = vmatpush.msra.mxu0 %v661
        %695 = vmatpush.msra.mxu0 %v660
        %696 = vmatmul.f32.gmra.mxu0 %v658
        %v697 = vpop.f32.mrf.mxu0
        %v698 = vadd.f32 %v678, %v697
        %699 = vmatmul.f32.gmra.mxu0 %v659
        %v700 = vpop.f32.mrf.mxu0
        %v701 = vadd.f32 %v678, %v700
        %702 = vdwg.mxu0
        %v703 = vld [vmem:[%s480] sm:$0xff]
        %v704 = vld [vmem:[%s480 + $0x8] sm:$0xff]
        %v705 = vld [vmem:[%s480 + $0x10] sm:$0xff]
        %v706 = vld [vmem:[%s480 + $0x18] sm:$0xff]
        %v707 = vld [vmem:[%s480 + $0x20] sm:$0xff]
        %v708 = vld [vmem:[%s480 + $0x28] sm:$0xff]
        %v709 = vld [vmem:[%s480 + $0x30] sm:$0xff]
        %v710 = vld [vmem:[%s480 + $0x38] sm:$0xff]
        %v711 = vld [vmem:[%s480 + $0x40] sm:$0xff]
        %v712 = vld [vmem:[%s480 + $0x48] sm:$0xff]
        %v713 = vld [vmem:[%s480 + $0x50] sm:$0xff]
        %v714 = vld [vmem:[%s480 + $0x58] sm:$0xff]
        %v715 = vld [vmem:[%s480 + $0x60] sm:$0xff]
        %v716 = vld [vmem:[%s480 + $0x68] sm:$0xff]
        %v717 = vld [vmem:[%s480 + $0x70] sm:$0xff]
        %v718 = vld [vmem:[%s480 + $0x78] sm:$0xff]
        %v719 = vadd.f32 %v703, %v698
        %v720 = vadd.f32 %v704, %v701
        %v721 = vadd.f32 %v705, %v698
        %v722 = vadd.f32 %v706, %v701
        %v723 = vadd.f32 %v707, %v698
        %v724 = vadd.f32 %v708, %v701
        %v725 = vadd.f32 %v709, %v698
        %v726 = vadd.f32 %v710, %v701
        %v727 = vadd.f32 %v711, %v698
        %v728 = vadd.f32 %v712, %v701
        %v729 = vadd.f32 %v713, %v698
        %v730 = vadd.f32 %v714, %v701
        %v731 = vadd.f32 %v715, %v698
        %v732 = vadd.f32 %v716, %v701
        %v733 = vadd.f32 %v717, %v698
        %v734 = vadd.f32 %v718, %v701
        %735 = vst [vmem:[#allocation2 + $0x2] sm:$0xff] %v719
        %736 = vst [vmem:[#allocation2 + $0xa] sm:$0xff] %v720
        %737 = vst [vmem:[#allocation2 + $0x1a] sm:$0xff] %v721
        %738 = vst [vmem:[#allocation2 + $0x22] sm:$0xff] %v722
        %739 = vst [vmem:[#allocation2 + $0x32] sm:$0xff] %v723
        %740 = vst [vmem:[#allocation2 + $0x3a] sm:$0xff] %v724
        %741 = vst [vmem:[#allocation2 + $0x4a] sm:$0xff] %v725
        %742 = vst [vmem:[#allocation2 + $0x52] sm:$0xff] %v726
        %743 = vst [vmem:[#allocation2 + $0x62] sm:$0xff] %v727
        %744 = vst [vmem:[#allocation2 + $0x6a] sm:$0xff] %v728
        %745 = vst [vmem:[#allocation2 + $0x7a] sm:$0xff] %v729
        %746 = vst [vmem:[#allocation2 + $0x82] sm:$0xff] %v730
        %747 = vst [vmem:[#allocation2 + $0x92] sm:$0xff] %v731
        %748 = vst [vmem:[#allocation2 + $0x9a] sm:$0xff] %v732
        %749 = vst [vmem:[#allocation2 + $0xaa] sm:$0xff] %v733
        %750 = vst [vmem:[#allocation2 + $0xb2] sm:$0xff] %v734
        %v751 = vld [vmem:[#allocation2] sm:$0xff]
        %v752 = vld [vmem:[#allocation2 + $0x8] sm:$0xff]
        %v753 = vld [vmem:[#allocation2 + $0x18] sm:$0xff]
        %v754 = vld [vmem:[#allocation2 + $0x20] sm:$0xff]
        %v755 = vld [vmem:[#allocation2 + $0x30] sm:$0xff]
        %v756 = vld [vmem:[#allocation2 + $0x38] sm:$0xff]
        %v757 = vld [vmem:[#allocation2 + $0x48] sm:$0xff]
        %v758 = vld [vmem:[#allocation2 + $0x50] sm:$0xff]
        %v759 = vld [vmem:[#allocation2 + $0x60] sm:$0xff]
        %v760 = vld [vmem:[#allocation2 + $0x68] sm:$0xff]
        %v761 = vld [vmem:[#allocation2 + $0x78] sm:$0xff]
        %v762 = vld [vmem:[#allocation2 + $0x80] sm:$0xff]
        %v763 = vld [vmem:[#allocation2 + $0x90] sm:$0xff]
        %v764 = vld [vmem:[#allocation2 + $0x98] sm:$0xff]
        %v765 = vld [vmem:[#allocation2 + $0xa8] sm:$0xff]
        %v766 = vld [vmem:[#allocation2 + $0xb0] sm:$0xff]
        %v767 = vld [vmem:[#allocation11] sm:$0xff]
        %v768 = vld [vmem:[#allocation11 + $0x8] sm:$0xff]
        %v769 = vld [vmem:[#allocation11 + $0x10] sm:$0xff]
        %v770 = vld [vmem:[#allocation11 + $0x18] sm:$0xff]
        %v771 = vld [vmem:[#allocation11 + $0x20] sm:$0xff]
        %v772 = vld [vmem:[#allocation11 + $0x28] sm:$0xff]
        %v773 = vld [vmem:[#allocation11 + $0x30] sm:$0xff]
        %v774 = vld [vmem:[#allocation11 + $0x38] sm:$0xff]
        %v775 = vld [vmem:[#allocation11 + $0x40] sm:$0xff]
        %v776 = vld [vmem:[#allocation11 + $0x48] sm:$0xff]
        %v777 = vld [vmem:[#allocation11 + $0x50] sm:$0xff]
        %v778 = vld [vmem:[#allocation11 + $0x58] sm:$0xff]
        %v779 = vld [vmem:[#allocation11 + $0x60] sm:$0xff]
        %v780 = vld [vmem:[#allocation11 + $0x68] sm:$0xff]
        %v781 = vld [vmem:[#allocation11 + $0x70] sm:$0xff]
        %v782 = vld [vmem:[#allocation11 + $0x78] sm:$0xff]
        %v783 = vld [vmem:[#allocation2 + $0x1] sm:$0xff]
        %v784 = vld [vmem:[#allocation2 + $0x9] sm:$0xff]
        %v785 = vld [vmem:[#allocation2 + $0x19] sm:$0xff]
        %v786 = vld [vmem:[#allocation2 + $0x21] sm:$0xff]
        %v787 = vld [vmem:[#allocation2 + $0x31] sm:$0xff]
        %v788 = vld [vmem:[#allocation2 + $0x39] sm:$0xff]
        %v789 = vld [vmem:[#allocation2 + $0x49] sm:$0xff]
        %v790 = vld [vmem:[#allocation2 + $0x51] sm:$0xff]
        %v791 = vld [vmem:[#allocation2 + $0x61] sm:$0xff]
        %v792 = vld [vmem:[#allocation2 + $0x69] sm:$0xff]
        %v793 = vld [vmem:[#allocation2 + $0x79] sm:$0xff]
        %v794 = vld [vmem:[#allocation2 + $0x81] sm:$0xff]
        %v795 = vld [vmem:[#allocation2 + $0x91] sm:$0xff]
        %v796 = vld [vmem:[#allocation2 + $0x99] sm:$0xff]
        %v797 = vld [vmem:[#allocation2 + $0xa9] sm:$0xff]
        %v798 = vld [vmem:[#allocation2 + $0xb1] sm:$0xff]
        %s799 = scalar_lea.vmem [#allocation11], 128
        %v800 = vld [vmem:[%s799] sm:$0xff]
        %v801 = vld [vmem:[%s799 + $0x8] sm:$0xff]
        %v802 = vld [vmem:[%s799 + $0x10] sm:$0xff]
        %v803 = vld [vmem:[%s799 + $0x18] sm:$0xff]
        %v804 = vld [vmem:[%s799 + $0x20] sm:$0xff]
        %v805 = vld [vmem:[%s799 + $0x28] sm:$0xff]
        %v806 = vld [vmem:[%s799 + $0x30] sm:$0xff]
        %v807 = vld [vmem:[%s799 + $0x38] sm:$0xff]
        %v808 = vld [vmem:[%s799 + $0x40] sm:$0xff]
        %v809 = vld [vmem:[%s799 + $0x48] sm:$0xff]
        %v810 = vld [vmem:[%s799 + $0x50] sm:$0xff]
        %v811 = vld [vmem:[%s799 + $0x58] sm:$0xff]
        %v812 = vld [vmem:[%s799 + $0x60] sm:$0xff]
        %v813 = vld [vmem:[%s799 + $0x68] sm:$0xff]
        %v814 = vld [vmem:[%s799 + $0x70] sm:$0xff]
        %v815 = vld [vmem:[%s799 + $0x78] sm:$0xff]
        %816 = vmatpush.msra.mxu0 %v815
        %817 = vmatpush.msra.mxu0 %v814
        %818 = vmatpush.msra.mxu0 %v813
        %819 = vmatpush.msra.mxu0 %v812
        %820 = vmatpush.msra.mxu0 %v811
        %821 = vmatpush.msra.mxu0 %v810
        %822 = vmatpush.msra.mxu0 %v809
        %823 = vmatpush.msra.mxu0 %v808
        %824 = vmatpush.msra.mxu0 %v807
        %825 = vmatpush.msra.mxu0 %v806
        %826 = vmatpush.msra.mxu0 %v805
        %827 = vmatpush.msra.mxu0 %v804
        %828 = vmatpush.msra.mxu0 %v803
        %829 = vmatpush.msra.mxu0 %v802
        %830 = vmatpush.msra.mxu0 %v801
        %831 = vmatpush.msra.mxu0 %v800
        %832 = vmatmul.f32.gmra.mxu0 %v783
        %v833 = vpop.f32.mrf.mxu0
        %v834 = vadd.f32 0.0, %v833
        %835 = vmatmul.f32.gmra.mxu0 %v784
        %v836 = vpop.f32.mrf.mxu0
        %v837 = vadd.f32 0.0, %v836
        %838 = vmatmul.f32.gmra.mxu0 %v785
        %v839 = vpop.f32.mrf.mxu0
        %v840 = vadd.f32 0.0, %v839
        %841 = vmatmul.f32.gmra.mxu0 %v786
        %v842 = vpop.f32.mrf.mxu0
        %v843 = vadd.f32 0.0, %v842
        %844 = vmatmul.f32.gmra.mxu0 %v787
        %v845 = vpop.f32.mrf.mxu0
        %v846 = vadd.f32 0.0, %v845
        %847 = vmatmul.f32.gmra.mxu0 %v788
        %v848 = vpop.f32.mrf.mxu0
        %v849 = vadd.f32 0.0, %v848
        %850 = vmatmul.f32.gmra.mxu0 %v789
        %v851 = vpop.f32.mrf.mxu0
        %v852 = vadd.f32 0.0, %v851
        %853 = vmatmul.f32.gmra.mxu0 %v790
        %v854 = vpop.f32.mrf.mxu0
        %v855 = vadd.f32 0.0, %v854
        %856 = vmatmul.f32.gmra.mxu0 %v791
        %v857 = vpop.f32.mrf.mxu0
        %v858 = vadd.f32 0.0, %v857
        %859 = vmatmul.f32.gmra.mxu0 %v792
        %v860 = vpop.f32.mrf.mxu0
        %v861 = vadd.f32 0.0, %v860
        %862 = vmatmul.f32.gmra.mxu0 %v793
        %v863 = vpop.f32.mrf.mxu0
        %v864 = vadd.f32 0.0, %v863
        %865 = vmatmul.f32.gmra.mxu0 %v794
        %v866 = vpop.f32.mrf.mxu0
        %v867 = vadd.f32 0.0, %v866
        %868 = vmatmul.f32.gmra.mxu0 %v795
        %v869 = vpop.f32.mrf.mxu0
        %v870 = vadd.f32 0.0, %v869
        %871 = vmatmul.f32.gmra.mxu0 %v796
        %v872 = vpop.f32.mrf.mxu0
        %v873 = vadd.f32 0.0, %v872
        %874 = vmatmul.f32.gmra.mxu0 %v797
        %v875 = vpop.f32.mrf.mxu0
        %v876 = vadd.f32 0.0, %v875
        %877 = vmatmul.f32.gmra.mxu0 %v798
        %v878 = vpop.f32.mrf.mxu0
        %v879 = vadd.f32 0.0, %v878
        %880 = vdwg.mxu0
        %881 = vmatpush.msra.mxu0 %v782
        %882 = vmatpush.msra.mxu0 %v781
        %883 = vmatpush.msra.mxu0 %v780
        %884 = vmatpush.msra.mxu0 %v779
        %885 = vmatpush.msra.mxu0 %v778
        %886 = vmatpush.msra.mxu0 %v777
        %887 = vmatpush.msra.mxu0 %v776
        %888 = vmatpush.msra.mxu0 %v775
        %889 = vmatpush.msra.mxu0 %v774
        %890 = vmatpush.msra.mxu0 %v773
        %891 = vmatpush.msra.mxu0 %v772
        %892 = vmatpush.msra.mxu0 %v771
        %893 = vmatpush.msra.mxu0 %v770
        %894 = vmatpush.msra.mxu0 %v769
        %895 = vmatpush.msra.mxu0 %v768
        %896 = vmatpush.msra.mxu0 %v767
        %897 = vmatmul.f32.gmra.mxu0 %v751
        %v898 = vpop.f32.mrf.mxu0
        %v899 = vadd.f32 %v834, %v898
        %900 = vmatmul.f32.gmra.mxu0 %v752
        %v901 = vpop.f32.mrf.mxu0
        %v902 = vadd.f32 %v837, %v901
        %903 = vmatmul.f32.gmra.mxu0 %v753
        %v904 = vpop.f32.mrf.mxu0
        %v905 = vadd.f32 %v840, %v904
        %906 = vmatmul.f32.gmra.mxu0 %v754
        %v907 = vpop.f32.mrf.mxu0
        %v908 = vadd.f32 %v843, %v907
        %909 = vmatmul.f32.gmra.mxu0 %v755
        %v910 = vpop.f32.mrf.mxu0
        %v911 = vadd.f32 %v846, %v910
        %912 = vmatmul.f32.gmra.mxu0 %v756
        %v913 = vpop.f32.mrf.mxu0
        %v914 = vadd.f32 %v849, %v913
        %915 = vmatmul.f32.gmra.mxu0 %v757
        %v916 = vpop.f32.mrf.mxu0
        %v917 = vadd.f32 %v852, %v916
        %918 = vmatmul.f32.gmra.mxu0 %v758
        %v919 = vpop.f32.mrf.mxu0
        %v920 = vadd.f32 %v855, %v919
        %921 = vmatmul.f32.gmra.mxu0 %v759
        %v922 = vpop.f32.mrf.mxu0
        %v923 = vadd.f32 %v858, %v922
        %924 = vmatmul.f32.gmra.mxu0 %v760
        %v925 = vpop.f32.mrf.mxu0
        %v926 = vadd.f32 %v861, %v925
        %927 = vmatmul.f32.gmra.mxu0 %v761
        %v928 = vpop.f32.mrf.mxu0
        %v929 = vadd.f32 %v864, %v928
        %930 = vmatmul.f32.gmra.mxu0 %v762
        %v931 = vpop.f32.mrf.mxu0
        %v932 = vadd.f32 %v867, %v931
        %933 = vmatmul.f32.gmra.mxu0 %v763
        %v934 = vpop.f32.mrf.mxu0
        %v935 = vadd.f32 %v870, %v934
        %936 = vmatmul.f32.gmra.mxu0 %v764
        %v937 = vpop.f32.mrf.mxu0
        %v938 = vadd.f32 %v873, %v937
        %939 = vmatmul.f32.gmra.mxu0 %v765
        %v940 = vpop.f32.mrf.mxu0
        %v941 = vadd.f32 %v876, %v940
        %942 = vmatmul.f32.gmra.mxu0 %v766
        %v943 = vpop.f32.mrf.mxu0
        %v944 = vadd.f32 %v879, %v943
        %945 = vdwg.mxu0
        %v946 = vld [vmem:[#allocation2 + $0x2] sm:$0xff]
        %v947 = vld [vmem:[#allocation2 + $0xa] sm:$0xff]
        %v948 = vld [vmem:[#allocation2 + $0x1a] sm:$0xff]
        %v949 = vld [vmem:[#allocation2 + $0x22] sm:$0xff]
        %v950 = vld [vmem:[#allocation2 + $0x32] sm:$0xff]
        %v951 = vld [vmem:[#allocation2 + $0x3a] sm:$0xff]
        %v952 = vld [vmem:[#allocation2 + $0x4a] sm:$0xff]
        %v953 = vld [vmem:[#allocation2 + $0x52] sm:$0xff]
        %v954 = vld [vmem:[#allocation2 + $0x62] sm:$0xff]
        %v955 = vld [vmem:[#allocation2 + $0x6a] sm:$0xff]
        %v956 = vld [vmem:[#allocation2 + $0x7a] sm:$0xff]
        %v957 = vld [vmem:[#allocation2 + $0x82] sm:$0xff]
        %v958 = vld [vmem:[#allocation2 + $0x92] sm:$0xff]
        %v959 = vld [vmem:[#allocation2 + $0x9a] sm:$0xff]
        %v960 = vld [vmem:[#allocation2 + $0xaa] sm:$0xff]
        %v961 = vld [vmem:[#allocation2 + $0xb2] sm:$0xff]
        %s962 = scalar_lea.vmem [#allocation11], 256
        %v963 = vld [vmem:[%s962] sm:$0xff]
        %v964 = vld [vmem:[%s962 + $0x8] sm:$0xff]
        %v965 = vld [vmem:[%s962 + $0x10] sm:$0xff]
        %v966 = vld [vmem:[%s962 + $0x18] sm:$0xff]
        %v967 = vld [vmem:[%s962 + $0x20] sm:$0xff]
        %v968 = vld [vmem:[%s962 + $0x28] sm:$0xff]
        %v969 = vld [vmem:[%s962 + $0x30] sm:$0xff]
        %v970 = vld [vmem:[%s962 + $0x38] sm:$0xff]
        %v971 = vld [vmem:[%s962 + $0x40] sm:$0xff]
        %v972 = vld [vmem:[%s962 + $0x48] sm:$0xff]
        %v973 = vld [vmem:[%s962 + $0x50] sm:$0xff]
        %v974 = vld [vmem:[%s962 + $0x58] sm:$0xff]
        %v975 = vld [vmem:[%s962 + $0x60] sm:$0xff]
        %v976 = vld [vmem:[%s962 + $0x68] sm:$0xff]
        %v977 = vld [vmem:[%s962 + $0x70] sm:$0xff]
        %v978 = vld [vmem:[%s962 + $0x78] sm:$0xff]
        %979 = vmatpush.msra.mxu0 %v978
        %980 = vmatpush.msra.mxu0 %v977
        %981 = vmatpush.msra.mxu0 %v976
        %982 = vmatpush.msra.mxu0 %v975
        %983 = vmatpush.msra.mxu0 %v974
        %984 = vmatpush.msra.mxu0 %v973
        %985 = vmatpush.msra.mxu0 %v972
        %986 = vmatpush.msra.mxu0 %v971
        %987 = vmatpush.msra.mxu0 %v970
        %988 = vmatpush.msra.mxu0 %v969
        %989 = vmatpush.msra.mxu0 %v968
        %990 = vmatpush.msra.mxu0 %v967
        %991 = vmatpush.msra.mxu0 %v966
        %992 = vmatpush.msra.mxu0 %v965
        %993 = vmatpush.msra.mxu0 %v964
        %994 = vmatpush.msra.mxu0 %v963
        %995 = vmatmul.f32.gmra.mxu0 %v946
        %v996 = vpop.f32.mrf.mxu0
        %v997 = vadd.f32 0.0, %v996
        %998 = vmatmul.f32.gmra.mxu0 %v947
        %v999 = vpop.f32.mrf.mxu0
        %v1000 = vadd.f32 0.0, %v999
        %1001 = vmatmul.f32.gmra.mxu0 %v948
        %v1002 = vpop.f32.mrf.mxu0
        %v1003 = vadd.f32 0.0, %v1002
        %1004 = vmatmul.f32.gmra.mxu0 %v949
        %v1005 = vpop.f32.mrf.mxu0
        %v1006 = vadd.f32 0.0, %v1005
        %1007 = vmatmul.f32.gmra.mxu0 %v950
        %v1008 = vpop.f32.mrf.mxu0
        %v1009 = vadd.f32 0.0, %v1008
        %1010 = vmatmul.f32.gmra.mxu0 %v951
        %v1011 = vpop.f32.mrf.mxu0
        %v1012 = vadd.f32 0.0, %v1011
        %1013 = vmatmul.f32.gmra.mxu0 %v952
        %v1014 = vpop.f32.mrf.mxu0
        %v1015 = vadd.f32 0.0, %v1014
        %1016 = vmatmul.f32.gmra.mxu0 %v953
        %v1017 = vpop.f32.mrf.mxu0
        %v1018 = vadd.f32 0.0, %v1017
        %1019 = vmatmul.f32.gmra.mxu0 %v954
        %v1020 = vpop.f32.mrf.mxu0
        %v1021 = vadd.f32 0.0, %v1020
        %1022 = vmatmul.f32.gmra.mxu0 %v955
        %v1023 = vpop.f32.mrf.mxu0
        %v1024 = vadd.f32 0.0, %v1023
        %1025 = vmatmul.f32.gmra.mxu0 %v956
        %v1026 = vpop.f32.mrf.mxu0
        %v1027 = vadd.f32 0.0, %v1026
        %1028 = vmatmul.f32.gmra.mxu0 %v957
        %v1029 = vpop.f32.mrf.mxu0
        %v1030 = vadd.f32 0.0, %v1029
        %1031 = vmatmul.f32.gmra.mxu0 %v958
        %v1032 = vpop.f32.mrf.mxu0
        %v1033 = vadd.f32 0.0, %v1032
        %1034 = vmatmul.f32.gmra.mxu0 %v959
        %v1035 = vpop.f32.mrf.mxu0
        %v1036 = vadd.f32 0.0, %v1035
        %1037 = vmatmul.f32.gmra.mxu0 %v960
        %v1038 = vpop.f32.mrf.mxu0
        %v1039 = vadd.f32 0.0, %v1038
        %1040 = vmatmul.f32.gmra.mxu0 %v961
        %v1041 = vpop.f32.mrf.mxu0
        %v1042 = vadd.f32 0.0, %v1041
        %1043 = vdwg.mxu0
        %v1044 = vadd.f32 %v899, %v997
        %v1045 = vadd.f32 %v902, %v1000
        %v1046 = vadd.f32 %v905, %v1003
        %v1047 = vadd.f32 %v908, %v1006
        %v1048 = vadd.f32 %v911, %v1009
        %v1049 = vadd.f32 %v914, %v1012
        %v1050 = vadd.f32 %v917, %v1015
        %v1051 = vadd.f32 %v920, %v1018
        %v1052 = vadd.f32 %v923, %v1021
        %v1053 = vadd.f32 %v926, %v1024
        %v1054 = vadd.f32 %v929, %v1027
        %v1055 = vadd.f32 %v932, %v1030
        %v1056 = vadd.f32 %v935, %v1033
        %v1057 = vadd.f32 %v938, %v1036
        %v1058 = vadd.f32 %v941, %v1039
        %v1059 = vadd.f32 %v944, %v1042
        %v1060 = vld [vmem:[#allocation2 + $0x3] sm:$0xff]
        %v1061 = vld [vmem:[#allocation2 + $0xb] sm:$0xff]
        %v1062 = vld [vmem:[#allocation2 + $0x1b] sm:$0xff]
        %v1063 = vld [vmem:[#allocation2 + $0x23] sm:$0xff]
        %v1064 = vld [vmem:[#allocation2 + $0x33] sm:$0xff]
        %v1065 = vld [vmem:[#allocation2 + $0x3b] sm:$0xff]
        %v1066 = vld [vmem:[#allocation2 + $0x4b] sm:$0xff]
        %v1067 = vld [vmem:[#allocation2 + $0x53] sm:$0xff]
        %v1068 = vld [vmem:[#allocation2 + $0x63] sm:$0xff]
        %v1069 = vld [vmem:[#allocation2 + $0x6b] sm:$0xff]
        %v1070 = vld [vmem:[#allocation2 + $0x7b] sm:$0xff]
        %v1071 = vld [vmem:[#allocation2 + $0x83] sm:$0xff]
        %v1072 = vld [vmem:[#allocation2 + $0x93] sm:$0xff]
        %v1073 = vld [vmem:[#allocation2 + $0x9b] sm:$0xff]
        %v1074 = vld [vmem:[#allocation2 + $0xab] sm:$0xff]
        %v1075 = vld [vmem:[#allocation2 + $0xb3] sm:$0xff]
        %s1076 = scalar_lea.vmem [#allocation11], 384
        %v1077 = vld [vmem:[%s1076] sm:$0xff]
        %v1078 = vld [vmem:[%s1076 + $0x8] sm:$0xff]
        %v1079 = vld [vmem:[%s1076 + $0x10] sm:$0xff]
        %v1080 = vld [vmem:[%s1076 + $0x18] sm:$0xff]
        %v1081 = vld [vmem:[%s1076 + $0x20] sm:$0xff]
        %v1082 = vld [vmem:[%s1076 + $0x28] sm:$0xff]
        %v1083 = vld [vmem:[%s1076 + $0x30] sm:$0xff]
        %v1084 = vld [vmem:[%s1076 + $0x38] sm:$0xff]
        %v1085 = vld [vmem:[%s1076 + $0x40] sm:$0xff]
        %v1086 = vld [vmem:[%s1076 + $0x48] sm:$0xff]
        %v1087 = vld [vmem:[%s1076 + $0x50] sm:$0xff]
        %v1088 = vld [vmem:[%s1076 + $0x58] sm:$0xff]
        %v1089 = vld [vmem:[%s1076 + $0x60] sm:$0xff]
        %v1090 = vld [vmem:[%s1076 + $0x68] sm:$0xff]
        %v1091 = vld [vmem:[%s1076 + $0x70] sm:$0xff]
        %v1092 = vld [vmem:[%s1076 + $0x78] sm:$0xff]
        %1093 = vmatpush.msra.mxu0 %v1092
        %1094 = vmatpush.msra.mxu0 %v1091
        %1095 = vmatpush.msra.mxu0 %v1090
        %1096 = vmatpush.msra.mxu0 %v1089
        %1097 = vmatpush.msra.mxu0 %v1088
        %1098 = vmatpush.msra.mxu0 %v1087
        %1099 = vmatpush.msra.mxu0 %v1086
        %1100 = vmatpush.msra.mxu0 %v1085
        %1101 = vmatpush.msra.mxu0 %v1084
        %1102 = vmatpush.msra.mxu0 %v1083
        %1103 = vmatpush.msra.mxu0 %v1082
        %1104 = vmatpush.msra.mxu0 %v1081
        %1105 = vmatpush.msra.mxu0 %v1080
        %1106 = vmatpush.msra.mxu0 %v1079
        %1107 = vmatpush.msra.mxu0 %v1078
        %1108 = vmatpush.msra.mxu0 %v1077
        %1109 = vmatmul.f32.gmra.mxu0 %v1060
        %v1110 = vpop.f32.mrf.mxu0
        %v1111 = vadd.f32 0.0, %v1110
        %1112 = vmatmul.f32.gmra.mxu0 %v1061
        %v1113 = vpop.f32.mrf.mxu0
        %v1114 = vadd.f32 0.0, %v1113
        %1115 = vmatmul.f32.gmra.mxu0 %v1062
        %v1116 = vpop.f32.mrf.mxu0
        %v1117 = vadd.f32 0.0, %v1116
        %1118 = vmatmul.f32.gmra.mxu0 %v1063
        %v1119 = vpop.f32.mrf.mxu0
        %v1120 = vadd.f32 0.0, %v1119
        %1121 = vmatmul.f32.gmra.mxu0 %v1064
        %v1122 = vpop.f32.mrf.mxu0
        %v1123 = vadd.f32 0.0, %v1122
        %1124 = vmatmul.f32.gmra.mxu0 %v1065
        %v1125 = vpop.f32.mrf.mxu0
        %v1126 = vadd.f32 0.0, %v1125
        %1127 = vmatmul.f32.gmra.mxu0 %v1066
        %v1128 = vpop.f32.mrf.mxu0
        %v1129 = vadd.f32 0.0, %v1128
        %1130 = vmatmul.f32.gmra.mxu0 %v1067
        %v1131 = vpop.f32.mrf.mxu0
        %v1132 = vadd.f32 0.0, %v1131
        %1133 = vmatmul.f32.gmra.mxu0 %v1068
        %v1134 = vpop.f32.mrf.mxu0
        %v1135 = vadd.f32 0.0, %v1134
        %1136 = vmatmul.f32.gmra.mxu0 %v1069
        %v1137 = vpop.f32.mrf.mxu0
        %v1138 = vadd.f32 0.0, %v1137
        %1139 = vmatmul.f32.gmra.mxu0 %v1070
        %v1140 = vpop.f32.mrf.mxu0
        %v1141 = vadd.f32 0.0, %v1140
        %1142 = vmatmul.f32.gmra.mxu0 %v1071
        %v1143 = vpop.f32.mrf.mxu0
        %v1144 = vadd.f32 0.0, %v1143
        %1145 = vmatmul.f32.gmra.mxu0 %v1072
        %v1146 = vpop.f32.mrf.mxu0
        %v1147 = vadd.f32 0.0, %v1146
        %1148 = vmatmul.f32.gmra.mxu0 %v1073
        %v1149 = vpop.f32.mrf.mxu0
        %v1150 = vadd.f32 0.0, %v1149
        %1151 = vmatmul.f32.gmra.mxu0 %v1074
        %v1152 = vpop.f32.mrf.mxu0
        %v1153 = vadd.f32 0.0, %v1152
        %1154 = vmatmul.f32.gmra.mxu0 %v1075
        %v1155 = vpop.f32.mrf.mxu0
        %v1156 = vadd.f32 0.0, %v1155
        %1157 = vdwg.mxu0
        %v1158 = vadd.f32 %v1044, %v1111
        %v1159 = vadd.f32 %v1045, %v1114
        %v1160 = vadd.f32 %v1046, %v1117
        %v1161 = vadd.f32 %v1047, %v1120
        %v1162 = vadd.f32 %v1048, %v1123
        %v1163 = vadd.f32 %v1049, %v1126
        %v1164 = vadd.f32 %v1050, %v1129
        %v1165 = vadd.f32 %v1051, %v1132
        %v1166 = vadd.f32 %v1052, %v1135
        %v1167 = vadd.f32 %v1053, %v1138
        %v1168 = vadd.f32 %v1054, %v1141
        %v1169 = vadd.f32 %v1055, %v1144
        %v1170 = vadd.f32 %v1056, %v1147
        %v1171 = vadd.f32 %v1057, %v1150
        %v1172 = vadd.f32 %v1058, %v1153
        %v1173 = vadd.f32 %v1059, %v1156
        %v1174 = vld [vmem:[#allocation2 + $0x4] sm:$0xff]
        %v1175 = vld [vmem:[#allocation2 + $0xc] sm:$0xff]
        %v1176 = vld [vmem:[#allocation2 + $0x1c] sm:$0xff]
        %v1177 = vld [vmem:[#allocation2 + $0x24] sm:$0xff]
        %v1178 = vld [vmem:[#allocation2 + $0x34] sm:$0xff]
        %v1179 = vld [vmem:[#allocation2 + $0x3c] sm:$0xff]
        %v1180 = vld [vmem:[#allocation2 + $0x4c] sm:$0xff]
        %v1181 = vld [vmem:[#allocation2 + $0x54] sm:$0xff]
        %v1182 = vld [vmem:[#allocation2 + $0x64] sm:$0xff]
        %v1183 = vld [vmem:[#allocation2 + $0x6c] sm:$0xff]
        %v1184 = vld [vmem:[#allocation2 + $0x7c] sm:$0xff]
        %v1185 = vld [vmem:[#allocation2 + $0x84] sm:$0xff]
        %v1186 = vld [vmem:[#allocation2 + $0x94] sm:$0xff]
        %v1187 = vld [vmem:[#allocation2 + $0x9c] sm:$0xff]
        %v1188 = vld [vmem:[#allocation2 + $0xac] sm:$0xff]
        %v1189 = vld [vmem:[#allocation2 + $0xb4] sm:$0xff]
        %s1190 = scalar_lea.vmem [#allocation11], 512
        %v1191 = vld [vmem:[%s1190] sm:$0xff]
        %v1192 = vld [vmem:[%s1190 + $0x8] sm:$0xff]
        %v1193 = vld [vmem:[%s1190 + $0x10] sm:$0xff]
        %v1194 = vld [vmem:[%s1190 + $0x18] sm:$0xff]
        %v1195 = vld [vmem:[%s1190 + $0x20] sm:$0xff]
        %v1196 = vld [vmem:[%s1190 + $0x28] sm:$0xff]
        %v1197 = vld [vmem:[%s1190 + $0x30] sm:$0xff]
        %v1198 = vld [vmem:[%s1190 + $0x38] sm:$0xff]
        %v1199 = vld [vmem:[%s1190 + $0x40] sm:$0xff]
        %v1200 = vld [vmem:[%s1190 + $0x48] sm:$0xff]
        %v1201 = vld [vmem:[%s1190 + $0x50] sm:$0xff]
        %v1202 = vld [vmem:[%s1190 + $0x58] sm:$0xff]
        %v1203 = vld [vmem:[%s1190 + $0x60] sm:$0xff]
        %v1204 = vld [vmem:[%s1190 + $0x68] sm:$0xff]
        %v1205 = vld [vmem:[%s1190 + $0x70] sm:$0xff]
        %v1206 = vld [vmem:[%s1190 + $0x78] sm:$0xff]
        %1207 = vmatpush.msra.mxu0 %v1206
        %1208 = vmatpush.msra.mxu0 %v1205
        %1209 = vmatpush.msra.mxu0 %v1204
        %1210 = vmatpush.msra.mxu0 %v1203
        %1211 = vmatpush.msra.mxu0 %v1202
        %1212 = vmatpush.msra.mxu0 %v1201
        %1213 = vmatpush.msra.mxu0 %v1200
        %1214 = vmatpush.msra.mxu0 %v1199
        %1215 = vmatpush.msra.mxu0 %v1198
        %1216 = vmatpush.msra.mxu0 %v1197
        %1217 = vmatpush.msra.mxu0 %v1196
        %1218 = vmatpush.msra.mxu0 %v1195
        %1219 = vmatpush.msra.mxu0 %v1194
        %1220 = vmatpush.msra.mxu0 %v1193
        %1221 = vmatpush.msra.mxu0 %v1192
        %1222 = vmatpush.msra.mxu0 %v1191
        %1223 = vmatmul.f32.gmra.mxu0 %v1174
        %v1224 = vpop.f32.mrf.mxu0
        %v1225 = vadd.f32 0.0, %v1224
        %1226 = vmatmul.f32.gmra.mxu0 %v1175
        %v1227 = vpop.f32.mrf.mxu0
        %v1228 = vadd.f32 0.0, %v1227
        %1229 = vmatmul.f32.gmra.mxu0 %v1176
        %v1230 = vpop.f32.mrf.mxu0
        %v1231 = vadd.f32 0.0, %v1230
        %1232 = vmatmul.f32.gmra.mxu0 %v1177
        %v1233 = vpop.f32.mrf.mxu0
        %v1234 = vadd.f32 0.0, %v1233
        %1235 = vmatmul.f32.gmra.mxu0 %v1178
        %v1236 = vpop.f32.mrf.mxu0
        %v1237 = vadd.f32 0.0, %v1236
        %1238 = vmatmul.f32.gmra.mxu0 %v1179
        %v1239 = vpop.f32.mrf.mxu0
        %v1240 = vadd.f32 0.0, %v1239
        %1241 = vmatmul.f32.gmra.mxu0 %v1180
        %v1242 = vpop.f32.mrf.mxu0
        %v1243 = vadd.f32 0.0, %v1242
        %1244 = vmatmul.f32.gmra.mxu0 %v1181
        %v1245 = vpop.f32.mrf.mxu0
        %v1246 = vadd.f32 0.0, %v1245
        %1247 = vmatmul.f32.gmra.mxu0 %v1182
        %v1248 = vpop.f32.mrf.mxu0
        %v1249 = vadd.f32 0.0, %v1248
        %1250 = vmatmul.f32.gmra.mxu0 %v1183
        %v1251 = vpop.f32.mrf.mxu0
        %v1252 = vadd.f32 0.0, %v1251
        %1253 = vmatmul.f32.gmra.mxu0 %v1184
        %v1254 = vpop.f32.mrf.mxu0
        %v1255 = vadd.f32 0.0, %v1254
        %1256 = vmatmul.f32.gmra.mxu0 %v1185
        %v1257 = vpop.f32.mrf.mxu0
        %v1258 = vadd.f32 0.0, %v1257
        %1259 = vmatmul.f32.gmra.mxu0 %v1186
        %v1260 = vpop.f32.mrf.mxu0
        %v1261 = vadd.f32 0.0, %v1260
        %1262 = vmatmul.f32.gmra.mxu0 %v1187
        %v1263 = vpop.f32.mrf.mxu0
        %v1264 = vadd.f32 0.0, %v1263
        %1265 = vmatmul.f32.gmra.mxu0 %v1188
        %v1266 = vpop.f32.mrf.mxu0
        %v1267 = vadd.f32 0.0, %v1266
        %1268 = vmatmul.f32.gmra.mxu0 %v1189
        %v1269 = vpop.f32.mrf.mxu0
        %v1270 = vadd.f32 0.0, %v1269
        %1271 = vdwg.mxu0
        %v1272 = vadd.f32 %v1158, %v1225
        %v1273 = vadd.f32 %v1159, %v1228
        %v1274 = vadd.f32 %v1160, %v1231
        %v1275 = vadd.f32 %v1161, %v1234
        %v1276 = vadd.f32 %v1162, %v1237
        %v1277 = vadd.f32 %v1163, %v1240
        %v1278 = vadd.f32 %v1164, %v1243
        %v1279 = vadd.f32 %v1165, %v1246
        %v1280 = vadd.f32 %v1166, %v1249
        %v1281 = vadd.f32 %v1167, %v1252
        %v1282 = vadd.f32 %v1168, %v1255
        %v1283 = vadd.f32 %v1169, %v1258
        %v1284 = vadd.f32 %v1170, %v1261
        %v1285 = vadd.f32 %v1171, %v1264
        %v1286 = vadd.f32 %v1172, %v1267
        %v1287 = vadd.f32 %v1173, %v1270
        %v1288 = vld [vmem:[%s7] sm:$0x1]
        %v1290 = vperm.slane %v1288, 0
        %v1292 = vadd.f32 %v1272, %v1290
        %v1293 = vadd.f32 %v1273, %v1290
        %v1294 = vadd.f32 %v1274, %v1290
        %v1295 = vadd.f32 %v1275, %v1290
        %v1296 = vadd.f32 %v1276, %v1290
        %v1297 = vadd.f32 %v1277, %v1290
        %v1298 = vadd.f32 %v1278, %v1290
        %v1299 = vadd.f32 %v1279, %v1290
        %v1300 = vadd.f32 %v1280, %v1290
        %v1301 = vadd.f32 %v1281, %v1290
        %v1302 = vadd.f32 %v1282, %v1290
        %v1303 = vadd.f32 %v1283, %v1290
        %v1304 = vadd.f32 %v1284, %v1290
        %v1305 = vadd.f32 %v1285, %v1290
        %v1306 = vadd.f32 %v1286, %v1290
        %v1307 = vadd.f32 %v1287, %v1290
        %vm1308 = vcmp.ge.f32.partialorder %v1292, 0.0
        %vm1309 = vcmp.ge.f32.partialorder %v1293, 0.0
        %vm1310 = vcmp.ge.f32.partialorder %v1294, 0.0
        %vm1311 = vcmp.ge.f32.partialorder %v1295, 0.0
        %vm1312 = vcmp.ge.f32.partialorder %v1296, 0.0
        %vm1313 = vcmp.ge.f32.partialorder %v1297, 0.0
        %vm1314 = vcmp.ge.f32.partialorder %v1298, 0.0
        %vm1315 = vcmp.ge.f32.partialorder %v1299, 0.0
        %vm1316 = vcmp.ge.f32.partialorder %v1300, 0.0
        %vm1317 = vcmp.ge.f32.partialorder %v1301, 0.0
        %vm1318 = vcmp.ge.f32.partialorder %v1302, 0.0
        %vm1319 = vcmp.ge.f32.partialorder %v1303, 0.0
        %vm1320 = vcmp.ge.f32.partialorder %v1304, 0.0
        %vm1321 = vcmp.ge.f32.partialorder %v1305, 0.0
        %vm1322 = vcmp.ge.f32.partialorder %v1306, 0.0
        %vm1323 = vcmp.ge.f32.partialorder %v1307, 0.0
        %v1324 = vmul.f32 %v1292, 0.01
        %v1325 = vmul.f32 %v1293, 0.01
        %v1326 = vmul.f32 %v1294, 0.01
        %v1327 = vmul.f32 %v1295, 0.01
        %v1328 = vmul.f32 %v1296, 0.01
        %v1329 = vmul.f32 %v1297, 0.01
        %v1330 = vmul.f32 %v1298, 0.01
        %v1331 = vmul.f32 %v1299, 0.01
        %v1332 = vmul.f32 %v1300, 0.01
        %v1333 = vmul.f32 %v1301, 0.01
        %v1334 = vmul.f32 %v1302, 0.01
        %v1335 = vmul.f32 %v1303, 0.01
        %v1336 = vmul.f32 %v1304, 0.01
        %v1337 = vmul.f32 %v1305, 0.01
        %v1338 = vmul.f32 %v1306, 0.01
        %v1339 = vmul.f32 %v1307, 0.01
        %v1340 = vsel %vm1308, %v1292, %v1324
        %v1341 = vsel %vm1309, %v1293, %v1325
        %v1342 = vsel %vm1310, %v1294, %v1326
        %v1343 = vsel %vm1311, %v1295, %v1327
        %v1344 = vsel %vm1312, %v1296, %v1328
        %v1345 = vsel %vm1313, %v1297, %v1329
        %v1346 = vsel %vm1314, %v1298, %v1330
        %v1347 = vsel %vm1315, %v1299, %v1331
        %v1348 = vsel %vm1316, %v1300, %v1332
        %v1349 = vsel %vm1317, %v1301, %v1333
        %v1350 = vsel %vm1318, %v1302, %v1334
        %v1351 = vsel %vm1319, %v1303, %v1335
        %v1352 = vsel %vm1320, %v1304, %v1336
        %v1353 = vsel %vm1321, %v1305, %v1337
        %v1354 = vsel %vm1322, %v1306, %v1338
        %v1355 = vsel %vm1323, %v1307, %v1339
        %v1356 = vld [vmem:[#allocation12] sm:$0xff]
        %v1357 = vld [vmem:[#allocation12 + $0x8] sm:$0xff]
        %v1358 = vld [vmem:[#allocation12 + $0x10] sm:$0xff]
        %v1359 = vld [vmem:[#allocation12 + $0x18] sm:$0xff]
        %v1360 = vld [vmem:[#allocation12 + $0x20] sm:$0xff]
        %v1361 = vld [vmem:[#allocation12 + $0x28] sm:$0xff]
        %v1362 = vld [vmem:[#allocation12 + $0x30] sm:$0xff]
        %v1363 = vld [vmem:[#allocation12 + $0x38] sm:$0xff]
        %v1364 = vld [vmem:[#allocation12 + $0x40] sm:$0xff]
        %v1365 = vld [vmem:[#allocation12 + $0x48] sm:$0xff]
        %v1366 = vld [vmem:[#allocation12 + $0x50] sm:$0xff]
        %v1367 = vld [vmem:[#allocation12 + $0x58] sm:$0xff]
        %v1368 = vld [vmem:[#allocation12 + $0x60] sm:$0xff]
        %v1369 = vld [vmem:[#allocation12 + $0x68] sm:$0xff]
        %v1370 = vld [vmem:[#allocation12 + $0x70] sm:$0xff]
        %v1371 = vld [vmem:[#allocation12 + $0x78] sm:$0xff]
        %1372 = vmatpush.msra.mxu0 %v1371
        %1373 = vmatpush.msra.mxu0 %v1370
        %1374 = vmatpush.msra.mxu0 %v1369
        %1375 = vmatpush.msra.mxu0 %v1368
        %1376 = vmatpush.msra.mxu0 %v1367
        %1377 = vmatpush.msra.mxu0 %v1366
        %1378 = vmatpush.msra.mxu0 %v1365
        %1379 = vmatpush.msra.mxu0 %v1364
        %1380 = vmatpush.msra.mxu0 %v1363
        %1381 = vmatpush.msra.mxu0 %v1362
        %1382 = vmatpush.msra.mxu0 %v1361
        %1383 = vmatpush.msra.mxu0 %v1360
        %1384 = vmatpush.msra.mxu0 %v1359
        %1385 = vmatpush.msra.mxu0 %v1358
        %1386 = vmatpush.msra.mxu0 %v1357
        %1387 = vmatpush.msra.mxu0 %v1356
        %1388 = vmatmul.f32.gmra.mxu0 %v1340
        %v1389 = vpop.f32.mrf.mxu0
        %v1390 = vadd.f32 0.0, %v1389
        %1391 = vmatmul.f32.gmra.mxu0 %v1341
        %v1392 = vpop.f32.mrf.mxu0
        %v1393 = vadd.f32 0.0, %v1392
        %1394 = vmatmul.f32.gmra.mxu0 %v1342
        %v1395 = vpop.f32.mrf.mxu0
        %v1396 = vadd.f32 0.0, %v1395
        %1397 = vmatmul.f32.gmra.mxu0 %v1343
        %v1398 = vpop.f32.mrf.mxu0
        %v1399 = vadd.f32 0.0, %v1398
        %1400 = vmatmul.f32.gmra.mxu0 %v1344
        %v1401 = vpop.f32.mrf.mxu0
        %v1402 = vadd.f32 0.0, %v1401
        %1403 = vmatmul.f32.gmra.mxu0 %v1345
        %v1404 = vpop.f32.mrf.mxu0
        %v1405 = vadd.f32 0.0, %v1404
        %1406 = vmatmul.f32.gmra.mxu0 %v1346
        %v1407 = vpop.f32.mrf.mxu0
        %v1408 = vadd.f32 0.0, %v1407
        %1409 = vmatmul.f32.gmra.mxu0 %v1347
        %v1410 = vpop.f32.mrf.mxu0
        %v1411 = vadd.f32 0.0, %v1410
        %1412 = vmatmul.f32.gmra.mxu0 %v1348
        %v1413 = vpop.f32.mrf.mxu0
        %v1414 = vadd.f32 0.0, %v1413
        %1415 = vmatmul.f32.gmra.mxu0 %v1349
        %v1416 = vpop.f32.mrf.mxu0
        %v1417 = vadd.f32 0.0, %v1416
        %1418 = vmatmul.f32.gmra.mxu0 %v1350
        %v1419 = vpop.f32.mrf.mxu0
        %v1420 = vadd.f32 0.0, %v1419
        %1421 = vmatmul.f32.gmra.mxu0 %v1351
        %v1422 = vpop.f32.mrf.mxu0
        %v1423 = vadd.f32 0.0, %v1422
        %1424 = vmatmul.f32.gmra.mxu0 %v1352
        %v1425 = vpop.f32.mrf.mxu0
        %v1426 = vadd.f32 0.0, %v1425
        %1427 = vmatmul.f32.gmra.mxu0 %v1353
        %v1428 = vpop.f32.mrf.mxu0
        %v1429 = vadd.f32 0.0, %v1428
        %1430 = vmatmul.f32.gmra.mxu0 %v1354
        %v1431 = vpop.f32.mrf.mxu0
        %v1432 = vadd.f32 0.0, %v1431
        %1433 = vmatmul.f32.gmra.mxu0 %v1355
        %v1434 = vpop.f32.mrf.mxu0
        %v1435 = vadd.f32 0.0, %v1434
        %1436 = vdwg.mxu0
        %v1437 = vxor.u32 %v1390, 2147483648
        %v1438 = vxor.u32 %v1393, 2147483648
        %v1439 = vxor.u32 %v1396, 2147483648
        %v1440 = vxor.u32 %v1399, 2147483648
        %v1441 = vxor.u32 %v1402, 2147483648
        %v1442 = vxor.u32 %v1405, 2147483648
        %v1443 = vxor.u32 %v1408, 2147483648
        %v1444 = vxor.u32 %v1411, 2147483648
        %v1445 = vxor.u32 %v1414, 2147483648
        %v1446 = vxor.u32 %v1417, 2147483648
        %v1447 = vxor.u32 %v1420, 2147483648
        %v1448 = vxor.u32 %v1423, 2147483648
        %v1449 = vxor.u32 %v1426, 2147483648
        %v1450 = vxor.u32 %v1429, 2147483648
        %v1451 = vxor.u32 %v1432, 2147483648
        %v1452 = vxor.u32 %v1435, 2147483648
        %v1453 = vmul.f32 %v1437, 1.442695
        %v1454 = vpow.pop %v1453
        %v1455 = vmul.f32 %v1438, 1.442695
        %v1456 = vpow.pop %v1455
        %v1457 = vmul.f32 %v1439, 1.442695
        %v1458 = vpow.pop %v1457
        %v1459 = vmul.f32 %v1440, 1.442695
        %v1460 = vpow.pop %v1459
        %v1461 = vmul.f32 %v1441, 1.442695
        %v1462 = vpow.pop %v1461
        %v1463 = vmul.f32 %v1442, 1.442695
        %v1464 = vpow.pop %v1463
        %v1465 = vmul.f32 %v1443, 1.442695
        %v1466 = vpow.pop %v1465
        %v1467 = vmul.f32 %v1444, 1.442695
        %v1468 = vpow.pop %v1467
        %v1469 = vmul.f32 %v1445, 1.442695
        %v1470 = vpow.pop %v1469
        %v1471 = vmul.f32 %v1446, 1.442695
        %v1472 = vpow.pop %v1471
        %v1473 = vmul.f32 %v1447, 1.442695
        %v1474 = vpow.pop %v1473
        %v1475 = vmul.f32 %v1448, 1.442695
        %v1476 = vpow.pop %v1475
        %v1477 = vmul.f32 %v1449, 1.442695
        %v1478 = vpow.pop %v1477
        %v1479 = vmul.f32 %v1450, 1.442695
        %v1480 = vpow.pop %v1479
        %v1481 = vmul.f32 %v1451, 1.442695
        %v1482 = vpow.pop %v1481
        %v1483 = vmul.f32 %v1452, 1.442695
        %v1484 = vpow.pop %v1483
        %v1485 = vadd.f32 %v1454, 1.0
        %v1486 = vadd.f32 %v1456, 1.0
        %v1487 = vadd.f32 %v1458, 1.0
        %v1488 = vadd.f32 %v1460, 1.0
        %v1489 = vadd.f32 %v1462, 1.0
        %v1490 = vadd.f32 %v1464, 1.0
        %v1491 = vadd.f32 %v1466, 1.0
        %v1492 = vadd.f32 %v1468, 1.0
        %v1493 = vadd.f32 %v1470, 1.0
        %v1494 = vadd.f32 %v1472, 1.0
        %v1495 = vadd.f32 %v1474, 1.0
        %v1496 = vadd.f32 %v1476, 1.0
        %v1497 = vadd.f32 %v1478, 1.0
        %v1498 = vadd.f32 %v1480, 1.0
        %v1499 = vadd.f32 %v1482, 1.0
        %v1500 = vadd.f32 %v1484, 1.0
        %v1501 = vrcp.pop %v1485
        %v1502 = vmul.f32 %v1485, %v1501
        %v1503 = vsub.f32 1.0, %v1502
        %v1504 = vmul.f32 %v1501, %v1503
        %v1505 = vadd.f32 %v1501, %v1504
        %vm1506 = vweird.f32 %v1485
        %vm1507 = vweird.f32 %v1501
        %vm1508 = vmor %vm1506, %vm1507
        %v1509 = vsel %vm1508, %v1501, %v1505
        %v1510 = vand.u32 2147483647, %v1485
        %vm1511 = vcmp.eq.f32.partialorder %v1510, 8.507059e+37
        %v1512 = vand.u32 %v1485, 2147483648
        %v1513 = vor.u32 1.1754944e-38, %v1512
        %v1514 = vsel %vm1511, %v1513, %v1509
        %v1515 = vmul.f32 1.0, %v1514
        %v1516 = vrcp.pop %v1486
        %v1517 = vmul.f32 %v1486, %v1516
        %v1518 = vsub.f32 1.0, %v1517
        %v1519 = vmul.f32 %v1516, %v1518
        %v1520 = vadd.f32 %v1516, %v1519
        %vm1521 = vweird.f32 %v1486
        %vm1522 = vweird.f32 %v1516
        %vm1523 = vmor %vm1521, %vm1522
        %v1524 = vsel %vm1523, %v1516, %v1520
        %v1525 = vand.u32 2147483647, %v1486
        %vm1526 = vcmp.eq.f32.partialorder %v1525, 8.507059e+37
        %v1527 = vand.u32 %v1486, 2147483648
        %v1528 = vor.u32 1.1754944e-38, %v1527
        %v1529 = vsel %vm1526, %v1528, %v1524
        %v1530 = vmul.f32 1.0, %v1529
        %v1531 = vrcp.pop %v1487
        %v1532 = vmul.f32 %v1487, %v1531
        %v1533 = vsub.f32 1.0, %v1532
        %v1534 = vmul.f32 %v1531, %v1533
        %v1535 = vadd.f32 %v1531, %v1534
        %vm1536 = vweird.f32 %v1487
        %vm1537 = vweird.f32 %v1531
        %vm1538 = vmor %vm1536, %vm1537
        %v1539 = vsel %vm1538, %v1531, %v1535
        %v1540 = vand.u32 2147483647, %v1487
        %vm1541 = vcmp.eq.f32.partialorder %v1540, 8.507059e+37
        %v1542 = vand.u32 %v1487, 2147483648
        %v1543 = vor.u32 1.1754944e-38, %v1542
        %v1544 = vsel %vm1541, %v1543, %v1539
        %v1545 = vmul.f32 1.0, %v1544
        %v1546 = vrcp.pop %v1488
        %v1547 = vmul.f32 %v1488, %v1546
        %v1548 = vsub.f32 1.0, %v1547
        %v1549 = vmul.f32 %v1546, %v1548
        %v1550 = vadd.f32 %v1546, %v1549
        %vm1551 = vweird.f32 %v1488
        %vm1552 = vweird.f32 %v1546
        %vm1553 = vmor %vm1551, %vm1552
        %v1554 = vsel %vm1553, %v1546, %v1550
        %v1555 = vand.u32 2147483647, %v1488
        %vm1556 = vcmp.eq.f32.partialorder %v1555, 8.507059e+37
        %v1557 = vand.u32 %v1488, 2147483648
        %v1558 = vor.u32 1.1754944e-38, %v1557
        %v1559 = vsel %vm1556, %v1558, %v1554
        %v1560 = vmul.f32 1.0, %v1559
        %v1561 = vrcp.pop %v1489
        %v1562 = vmul.f32 %v1489, %v1561
        %v1563 = vsub.f32 1.0, %v1562
        %v1564 = vmul.f32 %v1561, %v1563
        %v1565 = vadd.f32 %v1561, %v1564
        %vm1566 = vweird.f32 %v1489
        %vm1567 = vweird.f32 %v1561
        %vm1568 = vmor %vm1566, %vm1567
        %v1569 = vsel %vm1568, %v1561, %v1565
        %v1570 = vand.u32 2147483647, %v1489
        %vm1571 = vcmp.eq.f32.partialorder %v1570, 8.507059e+37
        %v1572 = vand.u32 %v1489, 2147483648
        %v1573 = vor.u32 1.1754944e-38, %v1572
        %v1574 = vsel %vm1571, %v1573, %v1569
        %v1575 = vmul.f32 1.0, %v1574
        %v1576 = vrcp.pop %v1490
        %v1577 = vmul.f32 %v1490, %v1576
        %v1578 = vsub.f32 1.0, %v1577
        %v1579 = vmul.f32 %v1576, %v1578
        %v1580 = vadd.f32 %v1576, %v1579
        %vm1581 = vweird.f32 %v1490
        %vm1582 = vweird.f32 %v1576
        %vm1583 = vmor %vm1581, %vm1582
        %v1584 = vsel %vm1583, %v1576, %v1580
        %v1585 = vand.u32 2147483647, %v1490
        %vm1586 = vcmp.eq.f32.partialorder %v1585, 8.507059e+37
        %v1587 = vand.u32 %v1490, 2147483648
        %v1588 = vor.u32 1.1754944e-38, %v1587
        %v1589 = vsel %vm1586, %v1588, %v1584
        %v1590 = vmul.f32 1.0, %v1589
        %v1591 = vrcp.pop %v1491
        %v1592 = vmul.f32 %v1491, %v1591
        %v1593 = vsub.f32 1.0, %v1592
        %v1594 = vmul.f32 %v1591, %v1593
        %v1595 = vadd.f32 %v1591, %v1594
        %vm1596 = vweird.f32 %v1491
        %vm1597 = vweird.f32 %v1591
        %vm1598 = vmor %vm1596, %vm1597
        %v1599 = vsel %vm1598, %v1591, %v1595
        %v1600 = vand.u32 2147483647, %v1491
        %vm1601 = vcmp.eq.f32.partialorder %v1600, 8.507059e+37
        %v1602 = vand.u32 %v1491, 2147483648
        %v1603 = vor.u32 1.1754944e-38, %v1602
        %v1604 = vsel %vm1601, %v1603, %v1599
        %v1605 = vmul.f32 1.0, %v1604
        %v1606 = vrcp.pop %v1492
        %v1607 = vmul.f32 %v1492, %v1606
        %v1608 = vsub.f32 1.0, %v1607
        %v1609 = vmul.f32 %v1606, %v1608
        %v1610 = vadd.f32 %v1606, %v1609
        %vm1611 = vweird.f32 %v1492
        %vm1612 = vweird.f32 %v1606
        %vm1613 = vmor %vm1611, %vm1612
        %v1614 = vsel %vm1613, %v1606, %v1610
        %v1615 = vand.u32 2147483647, %v1492
        %vm1616 = vcmp.eq.f32.partialorder %v1615, 8.507059e+37
        %v1617 = vand.u32 %v1492, 2147483648
        %v1618 = vor.u32 1.1754944e-38, %v1617
        %v1619 = vsel %vm1616, %v1618, %v1614
        %v1620 = vmul.f32 1.0, %v1619
        %v1621 = vrcp.pop %v1493
        %v1622 = vmul.f32 %v1493, %v1621
        %v1623 = vsub.f32 1.0, %v1622
        %v1624 = vmul.f32 %v1621, %v1623
        %v1625 = vadd.f32 %v1621, %v1624
        %vm1626 = vweird.f32 %v1493
        %vm1627 = vweird.f32 %v1621
        %vm1628 = vmor %vm1626, %vm1627
        %v1629 = vsel %vm1628, %v1621, %v1625
        %v1630 = vand.u32 2147483647, %v1493
        %vm1631 = vcmp.eq.f32.partialorder %v1630, 8.507059e+37
        %v1632 = vand.u32 %v1493, 2147483648
        %v1633 = vor.u32 1.1754944e-38, %v1632
        %v1634 = vsel %vm1631, %v1633, %v1629
        %v1635 = vmul.f32 1.0, %v1634
        %v1636 = vrcp.pop %v1494
        %v1637 = vmul.f32 %v1494, %v1636
        %v1638 = vsub.f32 1.0, %v1637
        %v1639 = vmul.f32 %v1636, %v1638
        %v1640 = vadd.f32 %v1636, %v1639
        %vm1641 = vweird.f32 %v1494
        %vm1642 = vweird.f32 %v1636
        %vm1643 = vmor %vm1641, %vm1642
        %v1644 = vsel %vm1643, %v1636, %v1640
        %v1645 = vand.u32 2147483647, %v1494
        %vm1646 = vcmp.eq.f32.partialorder %v1645, 8.507059e+37
        %v1647 = vand.u32 %v1494, 2147483648
        %v1648 = vor.u32 1.1754944e-38, %v1647
        %v1649 = vsel %vm1646, %v1648, %v1644
        %v1650 = vmul.f32 1.0, %v1649
        %v1651 = vrcp.pop %v1495
        %v1652 = vmul.f32 %v1495, %v1651
        %v1653 = vsub.f32 1.0, %v1652
        %v1654 = vmul.f32 %v1651, %v1653
        %v1655 = vadd.f32 %v1651, %v1654
        %vm1656 = vweird.f32 %v1495
        %vm1657 = vweird.f32 %v1651
        %vm1658 = vmor %vm1656, %vm1657
        %v1659 = vsel %vm1658, %v1651, %v1655
        %v1660 = vand.u32 2147483647, %v1495
        %vm1661 = vcmp.eq.f32.partialorder %v1660, 8.507059e+37
        %v1662 = vand.u32 %v1495, 2147483648
        %v1663 = vor.u32 1.1754944e-38, %v1662
        %v1664 = vsel %vm1661, %v1663, %v1659
        %v1665 = vmul.f32 1.0, %v1664
        %v1666 = vrcp.pop %v1496
        %v1667 = vmul.f32 %v1496, %v1666
        %v1668 = vsub.f32 1.0, %v1667
        %v1669 = vmul.f32 %v1666, %v1668
        %v1670 = vadd.f32 %v1666, %v1669
        %vm1671 = vweird.f32 %v1496
        %vm1672 = vweird.f32 %v1666
        %vm1673 = vmor %vm1671, %vm1672
        %v1674 = vsel %vm1673, %v1666, %v1670
        %v1675 = vand.u32 2147483647, %v1496
        %vm1676 = vcmp.eq.f32.partialorder %v1675, 8.507059e+37
        %v1677 = vand.u32 %v1496, 2147483648
        %v1678 = vor.u32 1.1754944e-38, %v1677
        %v1679 = vsel %vm1676, %v1678, %v1674
        %v1680 = vmul.f32 1.0, %v1679
        %v1681 = vrcp.pop %v1497
        %v1682 = vmul.f32 %v1497, %v1681
        %v1683 = vsub.f32 1.0, %v1682
        %v1684 = vmul.f32 %v1681, %v1683
        %v1685 = vadd.f32 %v1681, %v1684
        %vm1686 = vweird.f32 %v1497
        %vm1687 = vweird.f32 %v1681
        %vm1688 = vmor %vm1686, %vm1687
        %v1689 = vsel %vm1688, %v1681, %v1685
        %v1690 = vand.u32 2147483647, %v1497
        %vm1691 = vcmp.eq.f32.partialorder %v1690, 8.507059e+37
        %v1692 = vand.u32 %v1497, 2147483648
        %v1693 = vor.u32 1.1754944e-38, %v1692
        %v1694 = vsel %vm1691, %v1693, %v1689
        %v1695 = vmul.f32 1.0, %v1694
        %v1696 = vrcp.pop %v1498
        %v1697 = vmul.f32 %v1498, %v1696
        %v1698 = vsub.f32 1.0, %v1697
        %v1699 = vmul.f32 %v1696, %v1698
        %v1700 = vadd.f32 %v1696, %v1699
        %vm1701 = vweird.f32 %v1498
        %vm1702 = vweird.f32 %v1696
        %vm1703 = vmor %vm1701, %vm1702
        %v1704 = vsel %vm1703, %v1696, %v1700
        %v1705 = vand.u32 2147483647, %v1498
        %vm1706 = vcmp.eq.f32.partialorder %v1705, 8.507059e+37
        %v1707 = vand.u32 %v1498, 2147483648
        %v1708 = vor.u32 1.1754944e-38, %v1707
        %v1709 = vsel %vm1706, %v1708, %v1704
        %v1710 = vmul.f32 1.0, %v1709
        %v1711 = vrcp.pop %v1499
        %v1712 = vmul.f32 %v1499, %v1711
        %v1713 = vsub.f32 1.0, %v1712
        %v1714 = vmul.f32 %v1711, %v1713
        %v1715 = vadd.f32 %v1711, %v1714
        %vm1716 = vweird.f32 %v1499
        %vm1717 = vweird.f32 %v1711
        %vm1718 = vmor %vm1716, %vm1717
        %v1719 = vsel %vm1718, %v1711, %v1715
        %v1720 = vand.u32 2147483647, %v1499
        %vm1721 = vcmp.eq.f32.partialorder %v1720, 8.507059e+37
        %v1722 = vand.u32 %v1499, 2147483648
        %v1723 = vor.u32 1.1754944e-38, %v1722
        %v1724 = vsel %vm1721, %v1723, %v1719
        %v1725 = vmul.f32 1.0, %v1724
        %v1726 = vrcp.pop %v1500
        %v1727 = vmul.f32 %v1500, %v1726
        %v1728 = vsub.f32 1.0, %v1727
        %v1729 = vmul.f32 %v1726, %v1728
        %v1730 = vadd.f32 %v1726, %v1729
        %vm1731 = vweird.f32 %v1500
        %vm1732 = vweird.f32 %v1726
        %vm1733 = vmor %vm1731, %vm1732
        %v1734 = vsel %vm1733, %v1726, %v1730
        %v1735 = vand.u32 2147483647, %v1500
        %vm1736 = vcmp.eq.f32.partialorder %v1735, 8.507059e+37
        %v1737 = vand.u32 %v1500, 2147483648
        %v1738 = vor.u32 1.1754944e-38, %v1737
        %v1739 = vsel %vm1736, %v1738, %v1734
        %v1740 = vmul.f32 1.0, %v1739
        %v1741 = vmul.f32 %v1515, %v698
        %v1742 = vmul.f32 %v1530, %v701
        %v1743 = vmul.f32 %v1545, %v698
        %v1744 = vmul.f32 %v1560, %v701
        %v1745 = vmul.f32 %v1575, %v698
        %v1746 = vmul.f32 %v1590, %v701
        %v1747 = vmul.f32 %v1605, %v698
        %v1748 = vmul.f32 %v1620, %v701
        %v1749 = vmul.f32 %v1635, %v698
        %v1750 = vmul.f32 %v1650, %v701
        %v1751 = vmul.f32 %v1665, %v698
        %v1752 = vmul.f32 %v1680, %v701
        %v1753 = vmul.f32 %v1695, %v698
        %v1754 = vmul.f32 %v1710, %v701
        %v1755 = vmul.f32 %v1725, %v698
        %v1756 = vmul.f32 %v1740, %v701
        %v1757 = vadd.f32 %v1741, %v703
        %v1758 = vadd.f32 %v1742, %v704
        %v1759 = vadd.f32 %v1743, %v705
        %v1760 = vadd.f32 %v1744, %v706
        %v1761 = vadd.f32 %v1745, %v707
        %v1762 = vadd.f32 %v1746, %v708
        %v1763 = vadd.f32 %v1747, %v709
        %v1764 = vadd.f32 %v1748, %v710
        %v1765 = vadd.f32 %v1749, %v711
        %v1766 = vadd.f32 %v1750, %v712
        %v1767 = vadd.f32 %v1751, %v713
        %v1768 = vadd.f32 %v1752, %v714
        %v1769 = vadd.f32 %v1753, %v715
        %v1770 = vadd.f32 %v1754, %v716
        %v1771 = vadd.f32 %v1755, %v717
        %v1772 = vadd.f32 %v1756, %v718
        %1773 = vst [vmem:[#allocation2 + $0x2] sm:$0xff] %v1757
        %1774 = vst [vmem:[#allocation2 + $0xa] sm:$0xff] %v1758
        %1775 = vst [vmem:[#allocation2 + $0x1a] sm:$0xff] %v1759
        %1776 = vst [vmem:[#allocation2 + $0x22] sm:$0xff] %v1760
        %1777 = vst [vmem:[#allocation2 + $0x32] sm:$0xff] %v1761
        %1778 = vst [vmem:[#allocation2 + $0x3a] sm:$0xff] %v1762
        %1779 = vst [vmem:[#allocation2 + $0x4a] sm:$0xff] %v1763
        %1780 = vst [vmem:[#allocation2 + $0x52] sm:$0xff] %v1764
        %1781 = vst [vmem:[#allocation2 + $0x62] sm:$0xff] %v1765
        %1782 = vst [vmem:[#allocation2 + $0x6a] sm:$0xff] %v1766
        %1783 = vst [vmem:[#allocation2 + $0x7a] sm:$0xff] %v1767
        %1784 = vst [vmem:[#allocation2 + $0x82] sm:$0xff] %v1768
        %1785 = vst [vmem:[#allocation2 + $0x92] sm:$0xff] %v1769
        %1786 = vst [vmem:[#allocation2 + $0x9a] sm:$0xff] %v1770
        %1787 = vst [vmem:[#allocation2 + $0xaa] sm:$0xff] %v1771
        %1788 = vst [vmem:[#allocation2 + $0xb2] sm:$0xff] %v1772
        %v1789 = vld [vmem:[#allocation2] sm:$0xff]
        %v1790 = vld [vmem:[#allocation2 + $0x8] sm:$0xff]
        %v1791 = vld [vmem:[#allocation2 + $0x18] sm:$0xff]
        %v1792 = vld [vmem:[#allocation2 + $0x20] sm:$0xff]
        %v1793 = vld [vmem:[#allocation2 + $0x30] sm:$0xff]
        %v1794 = vld [vmem:[#allocation2 + $0x38] sm:$0xff]
        %v1795 = vld [vmem:[#allocation2 + $0x48] sm:$0xff]
        %v1796 = vld [vmem:[#allocation2 + $0x50] sm:$0xff]
        %v1797 = vld [vmem:[#allocation2 + $0x60] sm:$0xff]
        %v1798 = vld [vmem:[#allocation2 + $0x68] sm:$0xff]
        %v1799 = vld [vmem:[#allocation2 + $0x78] sm:$0xff]
        %v1800 = vld [vmem:[#allocation2 + $0x80] sm:$0xff]
        %v1801 = vld [vmem:[#allocation2 + $0x90] sm:$0xff]
        %v1802 = vld [vmem:[#allocation2 + $0x98] sm:$0xff]
        %v1803 = vld [vmem:[#allocation2 + $0xa8] sm:$0xff]
        %v1804 = vld [vmem:[#allocation2 + $0xb0] sm:$0xff]
        %v1805 = vld [vmem:[#allocation14] sm:$0xff]
        %v1806 = vld [vmem:[#allocation14 + $0x8] sm:$0xff]
        %v1807 = vld [vmem:[#allocation14 + $0x10] sm:$0xff]
        %v1808 = vld [vmem:[#allocation14 + $0x18] sm:$0xff]
        %v1809 = vld [vmem:[#allocation14 + $0x20] sm:$0xff]
        %v1810 = vld [vmem:[#allocation14 + $0x28] sm:$0xff]
        %v1811 = vld [vmem:[#allocation14 + $0x30] sm:$0xff]
        %v1812 = vld [vmem:[#allocation14 + $0x38] sm:$0xff]
        %v1813 = vld [vmem:[#allocation14 + $0x40] sm:$0xff]
        %v1814 = vld [vmem:[#allocation14 + $0x48] sm:$0xff]
        %v1815 = vld [vmem:[#allocation14 + $0x50] sm:$0xff]
        %v1816 = vld [vmem:[#allocation14 + $0x58] sm:$0xff]
        %v1817 = vld [vmem:[#allocation14 + $0x60] sm:$0xff]
        %v1818 = vld [vmem:[#allocation14 + $0x68] sm:$0xff]
        %v1819 = vld [vmem:[#allocation14 + $0x70] sm:$0xff]
        %v1820 = vld [vmem:[#allocation14 + $0x78] sm:$0xff]
        %v1821 = vld [vmem:[#allocation2 + $0x1] sm:$0xff]
        %v1822 = vld [vmem:[#allocation2 + $0x9] sm:$0xff]
        %v1823 = vld [vmem:[#allocation2 + $0x19] sm:$0xff]
        %v1824 = vld [vmem:[#allocation2 + $0x21] sm:$0xff]
        %v1825 = vld [vmem:[#allocation2 + $0x31] sm:$0xff]
        %v1826 = vld [vmem:[#allocation2 + $0x39] sm:$0xff]
        %v1827 = vld [vmem:[#allocation2 + $0x49] sm:$0xff]
        %v1828 = vld [vmem:[#allocation2 + $0x51] sm:$0xff]
        %v1829 = vld [vmem:[#allocation2 + $0x61] sm:$0xff]
        %v1830 = vld [vmem:[#allocation2 + $0x69] sm:$0xff]
        %v1831 = vld [vmem:[#allocation2 + $0x79] sm:$0xff]
        %v1832 = vld [vmem:[#allocation2 + $0x81] sm:$0xff]
        %v1833 = vld [vmem:[#allocation2 + $0x91] sm:$0xff]
        %v1834 = vld [vmem:[#allocation2 + $0x99] sm:$0xff]
        %v1835 = vld [vmem:[#allocation2 + $0xa9] sm:$0xff]
        %v1836 = vld [vmem:[#allocation2 + $0xb1] sm:$0xff]
        %s1837 = scalar_lea.vmem [#allocation14], 128
        %v1838 = vld [vmem:[%s1837] sm:$0xff]
        %v1839 = vld [vmem:[%s1837 + $0x8] sm:$0xff]
        %v1840 = vld [vmem:[%s1837 + $0x10] sm:$0xff]
        %v1841 = vld [vmem:[%s1837 + $0x18] sm:$0xff]
        %v1842 = vld [vmem:[%s1837 + $0x20] sm:$0xff]
        %v1843 = vld [vmem:[%s1837 + $0x28] sm:$0xff]
        %v1844 = vld [vmem:[%s1837 + $0x30] sm:$0xff]
        %v1845 = vld [vmem:[%s1837 + $0x38] sm:$0xff]
        %v1846 = vld [vmem:[%s1837 + $0x40] sm:$0xff]
        %v1847 = vld [vmem:[%s1837 + $0x48] sm:$0xff]
        %v1848 = vld [vmem:[%s1837 + $0x50] sm:$0xff]
        %v1849 = vld [vmem:[%s1837 + $0x58] sm:$0xff]
        %v1850 = vld [vmem:[%s1837 + $0x60] sm:$0xff]
        %v1851 = vld [vmem:[%s1837 + $0x68] sm:$0xff]
        %v1852 = vld [vmem:[%s1837 + $0x70] sm:$0xff]
        %v1853 = vld [vmem:[%s1837 + $0x78] sm:$0xff]
        %1854 = vmatpush.msra.mxu0 %v1853
        %1855 = vmatpush.msra.mxu0 %v1852
        %1856 = vmatpush.msra.mxu0 %v1851
        %1857 = vmatpush.msra.mxu0 %v1850
        %1858 = vmatpush.msra.mxu0 %v1849
        %1859 = vmatpush.msra.mxu0 %v1848
        %1860 = vmatpush.msra.mxu0 %v1847
        %1861 = vmatpush.msra.mxu0 %v1846
        %1862 = vmatpush.msra.mxu0 %v1845
        %1863 = vmatpush.msra.mxu0 %v1844
        %1864 = vmatpush.msra.mxu0 %v1843
        %1865 = vmatpush.msra.mxu0 %v1842
        %1866 = vmatpush.msra.mxu0 %v1841
        %1867 = vmatpush.msra.mxu0 %v1840
        %1868 = vmatpush.msra.mxu0 %v1839
        %1869 = vmatpush.msra.mxu0 %v1838
        %1870 = vmatmul.f32.gmra.mxu0 %v1821
        %v1871 = vpop.f32.mrf.mxu0
        %v1872 = vadd.f32 0.0, %v1871
        %1873 = vmatmul.f32.gmra.mxu0 %v1822
        %v1874 = vpop.f32.mrf.mxu0
        %v1875 = vadd.f32 0.0, %v1874
        %1876 = vmatmul.f32.gmra.mxu0 %v1823
        %v1877 = vpop.f32.mrf.mxu0
        %v1878 = vadd.f32 0.0, %v1877
        %1879 = vmatmul.f32.gmra.mxu0 %v1824
        %v1880 = vpop.f32.mrf.mxu0
        %v1881 = vadd.f32 0.0, %v1880
        %1882 = vmatmul.f32.gmra.mxu0 %v1825
        %v1883 = vpop.f32.mrf.mxu0
        %v1884 = vadd.f32 0.0, %v1883
        %1885 = vmatmul.f32.gmra.mxu0 %v1826
        %v1886 = vpop.f32.mrf.mxu0
        %v1887 = vadd.f32 0.0, %v1886
        %1888 = vmatmul.f32.gmra.mxu0 %v1827
        %v1889 = vpop.f32.mrf.mxu0
        %v1890 = vadd.f32 0.0, %v1889
        %1891 = vmatmul.f32.gmra.mxu0 %v1828
        %v1892 = vpop.f32.mrf.mxu0
        %v1893 = vadd.f32 0.0, %v1892
        %1894 = vmatmul.f32.gmra.mxu0 %v1829
        %v1895 = vpop.f32.mrf.mxu0
        %v1896 = vadd.f32 0.0, %v1895
        %1897 = vmatmul.f32.gmra.mxu0 %v1830
        %v1898 = vpop.f32.mrf.mxu0
        %v1899 = vadd.f32 0.0, %v1898
        %1900 = vmatmul.f32.gmra.mxu0 %v1831
        %v1901 = vpop.f32.mrf.mxu0
        %v1902 = vadd.f32 0.0, %v1901
        %1903 = vmatmul.f32.gmra.mxu0 %v1832
        %v1904 = vpop.f32.mrf.mxu0
        %v1905 = vadd.f32 0.0, %v1904
        %1906 = vmatmul.f32.gmra.mxu0 %v1833
        %v1907 = vpop.f32.mrf.mxu0
        %v1908 = vadd.f32 0.0, %v1907
        %1909 = vmatmul.f32.gmra.mxu0 %v1834
        %v1910 = vpop.f32.mrf.mxu0
        %v1911 = vadd.f32 0.0, %v1910
        %1912 = vmatmul.f32.gmra.mxu0 %v1835
        %v1913 = vpop.f32.mrf.mxu0
        %v1914 = vadd.f32 0.0, %v1913
        %1915 = vmatmul.f32.gmra.mxu0 %v1836
        %v1916 = vpop.f32.mrf.mxu0
        %v1917 = vadd.f32 0.0, %v1916
        %1918 = vdwg.mxu0
        %1919 = vmatpush.msra.mxu0 %v1820
        %1920 = vmatpush.msra.mxu0 %v1819
        %1921 = vmatpush.msra.mxu0 %v1818
        %1922 = vmatpush.msra.mxu0 %v1817
        %1923 = vmatpush.msra.mxu0 %v1816
        %1924 = vmatpush.msra.mxu0 %v1815
        %1925 = vmatpush.msra.mxu0 %v1814
        %1926 = vmatpush.msra.mxu0 %v1813
        %1927 = vmatpush.msra.mxu0 %v1812
        %1928 = vmatpush.msra.mxu0 %v1811
        %1929 = vmatpush.msra.mxu0 %v1810
        %1930 = vmatpush.msra.mxu0 %v1809
        %1931 = vmatpush.msra.mxu0 %v1808
        %1932 = vmatpush.msra.mxu0 %v1807
        %1933 = vmatpush.msra.mxu0 %v1806
        %1934 = vmatpush.msra.mxu0 %v1805
        %1935 = vmatmul.f32.gmra.mxu0 %v1789
        %v1936 = vpop.f32.mrf.mxu0
        %v1937 = vadd.f32 %v1872, %v1936
        %1938 = vmatmul.f32.gmra.mxu0 %v1790
        %v1939 = vpop.f32.mrf.mxu0
        %v1940 = vadd.f32 %v1875, %v1939
        %1941 = vmatmul.f32.gmra.mxu0 %v1791
        %v1942 = vpop.f32.mrf.mxu0
        %v1943 = vadd.f32 %v1878, %v1942
        %1944 = vmatmul.f32.gmra.mxu0 %v1792
        %v1945 = vpop.f32.mrf.mxu0
        %v1946 = vadd.f32 %v1881, %v1945
        %1947 = vmatmul.f32.gmra.mxu0 %v1793
        %v1948 = vpop.f32.mrf.mxu0
        %v1949 = vadd.f32 %v1884, %v1948
        %1950 = vmatmul.f32.gmra.mxu0 %v1794
        %v1951 = vpop.f32.mrf.mxu0
        %v1952 = vadd.f32 %v1887, %v1951
        %1953 = vmatmul.f32.gmra.mxu0 %v1795
        %v1954 = vpop.f32.mrf.mxu0
        %v1955 = vadd.f32 %v1890, %v1954
        %1956 = vmatmul.f32.gmra.mxu0 %v1796
        %v1957 = vpop.f32.mrf.mxu0
        %v1958 = vadd.f32 %v1893, %v1957
        %1959 = vmatmul.f32.gmra.mxu0 %v1797
        %v1960 = vpop.f32.mrf.mxu0
        %v1961 = vadd.f32 %v1896, %v1960
        %1962 = vmatmul.f32.gmra.mxu0 %v1798
        %v1963 = vpop.f32.mrf.mxu0
        %v1964 = vadd.f32 %v1899, %v1963
        %1965 = vmatmul.f32.gmra.mxu0 %v1799
        %v1966 = vpop.f32.mrf.mxu0
        %v1967 = vadd.f32 %v1902, %v1966
        %1968 = vmatmul.f32.gmra.mxu0 %v1800
        %v1969 = vpop.f32.mrf.mxu0
        %v1970 = vadd.f32 %v1905, %v1969
        %1971 = vmatmul.f32.gmra.mxu0 %v1801
        %v1972 = vpop.f32.mrf.mxu0
        %v1973 = vadd.f32 %v1908, %v1972
        %1974 = vmatmul.f32.gmra.mxu0 %v1802
        %v1975 = vpop.f32.mrf.mxu0
        %v1976 = vadd.f32 %v1911, %v1975
        %1977 = vmatmul.f32.gmra.mxu0 %v1803
        %v1978 = vpop.f32.mrf.mxu0
        %v1979 = vadd.f32 %v1914, %v1978
        %1980 = vmatmul.f32.gmra.mxu0 %v1804
        %v1981 = vpop.f32.mrf.mxu0
        %v1982 = vadd.f32 %v1917, %v1981
        %1983 = vdwg.mxu0
        %v1984 = vld [vmem:[#allocation2 + $0x2] sm:$0xff]
        %v1985 = vld [vmem:[#allocation2 + $0xa] sm:$0xff]
        %v1986 = vld [vmem:[#allocation2 + $0x1a] sm:$0xff]
        %v1987 = vld [vmem:[#allocation2 + $0x22] sm:$0xff]
        %v1988 = vld [vmem:[#allocation2 + $0x32] sm:$0xff]
        %v1989 = vld [vmem:[#allocation2 + $0x3a] sm:$0xff]
        %v1990 = vld [vmem:[#allocation2 + $0x4a] sm:$0xff]
        %v1991 = vld [vmem:[#allocation2 + $0x52] sm:$0xff]
        %v1992 = vld [vmem:[#allocation2 + $0x62] sm:$0xff]
        %v1993 = vld [vmem:[#allocation2 + $0x6a] sm:$0xff]
        %v1994 = vld [vmem:[#allocation2 + $0x7a] sm:$0xff]
        %v1995 = vld [vmem:[#allocation2 + $0x82] sm:$0xff]
        %v1996 = vld [vmem:[#allocation2 + $0x92] sm:$0xff]
        %v1997 = vld [vmem:[#allocation2 + $0x9a] sm:$0xff]
        %v1998 = vld [vmem:[#allocation2 + $0xaa] sm:$0xff]
        %v1999 = vld [vmem:[#allocation2 + $0xb2] sm:$0xff]
        %s2000 = scalar_lea.vmem [#allocation14], 256
        %v2001 = vld [vmem:[%s2000] sm:$0xff]
        %v2002 = vld [vmem:[%s2000 + $0x8] sm:$0xff]
        %v2003 = vld [vmem:[%s2000 + $0x10] sm:$0xff]
        %v2004 = vld [vmem:[%s2000 + $0x18] sm:$0xff]
        %v2005 = vld [vmem:[%s2000 + $0x20] sm:$0xff]
        %v2006 = vld [vmem:[%s2000 + $0x28] sm:$0xff]
        %v2007 = vld [vmem:[%s2000 + $0x30] sm:$0xff]
        %v2008 = vld [vmem:[%s2000 + $0x38] sm:$0xff]
        %v2009 = vld [vmem:[%s2000 + $0x40] sm:$0xff]
        %v2010 = vld [vmem:[%s2000 + $0x48] sm:$0xff]
        %v2011 = vld [vmem:[%s2000 + $0x50] sm:$0xff]
        %v2012 = vld [vmem:[%s2000 + $0x58] sm:$0xff]
        %v2013 = vld [vmem:[%s2000 + $0x60] sm:$0xff]
        %v2014 = vld [vmem:[%s2000 + $0x68] sm:$0xff]
        %v2015 = vld [vmem:[%s2000 + $0x70] sm:$0xff]
        %v2016 = vld [vmem:[%s2000 + $0x78] sm:$0xff]
        %2017 = vmatpush.msra.mxu0 %v2016
        %2018 = vmatpush.msra.mxu0 %v2015
        %2019 = vmatpush.msra.mxu0 %v2014
        %2020 = vmatpush.msra.mxu0 %v2013
        %2021 = vmatpush.msra.mxu0 %v2012
        %2022 = vmatpush.msra.mxu0 %v2011
        %2023 = vmatpush.msra.mxu0 %v2010
        %2024 = vmatpush.msra.mxu0 %v2009
        %2025 = vmatpush.msra.mxu0 %v2008
        %2026 = vmatpush.msra.mxu0 %v2007
        %2027 = vmatpush.msra.mxu0 %v2006
        %2028 = vmatpush.msra.mxu0 %v2005
        %2029 = vmatpush.msra.mxu0 %v2004
        %2030 = vmatpush.msra.mxu0 %v2003
        %2031 = vmatpush.msra.mxu0 %v2002
        %2032 = vmatpush.msra.mxu0 %v2001
        %2033 = vmatmul.f32.gmra.mxu0 %v1984
        %v2034 = vpop.f32.mrf.mxu0
        %v2035 = vadd.f32 0.0, %v2034
        %2036 = vmatmul.f32.gmra.mxu0 %v1985
        %v2037 = vpop.f32.mrf.mxu0
        %v2038 = vadd.f32 0.0, %v2037
        %2039 = vmatmul.f32.gmra.mxu0 %v1986
        %v2040 = vpop.f32.mrf.mxu0
        %v2041 = vadd.f32 0.0, %v2040
        %2042 = vmatmul.f32.gmra.mxu0 %v1987
        %v2043 = vpop.f32.mrf.mxu0
        %v2044 = vadd.f32 0.0, %v2043
        %2045 = vmatmul.f32.gmra.mxu0 %v1988
        %v2046 = vpop.f32.mrf.mxu0
        %v2047 = vadd.f32 0.0, %v2046
        %2048 = vmatmul.f32.gmra.mxu0 %v1989
        %v2049 = vpop.f32.mrf.mxu0
        %v2050 = vadd.f32 0.0, %v2049
        %2051 = vmatmul.f32.gmra.mxu0 %v1990
        %v2052 = vpop.f32.mrf.mxu0
        %v2053 = vadd.f32 0.0, %v2052
        %2054 = vmatmul.f32.gmra.mxu0 %v1991
        %v2055 = vpop.f32.mrf.mxu0
        %v2056 = vadd.f32 0.0, %v2055
        %2057 = vmatmul.f32.gmra.mxu0 %v1992
        %v2058 = vpop.f32.mrf.mxu0
        %v2059 = vadd.f32 0.0, %v2058
        %2060 = vmatmul.f32.gmra.mxu0 %v1993
        %v2061 = vpop.f32.mrf.mxu0
        %v2062 = vadd.f32 0.0, %v2061
        %2063 = vmatmul.f32.gmra.mxu0 %v1994
        %v2064 = vpop.f32.mrf.mxu0
        %v2065 = vadd.f32 0.0, %v2064
        %2066 = vmatmul.f32.gmra.mxu0 %v1995
        %v2067 = vpop.f32.mrf.mxu0
        %v2068 = vadd.f32 0.0, %v2067
        %2069 = vmatmul.f32.gmra.mxu0 %v1996
        %v2070 = vpop.f32.mrf.mxu0
        %v2071 = vadd.f32 0.0, %v2070
        %2072 = vmatmul.f32.gmra.mxu0 %v1997
        %v2073 = vpop.f32.mrf.mxu0
        %v2074 = vadd.f32 0.0, %v2073
        %2075 = vmatmul.f32.gmra.mxu0 %v1998
        %v2076 = vpop.f32.mrf.mxu0
        %v2077 = vadd.f32 0.0, %v2076
        %2078 = vmatmul.f32.gmra.mxu0 %v1999
        %v2079 = vpop.f32.mrf.mxu0
        %v2080 = vadd.f32 0.0, %v2079
        %2081 = vdwg.mxu0
        %v2082 = vadd.f32 %v1937, %v2035
        %v2083 = vadd.f32 %v1940, %v2038
        %v2084 = vadd.f32 %v1943, %v2041
        %v2085 = vadd.f32 %v1946, %v2044
        %v2086 = vadd.f32 %v1949, %v2047
        %v2087 = vadd.f32 %v1952, %v2050
        %v2088 = vadd.f32 %v1955, %v2053
        %v2089 = vadd.f32 %v1958, %v2056
        %v2090 = vadd.f32 %v1961, %v2059
        %v2091 = vadd.f32 %v1964, %v2062
        %v2092 = vadd.f32 %v1967, %v2065
        %v2093 = vadd.f32 %v1970, %v2068
        %v2094 = vadd.f32 %v1973, %v2071
        %v2095 = vadd.f32 %v1976, %v2074
        %v2096 = vadd.f32 %v1979, %v2077
        %v2097 = vadd.f32 %v1982, %v2080
        %v2098 = vld [vmem:[#allocation2 + $0x3] sm:$0xff]
        %v2099 = vld [vmem:[#allocation2 + $0xb] sm:$0xff]
        %v2100 = vld [vmem:[#allocation2 + $0x1b] sm:$0xff]
        %v2101 = vld [vmem:[#allocation2 + $0x23] sm:$0xff]
        %v2102 = vld [vmem:[#allocation2 + $0x33] sm:$0xff]
        %v2103 = vld [vmem:[#allocation2 + $0x3b] sm:$0xff]
        %v2104 = vld [vmem:[#allocation2 + $0x4b] sm:$0xff]
        %v2105 = vld [vmem:[#allocation2 + $0x53] sm:$0xff]
        %v2106 = vld [vmem:[#allocation2 + $0x63] sm:$0xff]
        %v2107 = vld [vmem:[#allocation2 + $0x6b] sm:$0xff]
        %v2108 = vld [vmem:[#allocation2 + $0x7b] sm:$0xff]
        %v2109 = vld [vmem:[#allocation2 + $0x83] sm:$0xff]
        %v2110 = vld [vmem:[#allocation2 + $0x93] sm:$0xff]
        %v2111 = vld [vmem:[#allocation2 + $0x9b] sm:$0xff]
        %v2112 = vld [vmem:[#allocation2 + $0xab] sm:$0xff]
        %v2113 = vld [vmem:[#allocation2 + $0xb3] sm:$0xff]
        %s2114 = scalar_lea.vmem [#allocation14], 384
        %v2115 = vld [vmem:[%s2114] sm:$0xff]
        %v2116 = vld [vmem:[%s2114 + $0x8] sm:$0xff]
        %v2117 = vld [vmem:[%s2114 + $0x10] sm:$0xff]
        %v2118 = vld [vmem:[%s2114 + $0x18] sm:$0xff]
        %v2119 = vld [vmem:[%s2114 + $0x20] sm:$0xff]
        %v2120 = vld [vmem:[%s2114 + $0x28] sm:$0xff]
        %v2121 = vld [vmem:[%s2114 + $0x30] sm:$0xff]
        %v2122 = vld [vmem:[%s2114 + $0x38] sm:$0xff]
        %v2123 = vld [vmem:[%s2114 + $0x40] sm:$0xff]
        %v2124 = vld [vmem:[%s2114 + $0x48] sm:$0xff]
        %v2125 = vld [vmem:[%s2114 + $0x50] sm:$0xff]
        %v2126 = vld [vmem:[%s2114 + $0x58] sm:$0xff]
        %v2127 = vld [vmem:[%s2114 + $0x60] sm:$0xff]
        %v2128 = vld [vmem:[%s2114 + $0x68] sm:$0xff]
        %v2129 = vld [vmem:[%s2114 + $0x70] sm:$0xff]
        %v2130 = vld [vmem:[%s2114 + $0x78] sm:$0xff]
        %2131 = vmatpush.msra.mxu0 %v2130
        %2132 = vmatpush.msra.mxu0 %v2129
        %2133 = vmatpush.msra.mxu0 %v2128
        %2134 = vmatpush.msra.mxu0 %v2127
        %2135 = vmatpush.msra.mxu0 %v2126
        %2136 = vmatpush.msra.mxu0 %v2125
        %2137 = vmatpush.msra.mxu0 %v2124
        %2138 = vmatpush.msra.mxu0 %v2123
        %2139 = vmatpush.msra.mxu0 %v2122
        %2140 = vmatpush.msra.mxu0 %v2121
        %2141 = vmatpush.msra.mxu0 %v2120
        %2142 = vmatpush.msra.mxu0 %v2119
        %2143 = vmatpush.msra.mxu0 %v2118
        %2144 = vmatpush.msra.mxu0 %v2117
        %2145 = vmatpush.msra.mxu0 %v2116
        %2146 = vmatpush.msra.mxu0 %v2115
        %2147 = vmatmul.f32.gmra.mxu0 %v2098
        %v2148 = vpop.f32.mrf.mxu0
        %v2149 = vadd.f32 0.0, %v2148
        %2150 = vmatmul.f32.gmra.mxu0 %v2099
        %v2151 = vpop.f32.mrf.mxu0
        %v2152 = vadd.f32 0.0, %v2151
        %2153 = vmatmul.f32.gmra.mxu0 %v2100
        %v2154 = vpop.f32.mrf.mxu0
        %v2155 = vadd.f32 0.0, %v2154
        %2156 = vmatmul.f32.gmra.mxu0 %v2101
        %v2157 = vpop.f32.mrf.mxu0
        %v2158 = vadd.f32 0.0, %v2157
        %2159 = vmatmul.f32.gmra.mxu0 %v2102
        %v2160 = vpop.f32.mrf.mxu0
        %v2161 = vadd.f32 0.0, %v2160
        %2162 = vmatmul.f32.gmra.mxu0 %v2103
        %v2163 = vpop.f32.mrf.mxu0
        %v2164 = vadd.f32 0.0, %v2163
        %2165 = vmatmul.f32.gmra.mxu0 %v2104
        %v2166 = vpop.f32.mrf.mxu0
        %v2167 = vadd.f32 0.0, %v2166
        %2168 = vmatmul.f32.gmra.mxu0 %v2105
        %v2169 = vpop.f32.mrf.mxu0
        %v2170 = vadd.f32 0.0, %v2169
        %2171 = vmatmul.f32.gmra.mxu0 %v2106
        %v2172 = vpop.f32.mrf.mxu0
        %v2173 = vadd.f32 0.0, %v2172
        %2174 = vmatmul.f32.gmra.mxu0 %v2107
        %v2175 = vpop.f32.mrf.mxu0
        %v2176 = vadd.f32 0.0, %v2175
        %2177 = vmatmul.f32.gmra.mxu0 %v2108
        %v2178 = vpop.f32.mrf.mxu0
        %v2179 = vadd.f32 0.0, %v2178
        %2180 = vmatmul.f32.gmra.mxu0 %v2109
        %v2181 = vpop.f32.mrf.mxu0
        %v2182 = vadd.f32 0.0, %v2181
        %2183 = vmatmul.f32.gmra.mxu0 %v2110
        %v2184 = vpop.f32.mrf.mxu0
        %v2185 = vadd.f32 0.0, %v2184
        %2186 = vmatmul.f32.gmra.mxu0 %v2111
        %v2187 = vpop.f32.mrf.mxu0
        %v2188 = vadd.f32 0.0, %v2187
        %2189 = vmatmul.f32.gmra.mxu0 %v2112
        %v2190 = vpop.f32.mrf.mxu0
        %v2191 = vadd.f32 0.0, %v2190
        %2192 = vmatmul.f32.gmra.mxu0 %v2113
        %v2193 = vpop.f32.mrf.mxu0
        %v2194 = vadd.f32 0.0, %v2193
        %2195 = vdwg.mxu0
        %v2196 = vadd.f32 %v2082, %v2149
        %v2197 = vadd.f32 %v2083, %v2152
        %v2198 = vadd.f32 %v2084, %v2155
        %v2199 = vadd.f32 %v2085, %v2158
        %v2200 = vadd.f32 %v2086, %v2161
        %v2201 = vadd.f32 %v2087, %v2164
        %v2202 = vadd.f32 %v2088, %v2167
        %v2203 = vadd.f32 %v2089, %v2170
        %v2204 = vadd.f32 %v2090, %v2173
        %v2205 = vadd.f32 %v2091, %v2176
        %v2206 = vadd.f32 %v2092, %v2179
        %v2207 = vadd.f32 %v2093, %v2182
        %v2208 = vadd.f32 %v2094, %v2185
        %v2209 = vadd.f32 %v2095, %v2188
        %v2210 = vadd.f32 %v2096, %v2191
        %v2211 = vadd.f32 %v2097, %v2194
        %v2212 = vld [vmem:[#allocation2 + $0x4] sm:$0xff]
        %v2213 = vld [vmem:[#allocation2 + $0xc] sm:$0xff]
        %v2214 = vld [vmem:[#allocation2 + $0x1c] sm:$0xff]
        %v2215 = vld [vmem:[#allocation2 + $0x24] sm:$0xff]
        %v2216 = vld [vmem:[#allocation2 + $0x34] sm:$0xff]
        %v2217 = vld [vmem:[#allocation2 + $0x3c] sm:$0xff]
        %v2218 = vld [vmem:[#allocation2 + $0x4c] sm:$0xff]
        %v2219 = vld [vmem:[#allocation2 + $0x54] sm:$0xff]
        %v2220 = vld [vmem:[#allocation2 + $0x64] sm:$0xff]
        %v2221 = vld [vmem:[#allocation2 + $0x6c] sm:$0xff]
        %v2222 = vld [vmem:[#allocation2 + $0x7c] sm:$0xff]
        %v2223 = vld [vmem:[#allocation2 + $0x84] sm:$0xff]
        %v2224 = vld [vmem:[#allocation2 + $0x94] sm:$0xff]
        %v2225 = vld [vmem:[#allocation2 + $0x9c] sm:$0xff]
        %v2226 = vld [vmem:[#allocation2 + $0xac] sm:$0xff]
        %v2227 = vld [vmem:[#allocation2 + $0xb4] sm:$0xff]
        %s2228 = scalar_lea.vmem [#allocation14], 512
        %v2229 = vld [vmem:[%s2228] sm:$0xff]
        %v2230 = vld [vmem:[%s2228 + $0x8] sm:$0xff]
        %v2231 = vld [vmem:[%s2228 + $0x10] sm:$0xff]
        %v2232 = vld [vmem:[%s2228 + $0x18] sm:$0xff]
        %v2233 = vld [vmem:[%s2228 + $0x20] sm:$0xff]
        %v2234 = vld [vmem:[%s2228 + $0x28] sm:$0xff]
        %v2235 = vld [vmem:[%s2228 + $0x30] sm:$0xff]
        %v2236 = vld [vmem:[%s2228 + $0x38] sm:$0xff]
        %v2237 = vld [vmem:[%s2228 + $0x40] sm:$0xff]
        %v2238 = vld [vmem:[%s2228 + $0x48] sm:$0xff]
        %v2239 = vld [vmem:[%s2228 + $0x50] sm:$0xff]
        %v2240 = vld [vmem:[%s2228 + $0x58] sm:$0xff]
        %v2241 = vld [vmem:[%s2228 + $0x60] sm:$0xff]
        %v2242 = vld [vmem:[%s2228 + $0x68] sm:$0xff]
        %v2243 = vld [vmem:[%s2228 + $0x70] sm:$0xff]
        %v2244 = vld [vmem:[%s2228 + $0x78] sm:$0xff]
        %2245 = vmatpush.msra.mxu0 %v2244
        %2246 = vmatpush.msra.mxu0 %v2243
        %2247 = vmatpush.msra.mxu0 %v2242
        %2248 = vmatpush.msra.mxu0 %v2241
        %2249 = vmatpush.msra.mxu0 %v2240
        %2250 = vmatpush.msra.mxu0 %v2239
        %2251 = vmatpush.msra.mxu0 %v2238
        %2252 = vmatpush.msra.mxu0 %v2237
        %2253 = vmatpush.msra.mxu0 %v2236
        %2254 = vmatpush.msra.mxu0 %v2235
        %2255 = vmatpush.msra.mxu0 %v2234
        %2256 = vmatpush.msra.mxu0 %v2233
        %2257 = vmatpush.msra.mxu0 %v2232
        %2258 = vmatpush.msra.mxu0 %v2231
        %2259 = vmatpush.msra.mxu0 %v2230
        %2260 = vmatpush.msra.mxu0 %v2229
        %2261 = vmatmul.f32.gmra.mxu0 %v2212
        %v2262 = vpop.f32.mrf.mxu0
        %v2263 = vadd.f32 0.0, %v2262
        %2264 = vmatmul.f32.gmra.mxu0 %v2213
        %v2265 = vpop.f32.mrf.mxu0
        %v2266 = vadd.f32 0.0, %v2265
        %2267 = vmatmul.f32.gmra.mxu0 %v2214
        %v2268 = vpop.f32.mrf.mxu0
        %v2269 = vadd.f32 0.0, %v2268
        %2270 = vmatmul.f32.gmra.mxu0 %v2215
        %v2271 = vpop.f32.mrf.mxu0
        %v2272 = vadd.f32 0.0, %v2271
        %2273 = vmatmul.f32.gmra.mxu0 %v2216
        %v2274 = vpop.f32.mrf.mxu0
        %v2275 = vadd.f32 0.0, %v2274
        %2276 = vmatmul.f32.gmra.mxu0 %v2217
        %v2277 = vpop.f32.mrf.mxu0
        %v2278 = vadd.f32 0.0, %v2277
        %2279 = vmatmul.f32.gmra.mxu0 %v2218
        %v2280 = vpop.f32.mrf.mxu0
        %v2281 = vadd.f32 0.0, %v2280
        %2282 = vmatmul.f32.gmra.mxu0 %v2219
        %v2283 = vpop.f32.mrf.mxu0
        %v2284 = vadd.f32 0.0, %v2283
        %2285 = vmatmul.f32.gmra.mxu0 %v2220
        %v2286 = vpop.f32.mrf.mxu0
        %v2287 = vadd.f32 0.0, %v2286
        %2288 = vmatmul.f32.gmra.mxu0 %v2221
        %v2289 = vpop.f32.mrf.mxu0
        %v2290 = vadd.f32 0.0, %v2289
        %2291 = vmatmul.f32.gmra.mxu0 %v2222
        %v2292 = vpop.f32.mrf.mxu0
        %v2293 = vadd.f32 0.0, %v2292
        %2294 = vmatmul.f32.gmra.mxu0 %v2223
        %v2295 = vpop.f32.mrf.mxu0
        %v2296 = vadd.f32 0.0, %v2295
        %2297 = vmatmul.f32.gmra.mxu0 %v2224
        %v2298 = vpop.f32.mrf.mxu0
        %v2299 = vadd.f32 0.0, %v2298
        %2300 = vmatmul.f32.gmra.mxu0 %v2225
        %v2301 = vpop.f32.mrf.mxu0
        %v2302 = vadd.f32 0.0, %v2301
        %2303 = vmatmul.f32.gmra.mxu0 %v2226
        %v2304 = vpop.f32.mrf.mxu0
        %v2305 = vadd.f32 0.0, %v2304
        %2306 = vmatmul.f32.gmra.mxu0 %v2227
        %v2307 = vpop.f32.mrf.mxu0
        %v2308 = vadd.f32 0.0, %v2307
        %2309 = vdwg.mxu0
        %v2310 = vadd.f32 %v2196, %v2263
        %v2311 = vadd.f32 %v2197, %v2266
        %v2312 = vadd.f32 %v2198, %v2269
        %v2313 = vadd.f32 %v2199, %v2272
        %v2314 = vadd.f32 %v2200, %v2275
        %v2315 = vadd.f32 %v2201, %v2278
        %v2316 = vadd.f32 %v2202, %v2281
        %v2317 = vadd.f32 %v2203, %v2284
        %v2318 = vadd.f32 %v2204, %v2287
        %v2319 = vadd.f32 %v2205, %v2290
        %v2320 = vadd.f32 %v2206, %v2293
        %v2321 = vadd.f32 %v2207, %v2296
        %v2322 = vadd.f32 %v2208, %v2299
        %v2323 = vadd.f32 %v2209, %v2302
        %v2324 = vadd.f32 %v2210, %v2305
        %v2325 = vadd.f32 %v2211, %v2308
        %v2326 = vld [vmem:[%s10] sm:$0x1]
        %v2328 = vperm.slane %v2326, 0
        %v2330 = vadd.f32 %v2310, %v2328
        %v2331 = vadd.f32 %v2311, %v2328
        %v2332 = vadd.f32 %v2312, %v2328
        %v2333 = vadd.f32 %v2313, %v2328
        %v2334 = vadd.f32 %v2314, %v2328
        %v2335 = vadd.f32 %v2315, %v2328
        %v2336 = vadd.f32 %v2316, %v2328
        %v2337 = vadd.f32 %v2317, %v2328
        %v2338 = vadd.f32 %v2318, %v2328
        %v2339 = vadd.f32 %v2319, %v2328
        %v2340 = vadd.f32 %v2320, %v2328
        %v2341 = vadd.f32 %v2321, %v2328
        %v2342 = vadd.f32 %v2322, %v2328
        %v2343 = vadd.f32 %v2323, %v2328
        %v2344 = vadd.f32 %v2324, %v2328
        %v2345 = vadd.f32 %v2325, %v2328
        %vm2346 = vcmp.ge.f32.partialorder %v2330, 0.0
        %vm2347 = vcmp.ge.f32.partialorder %v2331, 0.0
        %vm2348 = vcmp.ge.f32.partialorder %v2332, 0.0
        %vm2349 = vcmp.ge.f32.partialorder %v2333, 0.0
        %vm2350 = vcmp.ge.f32.partialorder %v2334, 0.0
        %vm2351 = vcmp.ge.f32.partialorder %v2335, 0.0
        %vm2352 = vcmp.ge.f32.partialorder %v2336, 0.0
        %vm2353 = vcmp.ge.f32.partialorder %v2337, 0.0
        %vm2354 = vcmp.ge.f32.partialorder %v2338, 0.0
        %vm2355 = vcmp.ge.f32.partialorder %v2339, 0.0
        %vm2356 = vcmp.ge.f32.partialorder %v2340, 0.0
        %vm2357 = vcmp.ge.f32.partialorder %v2341, 0.0
        %vm2358 = vcmp.ge.f32.partialorder %v2342, 0.0
        %vm2359 = vcmp.ge.f32.partialorder %v2343, 0.0
        %vm2360 = vcmp.ge.f32.partialorder %v2344, 0.0
        %vm2361 = vcmp.ge.f32.partialorder %v2345, 0.0
        %v2362 = vmul.f32 %v2330, 0.01
        %v2363 = vmul.f32 %v2331, 0.01
        %v2364 = vmul.f32 %v2332, 0.01
        %v2365 = vmul.f32 %v2333, 0.01
        %v2366 = vmul.f32 %v2334, 0.01
        %v2367 = vmul.f32 %v2335, 0.01
        %v2368 = vmul.f32 %v2336, 0.01
        %v2369 = vmul.f32 %v2337, 0.01
        %v2370 = vmul.f32 %v2338, 0.01
        %v2371 = vmul.f32 %v2339, 0.01
        %v2372 = vmul.f32 %v2340, 0.01
        %v2373 = vmul.f32 %v2341, 0.01
        %v2374 = vmul.f32 %v2342, 0.01
        %v2375 = vmul.f32 %v2343, 0.01
        %v2376 = vmul.f32 %v2344, 0.01
        %v2377 = vmul.f32 %v2345, 0.01
        %v2378 = vsel %vm2346, %v2330, %v2362
        %v2379 = vsel %vm2347, %v2331, %v2363
        %v2380 = vsel %vm2348, %v2332, %v2364
        %v2381 = vsel %vm2349, %v2333, %v2365
        %v2382 = vsel %vm2350, %v2334, %v2366
        %v2383 = vsel %vm2351, %v2335, %v2367
        %v2384 = vsel %vm2352, %v2336, %v2368
        %v2385 = vsel %vm2353, %v2337, %v2369
        %v2386 = vsel %vm2354, %v2338, %v2370
        %v2387 = vsel %vm2355, %v2339, %v2371
        %v2388 = vsel %vm2356, %v2340, %v2372
        %v2389 = vsel %vm2357, %v2341, %v2373
        %v2390 = vsel %vm2358, %v2342, %v2374
        %v2391 = vsel %vm2359, %v2343, %v2375
        %v2392 = vsel %vm2360, %v2344, %v2376
        %v2393 = vsel %vm2361, %v2345, %v2377
        %2394 = vst [vmem:[%s549] sm:$0xff] %v2378
        %2395 = vst [vmem:[%s549 + $0x8] sm:$0xff] %v2379
        %2396 = vst [vmem:[%s549 + $0x10] sm:$0xff] %v2380
        %2397 = vst [vmem:[%s549 + $0x18] sm:$0xff] %v2381
        %2398 = vst [vmem:[%s549 + $0x20] sm:$0xff] %v2382
        %2399 = vst [vmem:[%s549 + $0x28] sm:$0xff] %v2383
        %2400 = vst [vmem:[%s549 + $0x30] sm:$0xff] %v2384
        %2401 = vst [vmem:[%s549 + $0x38] sm:$0xff] %v2385
        %2402 = vst [vmem:[%s549 + $0x40] sm:$0xff] %v2386
        %2403 = vst [vmem:[%s549 + $0x48] sm:$0xff] %v2387
        %2404 = vst [vmem:[%s549 + $0x50] sm:$0xff] %v2388
        %2405 = vst [vmem:[%s549 + $0x58] sm:$0xff] %v2389
        %2406 = vst [vmem:[%s549 + $0x60] sm:$0xff] %v2390
        %2407 = vst [vmem:[%s549 + $0x68] sm:$0xff] %v2391
        %2408 = vst [vmem:[%s549 + $0x70] sm:$0xff] %v2392
        %2409 = vst [vmem:[%s549 + $0x78] sm:$0xff] %v2393
        %s2410 = sand.u32 %s298, 1
        %s2411 = scalar_lea.sflag [#allocation5], %s2410
        %s2412 = sand.u32 %s298, 1
        %s2413 = smul.addr %s2412, 128
        %s2414 = scalar_lea.vmem [#allocation15], %s2413
        // Predicated region
        $region93: #{tpu_custom_call.1} parent=63 // pred_check
          %p2415 = pneg %p308
        $region94: #{tpu_custom_call.1} parent=63 // pred_check_branch
          %2417 = sbr.rel (%p2415) target = $region96
        $region95: #{tpu_custom_call.1} parent=63 // pred_region
          %s2418 = smul.u32 8, %s38
          %2420 = vsyncadd %s2411, 0
          %s2421 = smul.addr %s2418, 2
          %s2422 = smul.addr %s37, 16
          %s2423 = sadd.s32 %s2421, %s2422
          %s2424 = smul.addr %s2423, 8
          %s2425 = scalar_lea.hbm %s11, %s2424
          %s2426 = sshll.u32 %s2414, 4
          %s2427 = int_to_ptr.vmem [resolvable:$true] %s2426
          %s2428 = sshll.u32 %s2425, 4
          %s2429 = int_to_ptr.hbm [resolvable:$true] %s2428
          %2434 = dma.vmem_to_hbm [thread:$0]  %s2427, 2048, %s2429, %s2411, 128, 128, 8
        $region96: #{tpu_custom_call.1} parent=63 // pred_fallthru
          _
      $region64: #{tpu_custom_call.1} parent=5 // pred_fallthru
        _
      %p2435 = scmp.le.s32.totalorder 2, %s28
      // Predicated region
      $region97: #{tpu_custom_call.1} parent=5 // pred_check
        %p2436 = pneg %p2435
      $region98: #{tpu_custom_call.1} parent=5 // pred_check_branch
        %2438 = sbr.rel (%p2436) target = $region100
      $region99: #{tpu_custom_call.1} parent=5 // pred_region
        %s2439 = ssub.s32 %s28, 2
        // Predicated region
        $region101: #{tpu_custom_call.1} parent=99 // pred_check
          %p2440 = pneg %p314
        $region102: #{tpu_custom_call.1} parent=99 // pred_check_branch
          %2442 = sbr.rel (%p2440) target = $region104
        $region103: #{tpu_custom_call.1} parent=99 // pred_region
          %s2443 = sand.u32 %s299, 1
          %s2444 = scalar_lea.sflag [#allocation5], %s2443
          %s2445 = sand.u32 %s299, 1
          %s2446 = smul.addr %s2445, 128
          %s2447 = scalar_lea.vmem [#allocation15], %s2446
          %2449 = dma.done %s2444, 2048
        $region104: #{tpu_custom_call.1} parent=99 // pred_fallthru
          _
      $region100: #{tpu_custom_call.1} parent=5 // pred_fallthru
        _
    $region6: #{tpu_custom_call.1} parent=1 // loop_footer
      %s32 = sadd.s32 1, %s28
    $region7: #{tpu_custom_call.1} parent=1 // loop_footer_branch
      %27 = sbr.rel target = $region3
    $region8: #{tpu_custom_call.1} parent=1 // loop_exit
      _
    %2450 = vsyncpa [#allocation4], 1
    %s2451 = scalar_lea.sflag [#allocation4], 1
    %2452 = vsyncpa %s2451, 1
    %2453 = vsyncpa [#allocation7], 1
    %s2454 = scalar_lea.sflag [#allocation7], 1
    %2455 = vsyncpa %s2454, 1
    %2456 = vsyncpa [#allocation10], 1
    %2457 = vsyncpa [#allocation13], 1
    %2458 = vsyncpa [#allocation5], 1
    %s2459 = scalar_lea.sflag [#allocation5], 1
    %2460 = vsyncpa %s2459, 1

</llo_original>
